<compile_context>
chip_gen: v6e
topology: v6e:2x2x1
jax: 0.10.0
libtpu: 0.0.40
codegen_flags: <defaults>
</compile_context>

<pallas_src>
import functools

import jax
import jax.numpy as jnp
from jax.experimental import pallas as pl
from jax.experimental.pallas import tpu as pltpu


# ----------------------------------------------------------------------------
# Generation-aware VMEM budget
# ----------------------------------------------------------------------------
def _vmem_limit_bytes():
    phys = 64 * 1024 * 1024  # conservative fallback (v7x physical)
    try:
        info = pltpu.get_tpu_info()
        phys = int(getattr(info, "vmem_capacity_bytes", phys))
    except Exception:
        pass
    # 3/4 of physical, capped: 96 MiB on v5e/v6e (128 MiB), 48 MiB on v7x (64 MiB).
    return int(min(96 * 1024 * 1024, (phys * 3) // 4))


# ----------------------------------------------------------------------------
# Fused encoder kernel: conv1 -> ReLU -> conv2 -> ReLU -> FC -> ReLU
# (convs pre-lowered to dense per-image matrices; intermediates stay in VMEM)
# ----------------------------------------------------------------------------
def _encoder_kernel(x_ref, w1_ref, b1_ref, w2_ref, b2_ref, w3_ref, b3_ref,
                    o_ref):
    # bf16 operands feed the MXU; accumulate / bias / ReLU stay f32 on the VPU.
    x = x_ref[...].astype(jnp.bfloat16)
    h = jnp.dot(x, w1_ref[...], preferred_element_type=jnp.float32) + b1_ref[...]
    h = jnp.maximum(h, 0.0)
    h = (jnp.dot(h.astype(jnp.bfloat16), w2_ref[...],
                 preferred_element_type=jnp.float32) + b2_ref[...])
    h = jnp.maximum(h, 0.0)
    h = (jnp.dot(h.astype(jnp.bfloat16), w3_ref[...],
                 preferred_element_type=jnp.float32) + b3_ref[...])
    o_ref[...] = jnp.maximum(h, 0.0).astype(o_ref.dtype)


def pallas_encoder(x_flat, p, vmem_limit, tm_max=512):
    """x_flat: (M, C*H*W) f32 (NCHW-flat).  Returns (M, emb) f32 embeddings."""
    M, Kin = x_flat.shape
    H1 = p["e1_w"].shape[1]
    H2 = p["e2_w"].shape[1]
    E = p["e3_w"].shape[1]
    # ~2 MB f32 input tile (512 rows x 1024 cols x 4B); full block when small.
    tm = M if M <= tm_max else tm_max
    grid_m = pl.cdiv(M, tm)
    return pl.pallas_call(
        _encoder_kernel,
        out_shape=jax.ShapeDtypeStruct((M, E), jnp.float32),
        grid=(grid_m,),
        in_specs=[
            pl.BlockSpec((tm, Kin), lambda i: (i, 0)),
            pl.BlockSpec((Kin, H1), lambda i: (0, 0)),
            pl.BlockSpec((1, H1), lambda i: (0, 0)),
            pl.BlockSpec((H1, H2), lambda i: (0, 0)),
            pl.BlockSpec((1, H2), lambda i: (0, 0)),
            pl.BlockSpec((H2, E), lambda i: (0, 0)),
            pl.BlockSpec((1, E), lambda i: (0, 0)),
        ],
        out_specs=pl.BlockSpec((tm, E), lambda i: (i, 0)),
        compiler_params=pltpu.CompilerParams(
            dimension_semantics=("parallel",),      # shards rows on v7x's 2 TCs
            vmem_limit_bytes=vmem_limit,
        ),
    )(x_flat, p["e1_w"], p["e1_b"], p["e2_w"], p["e2_b"], p["e3_w"], p["e3_b"])


# ----------------------------------------------------------------------------
# Fused post-encoder kernel: forward/inverse dynamics MLPs + per-sample RIDE
# loss + intrinsic reward + separate int-value critic.  B-tiled grid.
# ----------------------------------------------------------------------------
def _post_encoder_kernel(
        s_ref, n_ref, a_ref, core_ref,
        fd1_ws_ref, fd1_wa_ref, fd1_b_ref, fd2_w_ref, fd2_b_ref,
        id1_ws_ref, id1_wn_ref, id1_b_ref, id2_w_ref, id2_b_ref,
        crit_w_ref, crit_b_ref, out_ref, *, int_loss_cost):
    s = s_ref[...]                                                 # (TB, E) f32
    n = n_ref[...]                                                 # (TB, E) f32
    a1h = a_ref[...]                                               # (TB, A) f32
    sb = s.astype(jnp.bfloat16)
    nb = n.astype(jnp.bfloat16)
    ab = a1h.astype(jnp.bfloat16)

    # forward dynamics: relu([s, a] @ W1 + b1) @ W2 + b2 (concat = split matmul)
    h = (jnp.dot(sb, fd1_ws_ref[...], preferred_element_type=jnp.float32)
         + jnp.dot(ab, fd1_wa_ref[...], preferred_element_type=jnp.float32)
         + fd1_b_ref[...])
    h = jnp.maximum(h, 0.0)
    pred_next = (jnp.dot(h.astype(jnp.bfloat16), fd2_w_ref[...],
                         preferred_element_type=jnp.float32) + fd2_b_ref[...])

    # inverse dynamics: relu([s, n] @ W1 + b1) @ W2 + b2
    h2 = (jnp.dot(sb, id1_ws_ref[...], preferred_element_type=jnp.float32)
          + jnp.dot(nb, id1_wn_ref[...], preferred_element_type=jnp.float32)
          + id1_b_ref[...])
    h2 = jnp.maximum(h2, 0.0)
    logits = (jnp.dot(h2.astype(jnp.bfloat16), id2_w_ref[...],
                      preferred_element_type=jnp.float32) + id2_b_ref[...])

    # forward-dynamics loss: torch.norm(pred_next - next, dim=-1, p=2)
    d = pred_next - n
    fwd = jnp.sqrt(jnp.sum(d * d, axis=-1, keepdims=True))         # (TB, 1)

    # inverse-dynamics loss: nll(log_softmax(logits), actions)
    m = jnp.max(logits, axis=-1, keepdims=True)
    z = logits - m
    lse = jnp.log(jnp.sum(jnp.exp(z), axis=-1, keepdims=True))
    nll = -jnp.sum((z - lse) * a1h, axis=-1, keepdims=True)        # (TB, 1)

    per_sample = int_loss_cost * (fwd + nll)                       # (TB, 1)

    # intrinsic reward: torch.norm(next - state, dim=-1, p=2)
    dr = n - s
    rew = jnp.sqrt(jnp.sum(dr * dr, axis=-1, keepdims=True))       # (TB, 1)

    # separate int-value critic: N=1 head on the VPU (broadcast-mul + reduce)
    val = (jnp.sum(core_ref[...] * crit_w_ref[...], axis=-1, keepdims=True)
           + crit_b_ref[...])                                      # (TB, 1)

    # packed lane-dense output slab: [reward, value, per_sample_loss]
    out_ref[:, 0:1] = rew
    out_ref[:, 1:2] = val
    out_ref[:, 2:3] = per_sample


def pallas_post_encoder(state_emb, next_emb, act_onehot, core_output, p,
                        int_loss_cost, vmem_limit, tb_max=2048):
    B, E = state_emb.shape
    A = act_onehot.shape[1]
    Ccore = core_output.shape[1]
    tb = B if B <= tb_max else tb_max
    grid_b = pl.cdiv(B, tb)

    def row(n):
        return pl.BlockSpec((tb, n), lambda i: (i, 0))

    def full(arr):
        return pl.BlockSpec(arr.shape, lambda i: (0, 0))

    return pl.pallas_call(
        functools.partial(_post_encoder_kernel,
                          int_loss_cost=float(int_loss_cost)),
        out_shape=jax.ShapeDtypeStruct((B, 3), jnp.float32),
        grid=(grid_b,),
        in_specs=[
            row(E), row(E), row(A), row(Ccore),
            full(p["fd1_ws"]), full(p["fd1_wa"]), full(p["fd1_b"]),
            full(p["fd2_w"]), full(p["fd2_b"]),
            full(p["id1_ws"]), full(p["id1_wn"]), full(p["id1_b"]),
            full(p["id2_w"]), full(p["id2_b"]),
            full(p["crit_w"]), full(p["crit_b"]),
        ],
        out_specs=pl.BlockSpec((tb, 3), lambda i: (i, 0)),
        compiler_params=pltpu.CompilerParams(
            dimension_semantics=("parallel",),      # B axis -> both v7x TCs
            vmem_limit_bytes=vmem_limit,
        ),
    )(state_emb.astype(jnp.float32), next_emb.astype(jnp.float32),
      act_onehot.astype(jnp.float32), core_output.astype(jnp.float32),
      p["fd1_ws"], p["fd1_wa"], p["fd1_b"], p["fd2_w"], p["fd2_b"],
      p["id1_ws"], p["id1_wn"], p["id1_b"], p["id2_w"], p["id2_b"],
      p["crit_w"], p["crit_b"])


# ----------------------------------------------------------------------------
# Init-time lowering of a small conv2d to an exact dense per-image matrix.
# ----------------------------------------------------------------------------
def _conv_to_dense(w_oihw, cin, h, w, stride, pad, in_layout):
    """Returns D (in_dim, out_dim) such that flatten(conv(x)) == x_flat @ D.

    in_layout: "chw" -> input flattened as c*H*W + y*W + x  (raw NCHW obs)
               "hwc" -> input flattened as (y*W + x)*C + c  (previous layer)
    Output is always flattened in HWC order: (oy*OW + ox)*Cout + co.
    """
    in_dim = cin * h * w
    eye = jnp.eye(in_dim, dtype=jnp.float32)
    if in_layout == "chw":
        imgs = eye.reshape(in_dim, cin, h, w)
    else:
        imgs = jnp.transpose(eye.reshape(in_dim, h, w, cin), (0, 3, 1, 2))
    out = jax.lax.conv_general_dilated(
        imgs, w_oihw, window_strides=(stride, stride),
        padding=[(pad, pad), (pad, pad)],
        dimension_numbers=("NCHW", "OIHW", "NCHW"))
    return jnp.transpose(out, (0, 2, 3, 1)).reshape(in_dim, -1)


# ----------------------------------------------------------------------------
# RIDENet (synthetic, deterministic parameters)
# ----------------------------------------------------------------------------
class RIDENetPallas:
    def __init__(self, key, *, in_ch=4, spatial=16, num_actions=6, emb_dim=32,
                 hidden_dim=32, core_out_size=32, int_loss_cost=1.0,
                 int_rnd_update_proportion=1.0, obs_scale=255.0):
        self.num_actions = num_actions
        self.int_loss_cost = float(int_loss_cost)
        self.int_rnd_update_proportion = float(int_rnd_update_proportion)
        self.vmem_limit = _vmem_limit_bytes()

        c1_out, c2_out, k, st, pd = 8, 16, 3, 2, 1
        oh1 = (spatial + 2 * pd - k) // st + 1          # 8
        oh2 = (oh1 + 2 * pd - k) // st + 1              # 4
        flat = c2_out * oh2 * oh2                       # 256
        bf16 = jnp.bfloat16

        def lin(kk, fan_in, fan_out):
            w = jax.random.normal(kk, (fan_in, fan_out), jnp.float32)
            return w / jnp.sqrt(jnp.float32(fan_in)), jnp.zeros((fan_out,),
                                                                jnp.float32)

        ks = jax.random.split(key, 8)
        p = {}

        # --- state embedding model (simplified conv encoder; create_encoder is
        # environment-dependent in sample_factory), lowered to dense matrices.
        w1 = (jax.random.normal(ks[0], (c1_out, in_ch, k, k), jnp.float32)
              / jnp.sqrt(jnp.float32(k * k * in_ch)))
        b1 = jnp.zeros((c1_out,), jnp.float32)
        d1 = _conv_to_dense(w1, in_ch, spatial, spatial, st, pd, "chw")
        # Fold (obs - 0) / obs_scale into conv1: conv(x/s, w) == conv(x, w/s).
        p["e1_w"] = (d1 / obs_scale).astype(bf16)
        p["e1_b"] = jnp.tile(b1, oh1 * oh1).reshape(1, -1)

        w2 = (jax.random.normal(ks[1], (c2_out, c1_out, k, k), jnp.float32)
              / jnp.sqrt(jnp.float32(k * k * c1_out)))
        b2 = jnp.zeros((c2_out,), jnp.float32)
        d2 = _conv_to_dense(w2, c1_out, oh1, oh1, st, pd, "hwc")
        p["e2_w"] = d2.astype(bf16)
        p["e2_b"] = jnp.tile(b2, oh2 * oh2).reshape(1, -1)

        fc_w, fc_b = lin(ks[2], flat, emb_dim)
        p["e3_w"] = fc_w.astype(bf16)
        p["e3_b"] = fc_b.reshape(1, -1)

        # --- forward dynamics: Linear(E+A, H)+ReLU, Linear(H, E)
        fd1_w, fd1_b = lin(ks[3], emb_dim + num_actions, hidden_dim)
        p["fd1_ws"] = fd1_w[:emb_dim].astype(bf16)
        p["fd1_wa"] = fd1_w[emb_dim:].astype(bf16)
        p["fd1_b"] = fd1_b.reshape(1, -1)
        fd2_w, fd2_b = lin(ks[4], hidden_dim, emb_dim)
        p["fd2_w"] = fd2_w.astype(bf16)
        p["fd2_b"] = fd2_b.reshape(1, -1)

        # --- inverse dynamics: Linear(2E, H)+ReLU, Linear(H, A)
        id1_w, id1_b = lin(ks[5], 2 * emb_dim, hidden_dim)
        p["id1_ws"] = id1_w[:emb_dim].astype(bf16)
        p["id1_wn"] = id1_w[emb_dim:].astype(bf16)
        p["id1_b"] = id1_b.reshape(1, -1)
        id2_w, id2_b = lin(ks[6], hidden_dim, num_actions)
        p["id2_w"] = id2_w.astype(bf16)
        p["id2_b"] = id2_b.reshape(1, -1)

        # --- int critic (cfg.separate_int_value, encoder != atari_atarinet);
        # kept f32 and applied on the VPU inside the post-encoder kernel.
        crit_w, crit_b = lin(ks[7], core_out_size, 1)
        p["crit_w"] = crit_w.reshape(1, core_out_size)
        p["crit_b"] = crit_b.reshape(1, 1)
        self.p = p

    def forward(self, obs_nchw, next_obs_nchw, actions, core_output, mask_key):
        # TODO(synk): CellCounter / episodic-count branch, learnable-hash aux
        # loss, and the rew_rms / rewems running-stat buffer updates are
        # stateful bookkeeping outside the forward hot path; not translated.
        B = obs_nchw.shape[0]

        # Encode obs and next_obs in one batched pass (2B rows).  NCHW flatten
        # is a free reshape; the conv matrices were built for that ordering.
        obs_all = jnp.concatenate([obs_nchw, next_obs_nchw], axis=0)
        x_flat = obs_all.reshape(2 * B, -1).astype(jnp.float32)
        emb_all = pallas_encoder(x_flat, self.p, self.vmem_limit)
        state_emb, next_state_emb = emb_all[:B], emb_all[B:]

        act_onehot = jax.nn.one_hot(actions, self.num_actions,
                                    dtype=jnp.float32)

        # One fused, B-tiled kernel: dynamics MLPs, per-sample RIDE loss,
        # intrinsic rewards and the separate int-value critic.
        out = pallas_post_encoder(state_emb, next_state_emb, act_onehot,
                                  core_output, self.p, self.int_loss_cost,
                                  self.vmem_limit)
        int_rewards = out[:, 0]
        int_values = out[:, 1:2]
        per_sample_loss = out[:, 2]

        # mask = (torch.rand_like(int_loss) < int_rnd_update_proportion);
        # masked mean with exact divide (matches torch.clamp(mask.sum(), 1.0)).
        rand = jax.random.uniform(mask_key, (B,), jnp.float32)
        mask = (rand < self.int_rnd_update_proportion).astype(jnp.float32)
        int_loss = (jnp.sum(per_sample_loss * mask)
                    / jnp.maximum(jnp.sum(mask), 1.0))

        return int_loss, int_rewards, int_values


# ----------------------------------------------------------------------------
if __name__ == "__main__":
    key = jax.random.PRNGKey(0)
    k_obs, k_next, k_act, k_core, k_params, k_mask = jax.random.split(key, 6)

    B, C, H, W = 2, 4, 16, 16
    num_actions = 6
    core_out_size = 32

    obs = jax.random.uniform(k_obs, (B, C, H, W), jnp.float32, 0.0, 255.0)
    next_obs = jax.random.uniform(k_next, (B, C, H, W), jnp.float32, 0.0, 255.0)
    actions = jax.random.randint(k_act, (B,), 0, num_actions, jnp.int32)
    core_output = jax.random.normal(k_core, (B, core_out_size), jnp.float32)

    net = RIDENetPallas(k_params, in_ch=C, spatial=H, num_actions=num_actions,
                        emb_dim=32, hidden_dim=32, core_out_size=core_out_size)

    fwd = jax.jit(net.forward)
    int_loss, int_rewards, int_values = fwd(
        obs, next_obs, actions, core_output, k_mask)

    jax.block_until_ready((int_loss, int_rewards, int_values))
    assert int_rewards.shape == (B,)
    assert int_values.shape == (B, 1)
    print("KERNEL_OK")
</pallas_src>

<mosaic_0001>
module attributes {stable_mosaic.version = 11 : i64} {
  func.func @_encoder_kernel(%arg0: i32, %arg1: memref<4x1024xf32, #tpu.memory_space<vmem>>, %arg2: memref<1024x512xbf16, #tpu.memory_space<vmem>>, %arg3: memref<1x512xf32, #tpu.memory_space<vmem>>, %arg4: memref<512x256xbf16, #tpu.memory_space<vmem>>, %arg5: memref<1x256xf32, #tpu.memory_space<vmem>>, %arg6: memref<256x32xbf16, #tpu.memory_space<vmem>>, %arg7: memref<1x32xf32, #tpu.memory_space<vmem>>, %arg8: memref<4x32xf32, #tpu.memory_space<vmem>>) attributes {dimension_semantics = [#tpu.dimension_semantics<parallel>], iteration_bounds = array<i64: 1>, scalar_prefetch = 0 : i64, scratch_operands = 0 : i64, tpu.core_type = #tpu.core_type<tc>, window_params = [{transform_indices = @transform_0, window_bounds = array<i64: 4, 1024>}, {pipeline_mode = #tpu.pipeline_mode<synchronous>, transform_indices = @transform_1, window_bounds = array<i64: 1024, 512>}, {pipeline_mode = #tpu.pipeline_mode<synchronous>, transform_indices = @transform_2, window_bounds = array<i64: 1, 512>}, {pipeline_mode = #tpu.pipeline_mode<synchronous>, transform_indices = @transform_3, window_bounds = array<i64: 512, 256>}, {pipeline_mode = #tpu.pipeline_mode<synchronous>, transform_indices = @transform_4, window_bounds = array<i64: 1, 256>}, {pipeline_mode = #tpu.pipeline_mode<synchronous>, transform_indices = @transform_5, window_bounds = array<i64: 256, 32>}, {pipeline_mode = #tpu.pipeline_mode<synchronous>, transform_indices = @transform_6, window_bounds = array<i64: 1, 32>}, {transform_indices = @transform_7, window_bounds = array<i64: 4, 32>}]} {
    %c0 = arith.constant 0 : index
    %c0_0 = arith.constant 0 : index
    %0 = vector.load %arg1[%c0, %c0_0] : memref<4x1024xf32, #tpu.memory_space<vmem>>, vector<4x1024xf32>
    %1 = arith.truncf %0 : vector<4x1024xf32> to vector<4x1024xbf16>
    %c0_1 = arith.constant 0 : index
    %c0_2 = arith.constant 0 : index
    %2 = vector.load %arg2[%c0_1, %c0_2] : memref<1024x512xbf16, #tpu.memory_space<vmem>>, vector<1024x512xbf16>
    %cst = arith.constant dense<0.000000e+00> : vector<4x512xf32>
    %3 = tpu.matmul %1, %2, %cst {dimension_numbers = #tpu.dot_dimension_numbers<[1], [0], [0], [1], [0, 0, 1, 1], [], []>} : vector<4x1024xbf16>, vector<1024x512xbf16>, vector<4x512xf32> -> vector<4x512xf32>
    %c0_3 = arith.constant 0 : index
    %c0_4 = arith.constant 0 : index
    %4 = vector.load %arg3[%c0_3, %c0_4] : memref<1x512xf32, #tpu.memory_space<vmem>>, vector<1x512xf32>
    %5 = vector.broadcast %4 : vector<1x512xf32> to vector<4x512xf32>
    %6 = arith.addf %3, %5 : vector<4x512xf32>
    %cst_5 = arith.constant 0.000000e+00 : f32
    %7 = vector.broadcast %cst_5 : f32 to vector<4x512xf32>
    %8 = arith.maximumf %6, %7 : vector<4x512xf32>
    %9 = arith.truncf %8 : vector<4x512xf32> to vector<4x512xbf16>
    %c0_6 = arith.constant 0 : index
    %c0_7 = arith.constant 0 : index
    %10 = vector.load %arg4[%c0_6, %c0_7] : memref<512x256xbf16, #tpu.memory_space<vmem>>, vector<512x256xbf16>
    %cst_8 = arith.constant dense<0.000000e+00> : vector<4x256xf32>
    %11 = tpu.matmul %9, %10, %cst_8 {dimension_numbers = #tpu.dot_dimension_numbers<[1], [0], [0], [1], [0, 0, 1, 1], [], []>} : vector<4x512xbf16>, vector<512x256xbf16>, vector<4x256xf32> -> vector<4x256xf32>
    %c0_9 = arith.constant 0 : index
    %c0_10 = arith.constant 0 : index
    %12 = vector.load %arg5[%c0_9, %c0_10] : memref<1x256xf32, #tpu.memory_space<vmem>>, vector<1x256xf32>
    %13 = vector.broadcast %12 : vector<1x256xf32> to vector<4x256xf32>
    %14 = arith.addf %11, %13 : vector<4x256xf32>
    %cst_11 = arith.constant 0.000000e+00 : f32
    %15 = vector.broadcast %cst_11 : f32 to vector<4x256xf32>
    %16 = arith.maximumf %14, %15 : vector<4x256xf32>
    %17 = arith.truncf %16 : vector<4x256xf32> to vector<4x256xbf16>
    %c0_12 = arith.constant 0 : index
    %c0_13 = arith.constant 0 : index
    %18 = vector.load %arg6[%c0_12, %c0_13] : memref<256x32xbf16, #tpu.memory_space<vmem>>, vector<256x32xbf16>
    %cst_14 = arith.constant dense<0.000000e+00> : vector<4x32xf32>
    %19 = tpu.matmul %17, %18, %cst_14 {dimension_numbers = #tpu.dot_dimension_numbers<[1], [0], [0], [1], [0, 0, 1, 1], [], []>} : vector<4x256xbf16>, vector<256x32xbf16>, vector<4x32xf32> -> vector<4x32xf32>
    %c0_15 = arith.constant 0 : index
    %c0_16 = arith.constant 0 : index
    %20 = vector.load %arg7[%c0_15, %c0_16] : memref<1x32xf32, #tpu.memory_space<vmem>>, vector<1x32xf32>
    %21 = vector.broadcast %20 : vector<1x32xf32> to vector<4x32xf32>
    %22 = arith.addf %19, %21 : vector<4x32xf32>
    %cst_17 = arith.constant 0.000000e+00 : f32
    %23 = vector.broadcast %cst_17 : f32 to vector<4x32xf32>
    %24 = arith.maximumf %22, %23 : vector<4x32xf32>
    %c0_18 = arith.constant 0 : index
    %c0_19 = arith.constant 0 : index
    %25 = vector.load %arg8[%c0_18, %c0_19] : memref<4x32xf32, #tpu.memory_space<vmem>>, vector<4x32xf32>
    tpu.vector_store %arg8[%c0_18, %c0_19], %24 {strides = array<i32>} : memref<4x32xf32, #tpu.memory_space<vmem>>, vector<4x32xf32>,
    return
  }
  func.func @transform_0(%arg0: i32) -> (i32, i32) {
    %c0_i32 = arith.constant 0 : i32
    %c0_i32_0 = arith.constant 0 : i32
    return %arg0, %c0_i32 : i32, i32
  }
  func.func @transform_1(%arg0: i32) -> (i32, i32) {
    %c0_i32 = arith.constant 0 : i32
    %c0_i32_0 = arith.constant 0 : i32
    %c0_i32_1 = arith.constant 0 : i32
    return %c0_i32, %c0_i32_0 : i32, i32
  }
  func.func @transform_2(%arg0: i32) -> (i32, i32) {
    %c0_i32 = arith.constant 0 : i32
    %c0_i32_0 = arith.constant 0 : i32
    %c0_i32_1 = arith.constant 0 : i32
    return %c0_i32, %c0_i32_0 : i32, i32
  }
  func.func @transform_3(%arg0: i32) -> (i32, i32) {
    %c0_i32 = arith.constant 0 : i32
    %c0_i32_0 = arith.constant 0 : i32
    %c0_i32_1 = arith.constant 0 : i32
    return %c0_i32, %c0_i32_0 : i32, i32
  }
  func.func @transform_4(%arg0: i32) -> (i32, i32) {
    %c0_i32 = arith.constant 0 : i32
    %c0_i32_0 = arith.constant 0 : i32
    %c0_i32_1 = arith.constant 0 : i32
    return %c0_i32, %c0_i32_0 : i32, i32
  }
  func.func @transform_5(%arg0: i32) -> (i32, i32) {
    %c0_i32 = arith.constant 0 : i32
    %c0_i32_0 = arith.constant 0 : i32
    %c0_i32_1 = arith.constant 0 : i32
    return %c0_i32, %c0_i32_0 : i32, i32
  }
  func.func @transform_6(%arg0: i32) -> (i32, i32) {
    %c0_i32 = arith.constant 0 : i32
    %c0_i32_0 = arith.constant 0 : i32
    %c0_i32_1 = arith.constant 0 : i32
    return %c0_i32, %c0_i32_0 : i32, i32
  }
  func.func @transform_7(%arg0: i32) -> (i32, i32) {
    %c0_i32 = arith.constant 0 : i32
    %c0_i32_0 = arith.constant 0 : i32
    return %arg0, %c0_i32 : i32, i32
  }
}

module attributes {stable_mosaic.version = 11 : i64} {
  func.func @_post_encoder_kernel(%arg0: i32, %arg1: memref<2x32xf32, #tpu.memory_space<vmem>>, %arg2: memref<2x32xf32, #tpu.memory_space<vmem>>, %arg3: memref<2x6xf32, #tpu.memory_space<vmem>>, %arg4: memref<2x32xf32, #tpu.memory_space<vmem>>, %arg5: memref<32x32xbf16, #tpu.memory_space<vmem>>, %arg6: memref<6x32xbf16, #tpu.memory_space<vmem>>, %arg7: memref<1x32xf32, #tpu.memory_space<vmem>>, %arg8: memref<32x32xbf16, #tpu.memory_space<vmem>>, %arg9: memref<1x32xf32, #tpu.memory_space<vmem>>, %arg10: memref<32x32xbf16, #tpu.memory_space<vmem>>, %arg11: memref<32x32xbf16, #tpu.memory_space<vmem>>, %arg12: memref<1x32xf32, #tpu.memory_space<vmem>>, %arg13: memref<32x6xbf16, #tpu.memory_space<vmem>>, %arg14: memref<1x6xf32, #tpu.memory_space<vmem>>, %arg15: memref<1x32xf32, #tpu.memory_space<vmem>>, %arg16: memref<1x1xf32, #tpu.memory_space<vmem>>, %arg17: memref<2x3xf32, #tpu.memory_space<vmem>>) attributes {dimension_semantics = [#tpu.dimension_semantics<parallel>], iteration_bounds = array<i64: 1>, scalar_prefetch = 0 : i64, scratch_operands = 0 : i64, tpu.core_type = #tpu.core_type<tc>, window_params = [{transform_indices = @transform_0, window_bounds = array<i64: 2, 32>}, {transform_indices = @transform_1, window_bounds = array<i64: 2, 32>}, {transform_indices = @transform_2, window_bounds = array<i64: 2, 6>}, {transform_indices = @transform_3, window_bounds = array<i64: 2, 32>}, {pipeline_mode = #tpu.pipeline_mode<synchronous>, transform_indices = @transform_4, window_bounds = array<i64: 32, 32>}, {pipeline_mode = #tpu.pipeline_mode<synchronous>, transform_indices = @transform_5, window_bounds = array<i64: 6, 32>}, {pipeline_mode = #tpu.pipeline_mode<synchronous>, transform_indices = @transform_6, window_bounds = array<i64: 1, 32>}, {pipeline_mode = #tpu.pipeline_mode<synchronous>, transform_indices = @transform_7, window_bounds = array<i64: 32, 32>}, {pipeline_mode = #tpu.pipeline_mode<synchronous>, transform_indices = @transform_8, window_bounds = array<i64: 1, 32>}, {pipeline_mode = #tpu.pipeline_mode<synchronous>, transform_indices = @transform_9, window_bounds = array<i64: 32, 32>}, {pipeline_mode = #tpu.pipeline_mode<synchronous>, transform_indices = @transform_10, window_bounds = array<i64: 32, 32>}, {pipeline_mode = #tpu.pipeline_mode<synchronous>, transform_indices = @transform_11, window_bounds = array<i64: 1, 32>}, {pipeline_mode = #tpu.pipeline_mode<synchronous>, transform_indices = @transform_12, window_bounds = array<i64: 32, 6>}, {pipeline_mode = #tpu.pipeline_mode<synchronous>, transform_indices = @transform_13, window_bounds = array<i64: 1, 6>}, {pipeline_mode = #tpu.pipeline_mode<synchronous>, transform_indices = @transform_14, window_bounds = array<i64: 1, 32>}, {pipeline_mode = #tpu.pipeline_mode<synchronous>, transform_indices = @transform_15, window_bounds = array<i64: 1, 1>}, {transform_indices = @transform_16, window_bounds = array<i64: 2, 3>}]} {
    %c0 = arith.constant 0 : index
    %c0_0 = arith.constant 0 : index
    %0 = vector.load %arg1[%c0, %c0_0] : memref<2x32xf32, #tpu.memory_space<vmem>>, vector<2x32xf32>
    %c0_1 = arith.constant 0 : index
    %c0_2 = arith.constant 0 : index
    %1 = vector.load %arg2[%c0_1, %c0_2] : memref<2x32xf32, #tpu.memory_space<vmem>>, vector<2x32xf32>
    %c0_3 = arith.constant 0 : index
    %c0_4 = arith.constant 0 : index
    %2 = vector.load %arg3[%c0_3, %c0_4] : memref<2x6xf32, #tpu.memory_space<vmem>>, vector<2x6xf32>
    %3 = arith.truncf %0 : vector<2x32xf32> to vector<2x32xbf16>
    %4 = arith.truncf %1 : vector<2x32xf32> to vector<2x32xbf16>
    %5 = arith.truncf %2 : vector<2x6xf32> to vector<2x6xbf16>
    %c0_5 = arith.constant 0 : index
    %c0_6 = arith.constant 0 : index
    %6 = vector.load %arg5[%c0_5, %c0_6] : memref<32x32xbf16, #tpu.memory_space<vmem>>, vector<32x32xbf16>
    %cst = arith.constant dense<0.000000e+00> : vector<2x32xf32>
    %7 = tpu.matmul %3, %6, %cst {dimension_numbers = #tpu.dot_dimension_numbers<[1], [0], [0], [1], [0, 0, 1, 1], [], []>} : vector<2x32xbf16>, vector<32x32xbf16>, vector<2x32xf32> -> vector<2x32xf32>
    %c0_7 = arith.constant 0 : index
    %c0_8 = arith.constant 0 : index
    %8 = vector.load %arg6[%c0_7, %c0_8] : memref<6x32xbf16, #tpu.memory_space<vmem>>, vector<6x32xbf16>
    %cst_9 = arith.constant dense<0.000000e+00> : vector<2x32xf32>
    %9 = tpu.matmul %5, %8, %cst_9 {dimension_numbers = #tpu.dot_dimension_numbers<[1], [0], [0], [1], [0, 0, 1, 1], [], []>} : vector<2x6xbf16>, vector<6x32xbf16>, vector<2x32xf32> -> vector<2x32xf32>
    %10 = arith.addf %7, %9 : vector<2x32xf32>
    %c0_10 = arith.constant 0 : index
    %c0_11 = arith.constant 0 : index
    %11 = vector.load %arg7[%c0_10, %c0_11] : memref<1x32xf32, #tpu.memory_space<vmem>>, vector<1x32xf32>
    %12 = vector.broadcast %11 : vector<1x32xf32> to vector<2x32xf32>
    %13 = arith.addf %10, %12 : vector<2x32xf32>
    %cst_12 = arith.constant 0.000000e+00 : f32
    %14 = vector.broadcast %cst_12 : f32 to vector<2x32xf32>
    %15 = arith.maximumf %13, %14 : vector<2x32xf32>
    %16 = arith.truncf %15 : vector<2x32xf32> to vector<2x32xbf16>
    %c0_13 = arith.constant 0 : index
    %c0_14 = arith.constant 0 : index
    %17 = vector.load %arg8[%c0_13, %c0_14] : memref<32x32xbf16, #tpu.memory_space<vmem>>, vector<32x32xbf16>
    %cst_15 = arith.constant dense<0.000000e+00> : vector<2x32xf32>
    %18 = tpu.matmul %16, %17, %cst_15 {dimension_numbers = #tpu.dot_dimension_numbers<[1], [0], [0], [1], [0, 0, 1, 1], [], []>} : vector<2x32xbf16>, vector<32x32xbf16>, vector<2x32xf32> -> vector<2x32xf32>
    %c0_16 = arith.constant 0 : index
    %c0_17 = arith.constant 0 : index
    %19 = vector.load %arg9[%c0_16, %c0_17] : memref<1x32xf32, #tpu.memory_space<vmem>>, vector<1x32xf32>
    %20 = vector.broadcast %19 : vector<1x32xf32> to vector<2x32xf32>
    %21 = arith.addf %18, %20 : vector<2x32xf32>
    %c0_18 = arith.constant 0 : index
    %c0_19 = arith.constant 0 : index
    %22 = vector.load %arg10[%c0_18, %c0_19] : memref<32x32xbf16, #tpu.memory_space<vmem>>, vector<32x32xbf16>
    %cst_20 = arith.constant dense<0.000000e+00> : vector<2x32xf32>
    %23 = tpu.matmul %3, %22, %cst_20 {dimension_numbers = #tpu.dot_dimension_numbers<[1], [0], [0], [1], [0, 0, 1, 1], [], []>} : vector<2x32xbf16>, vector<32x32xbf16>, vector<2x32xf32> -> vector<2x32xf32>
    %c0_21 = arith.constant 0 : index
    %c0_22 = arith.constant 0 : index
    %24 = vector.load %arg11[%c0_21, %c0_22] : memref<32x32xbf16, #tpu.memory_space<vmem>>, vector<32x32xbf16>
    %cst_23 = arith.constant dense<0.000000e+00> : vector<2x32xf32>
    %25 = tpu.matmul %4, %24, %cst_23 {dimension_numbers = #tpu.dot_dimension_numbers<[1], [0], [0], [1], [0, 0, 1, 1], [], []>} : vector<2x32xbf16>, vector<32x32xbf16>, vector<2x32xf32> -> vector<2x32xf32>
    %26 = arith.addf %23, %25 : vector<2x32xf32>
    %c0_24 = arith.constant 0 : index
    %c0_25 = arith.constant 0 : index
    %27 = vector.load %arg12[%c0_24, %c0_25] : memref<1x32xf32, #tpu.memory_space<vmem>>, vector<1x32xf32>
    %28 = vector.broadcast %27 : vector<1x32xf32> to vector<2x32xf32>
    %29 = arith.addf %26, %28 : vector<2x32xf32>
    %cst_26 = arith.constant 0.000000e+00 : f32
    %30 = vector.broadcast %cst_26 : f32 to vector<2x32xf32>
    %31 = arith.maximumf %29, %30 : vector<2x32xf32>
    %32 = arith.truncf %31 : vector<2x32xf32> to vector<2x32xbf16>
    %c0_27 = arith.constant 0 : index
    %c0_28 = arith.constant 0 : index
    %33 = vector.load %arg13[%c0_27, %c0_28] : memref<32x6xbf16, #tpu.memory_space<vmem>>, vector<32x6xbf16>
    %cst_29 = arith.constant dense<0.000000e+00> : vector<2x6xf32>
    %34 = tpu.matmul %32, %33, %cst_29 {dimension_numbers = #tpu.dot_dimension_numbers<[1], [0], [0], [1], [0, 0, 1, 1], [], []>} : vector<2x32xbf16>, vector<32x6xbf16>, vector<2x6xf32> -> vector<2x6xf32>
    %c0_30 = arith.constant 0 : index
    %c0_31 = arith.constant 0 : index
    %35 = vector.load %arg14[%c0_30, %c0_31] : memref<1x6xf32, #tpu.memory_space<vmem>>, vector<1x6xf32>
    %36 = vector.broadcast %35 : vector<1x6xf32> to vector<2x6xf32>
    %37 = arith.addf %34, %36 : vector<2x6xf32>
    %38 = arith.subf %21, %1 : vector<2x32xf32>
    %39 = arith.mulf %38, %38 : vector<2x32xf32>
    %cst_32 = arith.constant dense<0.000000e+00> : vector<2xf32>
    %40 = vector.multi_reduction <add>, %39, %cst_32 [1] : vector<2x32xf32> to vector<2xf32>
    %41 = vector.shape_cast %40 : vector<2xf32> to vector<2x1xf32>
    %42 = math.sqrt %41 : vector<2x1xf32>
    %cst_33 = arith.constant dense<0xFF800000> : vector<2xf32>
    %43 = vector.multi_reduction <maximumf>, %37, %cst_33 [1] : vector<2x6xf32> to vector<2xf32>
    %44 = vector.shape_cast %43 : vector<2xf32> to vector<2x1xf32>
    %45 = vector.broadcast %44 : vector<2x1xf32> to vector<2x6xf32>
    %46 = arith.subf %37, %45 : vector<2x6xf32>
    %47 = math.exp %46 : vector<2x6xf32>
    %cst_34 = arith.constant dense<0.000000e+00> : vector<2xf32>
    %48 = vector.multi_reduction <add>, %47, %cst_34 [1] : vector<2x6xf32> to vector<2xf32>
    %49 = vector.shape_cast %48 : vector<2xf32> to vector<2x1xf32>
    %50 = math.log %49 : vector<2x1xf32>
    %51 = vector.broadcast %50 : vector<2x1xf32> to vector<2x6xf32>
    %52 = arith.subf %46, %51 : vector<2x6xf32>
    %53 = arith.mulf %52, %2 : vector<2x6xf32>
    %cst_35 = arith.constant dense<0.000000e+00> : vector<2xf32>
    %54 = vector.multi_reduction <add>, %53, %cst_35 [1] : vector<2x6xf32> to vector<2xf32>
    %55 = vector.shape_cast %54 : vector<2xf32> to vector<2x1xf32>
    %cst_36 = arith.constant 0.000000e+00 : f32
    %56 = vector.broadcast %cst_36 : f32 to vector<2x1xf32>
    %57 = arith.subf %56, %55 : vector<2x1xf32>
    %58 = arith.addf %42, %57 : vector<2x1xf32>
    %cst_37 = arith.constant 1.000000e+00 : f32
    %59 = vector.broadcast %cst_37 : f32 to vector<2x1xf32>
    %60 = arith.mulf %59, %58 : vector<2x1xf32>
    %61 = arith.subf %1, %0 : vector<2x32xf32>
    %62 = arith.mulf %61, %61 : vector<2x32xf32>
    %cst_38 = arith.constant dense<0.000000e+00> : vector<2xf32>
    %63 = vector.multi_reduction <add>, %62, %cst_38 [1] : vector<2x32xf32> to vector<2xf32>
    %64 = vector.shape_cast %63 : vector<2xf32> to vector<2x1xf32>
    %65 = math.sqrt %64 : vector<2x1xf32>
    %c0_39 = arith.constant 0 : index
    %c0_40 = arith.constant 0 : index
    %66 = vector.load %arg4[%c0_39, %c0_40] : memref<2x32xf32, #tpu.memory_space<vmem>>, vector<2x32xf32>
    %c0_41 = arith.constant 0 : index
    %c0_42 = arith.constant 0 : index
    %67 = vector.load %arg15[%c0_41, %c0_42] : memref<1x32xf32, #tpu.memory_space<vmem>>, vector<1x32xf32>
    %68 = vector.broadcast %67 : vector<1x32xf32> to vector<2x32xf32>
    %69 = arith.mulf %66, %68 : vector<2x32xf32>
    %cst_43 = arith.constant dense<0.000000e+00> : vector<2xf32>
    %70 = vector.multi_reduction <add>, %69, %cst_43 [1] : vector<2x32xf32> to vector<2xf32>
    %71 = vector.shape_cast %70 : vector<2xf32> to vector<2x1xf32>
    %c0_44 = arith.constant 0 : index
    %c0_45 = arith.constant 0 : index
    %72 = vector.load %arg16[%c0_44, %c0_45] : memref<1x1xf32, #tpu.memory_space<vmem>>, vector<1x1xf32>
    %73 = vector.broadcast %72 : vector<1x1xf32> to vector<2x1xf32>
    %74 = arith.addf %71, %73 : vector<2x1xf32>
    %c0_46 = arith.constant 0 : index
    %c0_47 = arith.constant 0 : index
    %75 = vector.load %arg17[%c0_46, %c0_47] : memref<2x3xf32, #tpu.memory_space<vmem>>, vector<2x1xf32>
    tpu.vector_store %arg17[%c0_46, %c0_47], %65 {strides = array<i32>} : memref<2x3xf32, #tpu.memory_space<vmem>>, vector<2x1xf32>,
    %c0_48 = arith.constant 0 : index
    %c1 = arith.constant 1 : index
    %76 = vector.load %arg17[%c0_48, %c1] : memref<2x3xf32, #tpu.memory_space<vmem>>, vector<2x1xf32>
    tpu.vector_store %arg17[%c0_48, %c1], %74 {strides = array<i32>} : memref<2x3xf32, #tpu.memory_space<vmem>>, vector<2x1xf32>,
    %c0_49 = arith.constant 0 : index
    %c2 = arith.constant 2 : index
    %77 = vector.load %arg17[%c0_49, %c2] : memref<2x3xf32, #tpu.memory_space<vmem>>, vector<2x1xf32>
    tpu.vector_store %arg17[%c0_49, %c2], %60 {strides = array<i32>} : memref<2x3xf32, #tpu.memory_space<vmem>>, vector<2x1xf32>,
    return
  }
  func.func @transform_0(%arg0: i32) -> (i32, i32) {
    %c0_i32 = arith.constant 0 : i32
    %c0_i32_0 = arith.constant 0 : i32
    return %arg0, %c0_i32 : i32, i32
  }
  func.func @transform_1(%arg0: i32) -> (i32, i32) {
    %c0_i32 = arith.constant 0 : i32
    %c0_i32_0 = arith.constant 0 : i32
    return %arg0, %c0_i32 : i32, i32
  }
  func.func @transform_2(%arg0: i32) -> (i32, i32) {
    %c0_i32 = arith.constant 0 : i32
    %c0_i32_0 = arith.constant 0 : i32
    return %arg0, %c0_i32 : i32, i32
  }
  func.func @transform_3(%arg0: i32) -> (i32, i32) {
    %c0_i32 = arith.constant 0 : i32
    %c0_i32_0 = arith.constant 0 : i32
    return %arg0, %c0_i32 : i32, i32
  }
  func.func @transform_4(%arg0: i32) -> (i32, i32) {
    %c0_i32 = arith.constant 0 : i32
    %c0_i32_0 = arith.constant 0 : i32
    %c0_i32_1 = arith.constant 0 : i32
    return %c0_i32, %c0_i32_0 : i32, i32
  }
  func.func @transform_5(%arg0: i32) -> (i32, i32) {
    %c0_i32 = arith.constant 0 : i32
    %c0_i32_0 = arith.constant 0 : i32
    %c0_i32_1 = arith.constant 0 : i32
    return %c0_i32, %c0_i32_0 : i32, i32
  }
  func.func @transform_6(%arg0: i32) -> (i32, i32) {
    %c0_i32 = arith.constant 0 : i32
    %c0_i32_0 = arith.constant 0 : i32
    %c0_i32_1 = arith.constant 0 : i32
    return %c0_i32, %c0_i32_0 : i32, i32
  }
  func.func @transform_7(%arg0: i32) -> (i32, i32) {
    %c0_i32 = arith.constant 0 : i32
    %c0_i32_0 = arith.constant 0 : i32
    %c0_i32_1 = arith.constant 0 : i32
    return %c0_i32, %c0_i32_0 : i32, i32
  }
  func.func @transform_8(%arg0: i32) -> (i32, i32) {
    %c0_i32 = arith.constant 0 : i32
    %c0_i32_0 = arith.constant 0 : i32
    %c0_i32_1 = arith.constant 0 : i32
    return %c0_i32, %c0_i32_0 : i32, i32
  }
  func.func @transform_9(%arg0: i32) -> (i32, i32) {
    %c0_i32 = arith.constant 0 : i32
    %c0_i32_0 = arith.constant 0 : i32
    %c0_i32_1 = arith.constant 0 : i32
    return %c0_i32, %c0_i32_0 : i32, i32
  }
  func.func @transform_10(%arg0: i32) -> (i32, i32) {
    %c0_i32 = arith.constant 0 : i32
    %c0_i32_0 = arith.constant 0 : i32
    %c0_i32_1 = arith.constant 0 : i32
    return %c0_i32, %c0_i32_0 : i32, i32
  }
  func.func @transform_11(%arg0: i32) -> (i32, i32) {
    %c0_i32 = arith.constant 0 : i32
    %c0_i32_0 = arith.constant 0 : i32
    %c0_i32_1 = arith.constant 0 : i32
    return %c0_i32, %c0_i32_0 : i32, i32
  }
  func.func @transform_12(%arg0: i32) -> (i32, i32) {
    %c0_i32 = arith.constant 0 : i32
    %c0_i32_0 = arith.constant 0 : i32
    %c0_i32_1 = arith.constant 0 : i32
    return %c0_i32, %c0_i32_0 : i32, i32
  }
  func.func @transform_13(%arg0: i32) -> (i32, i32) {
    %c0_i32 = arith.constant 0 : i32
    %c0_i32_0 = arith.constant 0 : i32
    %c0_i32_1 = arith.constant 0 : i32
    return %c0_i32, %c0_i32_0 : i32, i32
  }
  func.func @transform_14(%arg0: i32) -> (i32, i32) {
    %c0_i32 = arith.constant 0 : i32
    %c0_i32_0 = arith.constant 0 : i32
    %c0_i32_1 = arith.constant 0 : i32
    return %c0_i32, %c0_i32_0 : i32, i32
  }
  func.func @transform_15(%arg0: i32) -> (i32, i32) {
    %c0_i32 = arith.constant 0 : i32
    %c0_i32_0 = arith.constant 0 : i32
    %c0_i32_1 = arith.constant 0 : i32
    return %c0_i32, %c0_i32_0 : i32, i32
  }
  func.func @transform_16(%arg0: i32) -> (i32, i32) {
    %c0_i32 = arith.constant 0 : i32
    %c0_i32_0 = arith.constant 0 : i32
    return %arg0, %c0_i32 : i32, i32
  }
}

</mosaic_0001>

<llo_original>
// kernel: forward.3
$region0: #{forward.3}
  #allocation0 [shape = 'u32[]', space=smem, size = 0x4, offset = 0x4, fixed_abs, tag = 'smem constant byte address 0x4 - core index']
  #allocation1 [shape = 'u32[144,128]{1,0:T(1,128)}', space=vmem, size = 0x12000, scoped, tag = 'internal scratch']
  #allocation2 [shape = 'f32[1,1]{1,0:T(1,128)S(1)}', space=vmem, size = 0x200, scoped, tag = 'scoped memory for forward.3']
  %s0 = inlined_call_operand.vmem [shape: f32[2,32], index: 0, kind: input, shape index: {}]
  %s1 = inlined_call_operand.vmem [shape: f32[2,32], index: 1, kind: input, shape index: {}]
  %s2 = inlined_call_operand.vmem [shape: f32[2,6], index: 2, kind: input, shape index: {}]
  %s3 = inlined_call_operand.vmem [shape: f32[2,32], index: 3, kind: input, shape index: {}]
  %s4 = inlined_call_operand.vmem [shape: bf16[32,32], index: 4, kind: input, shape index: {}]
  %s5 = inlined_call_operand.vmem [shape: bf16[6,32], index: 5, kind: input, shape index: {}]
  %s6 = inlined_call_operand.vmem [shape: f32[1,32], index: 6, kind: input, shape index: {}, may-alias: {6,8,11}]
  %s7 = inlined_call_operand.vmem [shape: bf16[32,32], index: 7, kind: input, shape index: {}]
  %s8 = inlined_call_operand.vmem [shape: f32[1,32], index: 8, kind: input, shape index: {}, may-alias: {6,8,11}]
  %s9 = inlined_call_operand.vmem [shape: bf16[32,32], index: 9, kind: input, shape index: {}]
  %s10 = inlined_call_operand.vmem [shape: bf16[32,32], index: 10, kind: input, shape index: {}]
  %s11 = inlined_call_operand.vmem [shape: f32[1,32], index: 11, kind: input, shape index: {}, may-alias: {6,8,11}]
  %s12 = inlined_call_operand.vmem [shape: bf16[32,6], index: 12, kind: input, shape index: {}]
  %s13 = inlined_call_operand.vmem [shape: f32[1,6], index: 13, kind: input, shape index: {}]
  %s14 = inlined_call_operand.vmem [shape: f32[1,32], index: 14, kind: input, shape index: {}]
  %s15 = inlined_call_operand.<no memory space> [shape: f32[1,1], index: 15, kind: input, shape index: {}]
  %s16 = inlined_call_operand.vmem [shape: f32[2,3], index: 16, kind: output, shape index: {}]
  %s17 = sld [smem:[#allocation0]]
  $region74: #{forward.3} parent=0
    _
  %s19 = ssub.s32 1, %s17
  %s20 = scalar_select 0, %s19, %s17
  %v21 = vstv %s15
  %22 = vst [vmem:[#allocation2] sm:$0x1] %v21
  // Predicated region
  $region2: #{forward.3} parent=0 // pred_check
    _
  $region3: #{forward.3} parent=0 // pred_check_branch
    %24 = sbr.rel (0) target = $region5
  $region4: #{forward.3} parent=0 // pred_region
    _
  $region5: #{forward.3} parent=0 // pred_fallthru
    _
  // Predicated region
  $region6: #{forward.3} parent=0 // pred_check
    _
  $region7: #{forward.3} parent=0 // pred_check_branch
    %26 = sbr.rel (0) target = $region9
  $region8: #{forward.3} parent=0 // pred_region
    _
  $region9: #{forward.3} parent=0 // pred_fallthru
    _
  // Predicated region
  $region10: #{forward.3} parent=0 // pred_check
    _
  $region11: #{forward.3} parent=0 // pred_check_branch
    %28 = sbr.rel (0) target = $region13
  $region12: #{forward.3} parent=0 // pred_region
    _
  $region13: #{forward.3} parent=0 // pred_fallthru
    _
  // Predicated region
  $region14: #{forward.3} parent=0 // pred_check
    _
  $region15: #{forward.3} parent=0 // pred_check_branch
    %30 = sbr.rel (0) target = $region17
  $region16: #{forward.3} parent=0 // pred_region
    _
  $region17: #{forward.3} parent=0 // pred_fallthru
    _
  // Predicated region
  $region18: #{forward.3} parent=0 // pred_check
    _
  $region19: #{forward.3} parent=0 // pred_check_branch
    %32 = sbr.rel (0) target = $region21
  $region20: #{forward.3} parent=0 // pred_region
    _
  $region21: #{forward.3} parent=0 // pred_fallthru
    _
  // Predicated region
  $region22: #{forward.3} parent=0 // pred_check
    _
  $region23: #{forward.3} parent=0 // pred_check_branch
    %34 = sbr.rel (0) target = $region25
  $region24: #{forward.3} parent=0 // pred_region
    _
  $region25: #{forward.3} parent=0 // pred_fallthru
    _
  // Predicated region
  $region26: #{forward.3} parent=0 // pred_check
    _
  $region27: #{forward.3} parent=0 // pred_check_branch
    %36 = sbr.rel (0) target = $region29
  $region28: #{forward.3} parent=0 // pred_region
    _
  $region29: #{forward.3} parent=0 // pred_fallthru
    _
  // Predicated region
  $region30: #{forward.3} parent=0 // pred_check
    _
  $region31: #{forward.3} parent=0 // pred_check_branch
    %38 = sbr.rel (0) target = $region33
  $region32: #{forward.3} parent=0 // pred_region
    _
  $region33: #{forward.3} parent=0 // pred_fallthru
    _
  // Predicated region
  $region34: #{forward.3} parent=0 // pred_check
    _
  $region35: #{forward.3} parent=0 // pred_check_branch
    %40 = sbr.rel (0) target = $region37
  $region36: #{forward.3} parent=0 // pred_region
    _
  $region37: #{forward.3} parent=0 // pred_fallthru
    _
  // Predicated region
  $region38: #{forward.3} parent=0 // pred_check
    _
  $region39: #{forward.3} parent=0 // pred_check_branch
    %42 = sbr.rel (0) target = $region41
  $region40: #{forward.3} parent=0 // pred_region
    _
  $region41: #{forward.3} parent=0 // pred_fallthru
    _
  // Predicated region
  $region42: #{forward.3} parent=0 // pred_check
    _
  $region43: #{forward.3} parent=0 // pred_check_branch
    %44 = sbr.rel (0) target = $region45
  $region44: #{forward.3} parent=0 // pred_region
    _
  $region45: #{forward.3} parent=0 // pred_fallthru
    _
  // Predicated region
  $region46: #{forward.3} parent=0 // pred_check
    _
  $region47: #{forward.3} parent=0 // pred_check_branch
    %46 = sbr.rel (0) target = $region49
  $region48: #{forward.3} parent=0 // pred_region
    _
  $region49: #{forward.3} parent=0 // pred_fallthru
    _
  // Predicated region
  $region50: #{forward.3} parent=0 // pred_check
    _
  $region51: #{forward.3} parent=0 // pred_check_branch
    %48 = sbr.rel (0) target = $region53
  $region52: #{forward.3} parent=0 // pred_region
    _
  $region53: #{forward.3} parent=0 // pred_fallthru
    _
  // Predicated region
  $region54: #{forward.3} parent=0 // pred_check
    _
  $region55: #{forward.3} parent=0 // pred_check_branch
    %50 = sbr.rel (0) target = $region57
  $region56: #{forward.3} parent=0 // pred_region
    _
  $region57: #{forward.3} parent=0 // pred_fallthru
    _
  // Predicated region
  $region58: #{forward.3} parent=0 // pred_check
    _
  $region59: #{forward.3} parent=0 // pred_check_branch
    %52 = sbr.rel (0) target = $region61
  $region60: #{forward.3} parent=0 // pred_region
    _
  $region61: #{forward.3} parent=0 // pred_fallthru
    _
  // Predicated region
  $region62: #{forward.3} parent=0 // pred_check
    _
  $region63: #{forward.3} parent=0 // pred_check_branch
    %54 = sbr.rel (0) target = $region65
  $region64: #{forward.3} parent=0 // pred_region
    _
  $region65: #{forward.3} parent=0 // pred_fallthru
    _
  %v56 = vld [vmem:[%s0] sm:$0x3]
  %v57 = vld [vmem:[%s1] sm:$0x3]
  %v58 = vld [vmem:[%s2] sm:$0x3]
  %v59 = vpack.c.bf16 %v56, %v56
  %v60 = vpack.c.bf16 %v57, %v57
  %v61 = vpack.c.bf16 %v58, %v58
  %v62 = vld [vmem:[%s4] sm:$0xf]
  %v63 = vld [vmem:[%s4 + $0x4] sm:$0xf]
  %v64 = vld [vmem:[%s4 + $0x8] sm:$0xf]
  %v65 = vld [vmem:[%s4 + $0xc] sm:$0xf]
  %v66 = vld [vmem:[%s5] sm:$0x7]
  %vm67 = vcmask 48128
  %v69 = vsel %vm67, %v61, 0
  %vm71 = vcmask 1042432
  %v73 = vsel %vm71, %v66, 0
  %75 = vmatprep.subr.bf16.mxu0 0
  %76 = vmatpush1.bf16.msra.mxu0 0
  %77 = vmatprep.subr.bf16.mxu0 0
  %78 = vmatpush1.bf16.msra.mxu0 0
  %79 = vmatprep.subr.bf16.mxu0 0
  %80 = vmatpush1.bf16.msra.mxu0 0
  %81 = vmatprep.subr.bf16.mxu0 0
  %82 = vmatpush1.bf16.msra.mxu0 0
  %83 = vmatprep.subr.bf16.mxu0 0
  %84 = vmatpush1.bf16.msra.mxu0 0
  %85 = vmatprep.subr.bf16.mxu0 0
  %86 = vmatpush1.bf16.msra.mxu0 0
  %87 = vmatprep.subr.bf16.mxu0 0
  %88 = vmatpush1.bf16.msra.mxu0 0
  %89 = vmatprep.subr.bf16.mxu0 0
  %90 = vmatpush1.bf16.msra.mxu0 %v73
  %91 = vmatprep.subr.bf16.mxu0 0
  %92 = vmatpush2.bf16.msra.mxu0 0
  %93 = vmatprep.subr.bf16.mxu0 0
  %94 = vmatpush2.bf16.msra.mxu0 0
  %95 = vmatprep.subr.bf16.mxu0 0
  %96 = vmatpush2.bf16.msra.mxu0 0
  %97 = vmatprep.subr.bf16.mxu0 0
  %98 = vmatpush2.bf16.msra.mxu0 0
  %99 = vmatprep.subr.bf16.mxu0 0
  %100 = vmatpush2.bf16.msra.mxu0 0
  %101 = vmatprep.subr.bf16.mxu0 0
  %102 = vmatpush2.bf16.msra.mxu0 0
  %103 = vmatprep.subr.bf16.mxu0 0
  %104 = vmatpush2.bf16.msra.mxu0 0
  %105 = vmatprep.subr.bf16.mxu0 0
  %106 = vmatpush2.bf16.msra.mxu0 0
  %107 = vmatprep.mubr.bf16.mxu0 0
  %108 = vmatmul.mubr.bf16.gmra.mxu0 %v69
  %v109 = vpop.f32.mrf.mxu0
  %v110 = vadd.f32 0.0, %v109
  %v111 = vpop.f32.mrf.mxu0
  %v112 = vpop.f32.mrf.mxu0
  %v113 = vpop.f32.mrf.mxu0
  %114 = vdwg.mxu0
  %v119 = vunpack.c.l.b16 %v62
  %v120 = vunpack.c.l.b16 %v63
  %v121 = vunpack.c.l.b16 %v64
  %v122 = vunpack.c.l.b16 %v65
  %v123 = vpack.c.b16 %v120, %v119
  %v124 = vpack.c.b16 %v122, %v121
  %vm127 = vcmask 261120
  %v129 = vsel %vm127, %v59, 0
  %131 = vmatprep.subr.bf16.mxu0 0
  %132 = vmatpush1.bf16.msra.mxu0 0
  %133 = vmatprep.subr.bf16.mxu0 0
  %134 = vmatpush1.bf16.msra.mxu0 0
  %135 = vmatprep.subr.bf16.mxu0 0
  %136 = vmatpush1.bf16.msra.mxu0 0
  %137 = vmatprep.subr.bf16.mxu0 0
  %138 = vmatpush1.bf16.msra.mxu0 0
  %139 = vmatprep.subr.bf16.mxu0 0
  %140 = vmatpush1.bf16.msra.mxu0 0
  %141 = vmatprep.subr.bf16.mxu0 0
  %142 = vmatpush1.bf16.msra.mxu0 0
  %143 = vmatprep.subr.bf16.mxu0 0
  %144 = vmatpush1.bf16.msra.mxu0 %v124
  %145 = vmatprep.subr.bf16.mxu0 0
  %146 = vmatpush1.bf16.msra.mxu0 %v123
  %147 = vmatprep.subr.bf16.mxu0 0
  %148 = vmatpush2.bf16.msra.mxu0 0
  %149 = vmatprep.subr.bf16.mxu0 0
  %150 = vmatpush2.bf16.msra.mxu0 0
  %151 = vmatprep.subr.bf16.mxu0 0
  %152 = vmatpush2.bf16.msra.mxu0 0
  %153 = vmatprep.subr.bf16.mxu0 0
  %154 = vmatpush2.bf16.msra.mxu0 0
  %155 = vmatprep.subr.bf16.mxu0 0
  %156 = vmatpush2.bf16.msra.mxu0 0
  %157 = vmatprep.subr.bf16.mxu0 0
  %158 = vmatpush2.bf16.msra.mxu0 0
  %159 = vmatprep.subr.bf16.mxu0 0
  %160 = vmatpush2.bf16.msra.mxu0 0
  %161 = vmatprep.subr.bf16.mxu0 0
  %162 = vmatpush2.bf16.msra.mxu0 0
  %163 = vmatprep.mubr.bf16.mxu0 0
  %164 = vmatmul.mubr.bf16.gmra.mxu0 %v129
  %v165 = vpop.f32.mrf.mxu0
  %v166 = vadd.f32 %v110, %v165
  %v167 = vpop.f32.mrf.mxu0
  %v168 = vpop.f32.mrf.mxu0
  %v169 = vpop.f32.mrf.mxu0
  %170 = vdwg.mxu0
  %v171 = vld [vmem:[%s6] sm:$0x1]
  %v173 = vlaneseq
  %v174 = vshrl.u32 %v173, 7
  %v175 = vsub.s32 0, %v174
  %v176 = vrot.slane %v171, %v175
  %v178 = vadd.f32 %v166, %v176
  %v179 = vmax.f32 %v178, 0.0
  %v180 = vpack.c.bf16 %v179, %v179
  %v181 = vld [vmem:[%s7] sm:$0xf]
  %v182 = vld [vmem:[%s7 + $0x4] sm:$0xf]
  %v183 = vld [vmem:[%s7 + $0x8] sm:$0xf]
  %v184 = vld [vmem:[%s7 + $0xc] sm:$0xf]
  %v185 = vld [vmem:[%s8] sm:$0x1]
  %v187 = vlaneseq
  %v188 = vshrl.u32 %v187, 7
  %v189 = vsub.s32 0, %v188
  %v190 = vrot.slane %v185, %v189
  %v196 = vunpack.c.l.b16 %v181
  %v197 = vunpack.c.l.b16 %v182
  %v198 = vunpack.c.l.b16 %v183
  %v199 = vunpack.c.l.b16 %v184
  %v200 = vpack.c.b16 %v197, %v196
  %v201 = vpack.c.b16 %v199, %v198
  %v205 = vsel %vm127, %v180, 0
  %207 = vmatprep.subr.bf16.mxu0 0
  %208 = vmatpush1.bf16.msra.mxu0 0
  %209 = vmatprep.subr.bf16.mxu0 0
  %210 = vmatpush1.bf16.msra.mxu0 0
  %211 = vmatprep.subr.bf16.mxu0 0
  %212 = vmatpush1.bf16.msra.mxu0 0
  %213 = vmatprep.subr.bf16.mxu0 0
  %214 = vmatpush1.bf16.msra.mxu0 0
  %215 = vmatprep.subr.bf16.mxu0 0
  %216 = vmatpush1.bf16.msra.mxu0 0
  %217 = vmatprep.subr.bf16.mxu0 0
  %218 = vmatpush1.bf16.msra.mxu0 0
  %219 = vmatprep.subr.bf16.mxu0 0
  %220 = vmatpush1.bf16.msra.mxu0 %v201
  %221 = vmatprep.subr.bf16.mxu0 0
  %222 = vmatpush1.bf16.msra.mxu0 %v200
  %223 = vmatprep.subr.bf16.mxu0 0
  %224 = vmatpush2.bf16.msra.mxu0 0
  %225 = vmatprep.subr.bf16.mxu0 0
  %226 = vmatpush2.bf16.msra.mxu0 0
  %227 = vmatprep.subr.bf16.mxu0 0
  %228 = vmatpush2.bf16.msra.mxu0 0
  %229 = vmatprep.subr.bf16.mxu0 0
  %230 = vmatpush2.bf16.msra.mxu0 0
  %231 = vmatprep.subr.bf16.mxu0 0
  %232 = vmatpush2.bf16.msra.mxu0 0
  %233 = vmatprep.subr.bf16.mxu0 0
  %234 = vmatpush2.bf16.msra.mxu0 0
  %235 = vmatprep.subr.bf16.mxu0 0
  %236 = vmatpush2.bf16.msra.mxu0 0
  %237 = vmatprep.subr.bf16.mxu0 0
  %238 = vmatpush2.bf16.msra.mxu0 0
  %239 = vmatprep.mubr.bf16.mxu0 0
  %240 = vmatmul.mubr.bf16.gmra.mxu0 %v205
  %v241 = vpop.f32.mrf.mxu0
  %v242 = vadd.f32 %v190, %v241
  %v243 = vpop.f32.mrf.mxu0
  %v244 = vpop.f32.mrf.mxu0
  %v245 = vpop.f32.mrf.mxu0
  %246 = vdwg.mxu0
  %v247 = vld [vmem:[%s9] sm:$0xf]
  %v248 = vld [vmem:[%s9 + $0x4] sm:$0xf]
  %v249 = vld [vmem:[%s9 + $0x8] sm:$0xf]
  %v250 = vld [vmem:[%s9 + $0xc] sm:$0xf]
  %v251 = vld [vmem:[%s10] sm:$0xf]
  %v252 = vld [vmem:[%s10 + $0x4] sm:$0xf]
  %v253 = vld [vmem:[%s10 + $0x8] sm:$0xf]
  %v254 = vld [vmem:[%s10 + $0xc] sm:$0xf]
  %v259 = vunpack.c.l.b16 %v251
  %v260 = vunpack.c.l.b16 %v252
  %v261 = vunpack.c.l.b16 %v253
  %v262 = vunpack.c.l.b16 %v254
  %v263 = vpack.c.b16 %v260, %v259
  %v264 = vpack.c.b16 %v262, %v261
  %v268 = vsel %vm127, %v60, 0
  %270 = vmatprep.subr.bf16.mxu0 0
  %271 = vmatpush1.bf16.msra.mxu0 0
  %272 = vmatprep.subr.bf16.mxu0 0
  %273 = vmatpush1.bf16.msra.mxu0 0
  %274 = vmatprep.subr.bf16.mxu0 0
  %275 = vmatpush1.bf16.msra.mxu0 0
  %276 = vmatprep.subr.bf16.mxu0 0
  %277 = vmatpush1.bf16.msra.mxu0 0
  %278 = vmatprep.subr.bf16.mxu0 0
  %279 = vmatpush1.bf16.msra.mxu0 0
  %280 = vmatprep.subr.bf16.mxu0 0
  %281 = vmatpush1.bf16.msra.mxu0 0
  %282 = vmatprep.subr.bf16.mxu0 0
  %283 = vmatpush1.bf16.msra.mxu0 %v264
  %284 = vmatprep.subr.bf16.mxu0 0
  %285 = vmatpush1.bf16.msra.mxu0 %v263
  %286 = vmatprep.subr.bf16.mxu0 0
  %287 = vmatpush2.bf16.msra.mxu0 0
  %288 = vmatprep.subr.bf16.mxu0 0
  %289 = vmatpush2.bf16.msra.mxu0 0
  %290 = vmatprep.subr.bf16.mxu0 0
  %291 = vmatpush2.bf16.msra.mxu0 0
  %292 = vmatprep.subr.bf16.mxu0 0
  %293 = vmatpush2.bf16.msra.mxu0 0
  %294 = vmatprep.subr.bf16.mxu0 0
  %295 = vmatpush2.bf16.msra.mxu0 0
  %296 = vmatprep.subr.bf16.mxu0 0
  %297 = vmatpush2.bf16.msra.mxu0 0
  %298 = vmatprep.subr.bf16.mxu0 0
  %299 = vmatpush2.bf16.msra.mxu0 0
  %300 = vmatprep.subr.bf16.mxu0 0
  %301 = vmatpush2.bf16.msra.mxu0 0
  %302 = vmatprep.mubr.bf16.mxu0 0
  %303 = vmatmul.mubr.bf16.gmra.mxu0 %v268
  %v304 = vpop.f32.mrf.mxu0
  %v305 = vadd.f32 0.0, %v304
  %v306 = vpop.f32.mrf.mxu0
  %v307 = vpop.f32.mrf.mxu0
  %v308 = vpop.f32.mrf.mxu0
  %309 = vdwg.mxu0
  %v314 = vunpack.c.l.b16 %v247
  %v315 = vunpack.c.l.b16 %v248
  %v316 = vunpack.c.l.b16 %v249
  %v317 = vunpack.c.l.b16 %v250
  %v318 = vpack.c.b16 %v315, %v314
  %v319 = vpack.c.b16 %v317, %v316
  %322 = vmatprep.subr.bf16.mxu0 0
  %323 = vmatpush1.bf16.msra.mxu0 0
  %324 = vmatprep.subr.bf16.mxu0 0
  %325 = vmatpush1.bf16.msra.mxu0 0
  %326 = vmatprep.subr.bf16.mxu0 0
  %327 = vmatpush1.bf16.msra.mxu0 0
  %328 = vmatprep.subr.bf16.mxu0 0
  %329 = vmatpush1.bf16.msra.mxu0 0
  %330 = vmatprep.subr.bf16.mxu0 0
  %331 = vmatpush1.bf16.msra.mxu0 0
  %332 = vmatprep.subr.bf16.mxu0 0
  %333 = vmatpush1.bf16.msra.mxu0 0
  %334 = vmatprep.subr.bf16.mxu0 0
  %335 = vmatpush1.bf16.msra.mxu0 %v319
  %336 = vmatprep.subr.bf16.mxu0 0
  %337 = vmatpush1.bf16.msra.mxu0 %v318
  %338 = vmatprep.subr.bf16.mxu0 0
  %339 = vmatpush2.bf16.msra.mxu0 0
  %340 = vmatprep.subr.bf16.mxu0 0
  %341 = vmatpush2.bf16.msra.mxu0 0
  %342 = vmatprep.subr.bf16.mxu0 0
  %343 = vmatpush2.bf16.msra.mxu0 0
  %344 = vmatprep.subr.bf16.mxu0 0
  %345 = vmatpush2.bf16.msra.mxu0 0
  %346 = vmatprep.subr.bf16.mxu0 0
  %347 = vmatpush2.bf16.msra.mxu0 0
  %348 = vmatprep.subr.bf16.mxu0 0
  %349 = vmatpush2.bf16.msra.mxu0 0
  %350 = vmatprep.subr.bf16.mxu0 0
  %351 = vmatpush2.bf16.msra.mxu0 0
  %352 = vmatprep.subr.bf16.mxu0 0
  %353 = vmatpush2.bf16.msra.mxu0 0
  %354 = vmatprep.mubr.bf16.mxu0 0
  %355 = vmatmul.mubr.bf16.gmra.mxu0 %v129
  %v356 = vpop.f32.mrf.mxu0
  %v357 = vadd.f32 %v305, %v356
  %v358 = vpop.f32.mrf.mxu0
  %v359 = vpop.f32.mrf.mxu0
  %v360 = vpop.f32.mrf.mxu0
  %361 = vdwg.mxu0
  %v362 = vld [vmem:[%s11] sm:$0x1]
  %v364 = vlaneseq
  %v365 = vshrl.u32 %v364, 7
  %v366 = vsub.s32 0, %v365
  %v367 = vrot.slane %v362, %v366
  %v369 = vadd.f32 %v357, %v367
  %v370 = vmax.f32 %v369, 0.0
  %v371 = vpack.c.bf16 %v370, %v370
  %v372 = vld [vmem:[%s12] sm:$0xf]
  %v373 = vld [vmem:[%s12 + $0x4] sm:$0xf]
  %v374 = vld [vmem:[%s12 + $0x8] sm:$0xf]
  %v375 = vld [vmem:[%s12 + $0xc] sm:$0xf]
  %v376 = vld [vmem:[%s13] sm:$0x1]
  %v378 = vlaneseq
  %v379 = vshrl.u32 %v378, 7
  %v380 = vsub.s32 0, %v379
  %v381 = vrot.slane %v376, %v380
  %v387 = vunpack.c.l.b16 %v372
  %v388 = vunpack.c.l.b16 %v373
  %v389 = vunpack.c.l.b16 %v374
  %v390 = vunpack.c.l.b16 %v375
  %v391 = vpack.c.b16 %v388, %v387
  %v392 = vpack.c.b16 %v390, %v389
  %v396 = vsel %vm127, %v371, 0
  %398 = vmatprep.subr.bf16.mxu0 0
  %399 = vmatpush1.bf16.msra.mxu0 0
  %400 = vmatprep.subr.bf16.mxu0 0
  %401 = vmatpush1.bf16.msra.mxu0 0
  %402 = vmatprep.subr.bf16.mxu0 0
  %403 = vmatpush1.bf16.msra.mxu0 0
  %404 = vmatprep.subr.bf16.mxu0 0
  %405 = vmatpush1.bf16.msra.mxu0 0
  %406 = vmatprep.subr.bf16.mxu0 0
  %407 = vmatpush1.bf16.msra.mxu0 0
  %408 = vmatprep.subr.bf16.mxu0 0
  %409 = vmatpush1.bf16.msra.mxu0 0
  %410 = vmatprep.subr.bf16.mxu0 0
  %411 = vmatpush1.bf16.msra.mxu0 %v392
  %412 = vmatprep.subr.bf16.mxu0 0
  %413 = vmatpush1.bf16.msra.mxu0 %v391
  %414 = vmatprep.subr.bf16.mxu0 0
  %415 = vmatpush2.bf16.msra.mxu0 0
  %416 = vmatprep.subr.bf16.mxu0 0
  %417 = vmatpush2.bf16.msra.mxu0 0
  %418 = vmatprep.subr.bf16.mxu0 0
  %419 = vmatpush2.bf16.msra.mxu0 0
  %420 = vmatprep.subr.bf16.mxu0 0
  %421 = vmatpush2.bf16.msra.mxu0 0
  %422 = vmatprep.subr.bf16.mxu0 0
  %423 = vmatpush2.bf16.msra.mxu0 0
  %424 = vmatprep.subr.bf16.mxu0 0
  %425 = vmatpush2.bf16.msra.mxu0 0
  %426 = vmatprep.subr.bf16.mxu0 0
  %427 = vmatpush2.bf16.msra.mxu0 0
  %428 = vmatprep.subr.bf16.mxu0 0
  %429 = vmatpush2.bf16.msra.mxu0 0
  %430 = vmatprep.mubr.bf16.mxu0 0
  %431 = vmatmul.mubr.bf16.gmra.mxu0 %v396
  %v432 = vpop.f32.mrf.mxu0
  %v433 = vadd.f32 %v381, %v432
  %v434 = vpop.f32.mrf.mxu0
  %v435 = vpop.f32.mrf.mxu0
  %v436 = vpop.f32.mrf.mxu0
  %437 = vdwg.mxu0
  %v438 = vsub.f32 %v242, %v57
  %v439 = vmul.f32 %v438, %v438
  %vm440 = vcmask 254976
  %v441 = vsel %vm440, %v439, 0.0
  %442 = vadd.xlane.f32.xlu0 %v441
  %v443 = vpop.xlane.xlu0 %442
  %v444 = vrsqrt.pop %v443
  %v445 = vmul.f32 %v443, %v444
  %vm446 = vcmp.eq.f32.partialorder %v443, inf
  %v447 = vsel %vm446, %v443, %v445
  %vm448 = vcmp.eq.f32.partialorder %v443, 0.0
  %v449 = vand.u32 %v443, 2147483648
  %v450 = vsel %vm448, %v449, %v447
  %vm451 = vcmask 41984
  %v452 = vsel %vm451, %v433, -inf
  %453 = vmax.xlane.f32.xlu0 %v452
  %v454 = vpop.xlane.xlu0 %453
  %v455 = vsub.f32 %v433, %v454
  %v456 = vmul.f32 %v455, 1.442695
  %v457 = vpow.pop %v456
  %v458 = vsel %vm451, %v457, 0.0
  %459 = vadd.xlane.f32.xlu0 %v458
  %v460 = vpop.xlane.xlu0 %459
  %v461 = vlog2.pop %v460
  %v462 = vmul.f32 %v461, 0.6931472
  %v463 = vsub.f32 %v455, %v462
  %v464 = vmul.f32 %v463, %v58
  %v465 = vsel %vm451, %v464, 0.0
  %466 = vadd.xlane.f32.xlu0 %v465
  %v467 = vpop.xlane.xlu0 %466
  %v468 = vsub.f32 0.0, %v467
  %v469 = vadd.f32 %v450, %v468
  %v470 = vsub.f32 %v57, %v56
  %v471 = vmul.f32 %v470, %v470
  %v472 = vsel %vm440, %v471, 0.0
  %473 = vadd.xlane.f32.xlu0 %v472
  %v474 = vpop.xlane.xlu0 %473
  %v475 = vrsqrt.pop %v474
  %v476 = vmul.f32 %v474, %v475
  %vm477 = vcmp.eq.f32.partialorder %v474, inf
  %v478 = vsel %vm477, %v474, %v476
  %vm479 = vcmp.eq.f32.partialorder %v474, 0.0
  %v480 = vand.u32 %v474, 2147483648
  %v481 = vsel %vm479, %v480, %v478
  %v482 = vld [vmem:[%s3] sm:$0x3]
  %v483 = vld [vmem:[%s14] sm:$0x1]
  %v485 = vlaneseq
  %v486 = vshrl.u32 %v485, 7
  %v487 = vsub.s32 0, %v486
  %v488 = vrot.slane %v483, %v487
  %v490 = vmul.f32 %v482, %v488
  %v491 = vsel %vm440, %v490, 0.0
  %492 = vadd.xlane.f32.xlu0 %v491
  %v493 = vpop.xlane.xlu0 %492
  %v494 = vld [vmem:[#allocation2] sm:$0x1]
  %v496 = vlaneseq
  %v497 = vshrl.u32 %v496, 7
  %v498 = vsub.s32 0, %v497
  %v499 = vrot.slane %v494, %v498
  %v501 = vadd.f32 %v493, %v499
  %vm502 = vcmask 1024
  %503 = vst.msk [vmem:[%s16] sm:$0x3] %vm502, %v481
  %505 = vrot.lane.b32.xlu0 %v501, 1
  %v506 = vpop.permute.xlu0 %505
  %vm508 = vcmask 9224
  %509 = vst.msk [vmem:[%s16] sm:$0x3] %vm508, %v506
  %vm510 = vcmask 17424
  %511 = vst.msk [vmem:[%s16] sm:$0x3] %vm510, %v469
  // Predicated region
  $region66: #{forward.3} parent=0 // pred_check
    _
  $region67: #{forward.3} parent=0 // pred_check_branch
    %513 = sbr.rel (0) target = $region69
  $region68: #{forward.3} parent=0 // pred_region
    _
  $region69: #{forward.3} parent=0 // pred_fallthru
    _
  // Predicated region
  $region70: #{forward.3} parent=0 // pred_check
    _
  $region71: #{forward.3} parent=0 // pred_check_branch
    %515 = sbr.rel (0) target = $region73
  $region72: #{forward.3} parent=0 // pred_region
    _
  $region73: #{forward.3} parent=0 // pred_fallthru
    _

// kernel: forward.2
$region0: #{forward.2}
  #allocation0 [shape = 'u32[]', space=smem, size = 0x4, offset = 0x4, fixed_abs, tag = 'smem constant byte address 0x4 - core index']
  #allocation1 [shape = 'u32[144,128]{1,0:T(1,128)}', space=vmem, size = 0x12000, scoped, tag = 'internal scratch']
  %s0 = inlined_call_operand.vmem [shape: f32[4,1024], index: 0, kind: input, shape index: {}]
  %s1 = inlined_call_operand.hbm [shape: bf16[1024,512], index: 1, kind: input, shape index: {}]
  %s2 = inlined_call_operand.vmem [shape: f32[1,512], index: 2, kind: input, shape index: {}]
  %s3 = inlined_call_operand.vmem [shape: bf16[512,256], index: 3, kind: input, shape index: {}]
  %s4 = inlined_call_operand.vmem [shape: f32[1,256], index: 4, kind: input, shape index: {}]
  %s5 = inlined_call_operand.vmem [shape: bf16[256,32], index: 5, kind: input, shape index: {}]
  %s6 = inlined_call_operand.vmem [shape: f32[1,32], index: 6, kind: input, shape index: {}]
  %s7 = inlined_call_operand.vmem [shape: f32[4,32], index: 7, kind: output, shape index: {}]
  %s8 = sld [smem:[#allocation0]]
  $region42: #{forward.2} parent=0
    _
  %s10 = ssub.s32 1, %s8
  %s11 = scalar_select 0, %s10, %s8
  $region1: #{forward.2} parent=0
    #allocation2 [shape = 'u8[1048576]{0}', space=vmem, size = 0x100000, scoped, tag = 'input window, operand 1, single buffered']
    #allocation3 [shape = 's32[1]{0}', space=sflag, size = 0x4, scoped, tag = 'scoped memory for forward.2']
    %12 = vsyncpa [#allocation3], 0
    // Predicated region
    $region2: #{forward.2} parent=1 // pred_check
      _
    $region3: #{forward.2} parent=1 // pred_check_branch
      %14 = sbr.rel (0) target = $region5
    $region4: #{forward.2} parent=1 // pred_region
      _
    $region5: #{forward.2} parent=1 // pred_fallthru
      _
    // Predicated region
    $region6: #{forward.2} parent=1 // pred_check
      _
    $region7: #{forward.2} parent=1 // pred_check_branch
      %16 = sbr.rel (0) target = $region9
    $region8: #{forward.2} parent=1 // pred_region
      %s18 = ssub.s32 32768, 32768
      %19 = vsyncadd [#allocation3], %s18
      %s20 = sshll.u32 [#allocation2], 4
      %s21 = int_to_ptr.vmem [resolvable:$true] %s20
      %26 = dma.hbm_to_vmem [thread:$0]  %s1, 32768, %s21, [#allocation3], 256, 256, 16
    $region9: #{forward.2} parent=1 // pred_fallthru
      _
    // Predicated region
    $region10: #{forward.2} parent=1 // pred_check
      _
    $region11: #{forward.2} parent=1 // pred_check_branch
      %28 = sbr.rel (0) target = $region13
    $region12: #{forward.2} parent=1 // pred_region
      _
    $region13: #{forward.2} parent=1 // pred_fallthru
      _
    // Predicated region
    $region14: #{forward.2} parent=1 // pred_check
      _
    $region15: #{forward.2} parent=1 // pred_check_branch
      %30 = sbr.rel (0) target = $region17
    $region16: #{forward.2} parent=1 // pred_region
      _
    $region17: #{forward.2} parent=1 // pred_fallthru
      _
    // Predicated region
    $region18: #{forward.2} parent=1 // pred_check
      _
    $region19: #{forward.2} parent=1 // pred_check_branch
      %32 = sbr.rel (0) target = $region21
    $region20: #{forward.2} parent=1 // pred_region
      _
    $region21: #{forward.2} parent=1 // pred_fallthru
      _
    // Predicated region
    $region22: #{forward.2} parent=1 // pred_check
      _
    $region23: #{forward.2} parent=1 // pred_check_branch
      %34 = sbr.rel (0) target = $region25
    $region24: #{forward.2} parent=1 // pred_region
      _
    $region25: #{forward.2} parent=1 // pred_fallthru
      _
    // Predicated region
    $region26: #{forward.2} parent=1 // pred_check
      _
    $region27: #{forward.2} parent=1 // pred_check_branch
      %36 = sbr.rel (0) target = $region29
    $region28: #{forward.2} parent=1 // pred_region
      _
    $region29: #{forward.2} parent=1 // pred_fallthru
      _
    // Predicated region
    $region30: #{forward.2} parent=1 // pred_check
      _
    $region31: #{forward.2} parent=1 // pred_check_branch
      %38 = sbr.rel (0) target = $region33
    $region32: #{forward.2} parent=1 // pred_region
      %39 = dma.done [#allocation3], 32768
    $region33: #{forward.2} parent=1 // pred_fallthru
      _
    %v41 = vld [vmem:[%s0] sm:$0xff]
    %v42 = vld [vmem:[%s0 + $0x8] sm:$0xff]
    %v43 = vld [vmem:[%s0 + $0x10] sm:$0xff]
    %v44 = vld [vmem:[%s0 + $0x18] sm:$0xff]
    %v49 = vcombine.high %v41, %v41
    %v50 = vcombine.high %v42, %v42
    %v51 = vcombine.high %v43, %v43
    %v52 = vcombine.high %v44, %v44
    %v57 = vpack.c.bf16 %v41, %v41
    %v58 = vpack.c.bf16 %v49, %v49
    %v59 = vpack.c.bf16 %v42, %v42
    %v60 = vpack.c.bf16 %v50, %v50
    %v61 = vpack.c.bf16 %v43, %v43
    %v62 = vpack.c.bf16 %v51, %v51
    %v63 = vpack.c.bf16 %v44, %v44
    %v64 = vpack.c.bf16 %v52, %v52
    %v65 = vld [vmem:[#allocation2] sm:$0xff]
    %v66 = vld [vmem:[#allocation2 + $0x8] sm:$0xff]
    %v67 = vld [vmem:[#allocation2 + $0x10] sm:$0xff]
    %v68 = vld [vmem:[#allocation2 + $0x18] sm:$0xff]
    %v69 = vld [vmem:[#allocation2 + $0x20] sm:$0xff]
    %v70 = vld [vmem:[#allocation2 + $0x28] sm:$0xff]
    %v71 = vld [vmem:[#allocation2 + $0x30] sm:$0xff]
    %v72 = vld [vmem:[#allocation2 + $0x38] sm:$0xff]
    %v73 = vld [vmem:[#allocation2 + $0x40] sm:$0xff]
    %v74 = vld [vmem:[#allocation2 + $0x48] sm:$0xff]
    %v75 = vld [vmem:[#allocation2 + $0x50] sm:$0xff]
    %v76 = vld [vmem:[#allocation2 + $0x58] sm:$0xff]
    %v77 = vld [vmem:[#allocation2 + $0x60] sm:$0xff]
    %v78 = vld [vmem:[#allocation2 + $0x68] sm:$0xff]
    %v79 = vld [vmem:[#allocation2 + $0x70] sm:$0xff]
    %v80 = vld [vmem:[#allocation2 + $0x78] sm:$0xff]
    %v81 = vld [vmem:[#allocation2 + $0x80] sm:$0xff]
    %v82 = vld [vmem:[#allocation2 + $0x88] sm:$0xff]
    %v83 = vld [vmem:[#allocation2 + $0x90] sm:$0xff]
    %v84 = vld [vmem:[#allocation2 + $0x98] sm:$0xff]
    %v85 = vld [vmem:[#allocation2 + $0xa0] sm:$0xff]
    %v86 = vld [vmem:[#allocation2 + $0xa8] sm:$0xff]
    %v87 = vld [vmem:[#allocation2 + $0xb0] sm:$0xff]
    %v88 = vld [vmem:[#allocation2 + $0xb8] sm:$0xff]
    %v89 = vld [vmem:[#allocation2 + $0xc0] sm:$0xff]
    %v90 = vld [vmem:[#allocation2 + $0xc8] sm:$0xff]
    %v91 = vld [vmem:[#allocation2 + $0xd0] sm:$0xff]
    %v92 = vld [vmem:[#allocation2 + $0xd8] sm:$0xff]
    %v93 = vld [vmem:[#allocation2 + $0xe0] sm:$0xff]
    %v94 = vld [vmem:[#allocation2 + $0xe8] sm:$0xff]
    %v95 = vld [vmem:[#allocation2 + $0xf0] sm:$0xff]
    %v96 = vld [vmem:[#allocation2 + $0xf8] sm:$0xff]
    %v97 = vld [vmem:[#allocation2 + $0x100] sm:$0xff]
    %v98 = vld [vmem:[#allocation2 + $0x108] sm:$0xff]
    %v99 = vld [vmem:[#allocation2 + $0x110] sm:$0xff]
    %v100 = vld [vmem:[#allocation2 + $0x118] sm:$0xff]
    %v101 = vld [vmem:[#allocation2 + $0x120] sm:$0xff]
    %v102 = vld [vmem:[#allocation2 + $0x128] sm:$0xff]
    %v103 = vld [vmem:[#allocation2 + $0x130] sm:$0xff]
    %v104 = vld [vmem:[#allocation2 + $0x138] sm:$0xff]
    %v105 = vld [vmem:[#allocation2 + $0x140] sm:$0xff]
    %v106 = vld [vmem:[#allocation2 + $0x148] sm:$0xff]
    %v107 = vld [vmem:[#allocation2 + $0x150] sm:$0xff]
    %v108 = vld [vmem:[#allocation2 + $0x158] sm:$0xff]
    %v109 = vld [vmem:[#allocation2 + $0x160] sm:$0xff]
    %v110 = vld [vmem:[#allocation2 + $0x168] sm:$0xff]
    %v111 = vld [vmem:[#allocation2 + $0x170] sm:$0xff]
    %v112 = vld [vmem:[#allocation2 + $0x178] sm:$0xff]
    %v113 = vld [vmem:[#allocation2 + $0x180] sm:$0xff]
    %v114 = vld [vmem:[#allocation2 + $0x188] sm:$0xff]
    %v115 = vld [vmem:[#allocation2 + $0x190] sm:$0xff]
    %v116 = vld [vmem:[#allocation2 + $0x198] sm:$0xff]
    %v117 = vld [vmem:[#allocation2 + $0x1a0] sm:$0xff]
    %v118 = vld [vmem:[#allocation2 + $0x1a8] sm:$0xff]
    %v119 = vld [vmem:[#allocation2 + $0x1b0] sm:$0xff]
    %v120 = vld [vmem:[#allocation2 + $0x1b8] sm:$0xff]
    %v121 = vld [vmem:[#allocation2 + $0x1c0] sm:$0xff]
    %v122 = vld [vmem:[#allocation2 + $0x1c8] sm:$0xff]
    %v123 = vld [vmem:[#allocation2 + $0x1d0] sm:$0xff]
    %v124 = vld [vmem:[#allocation2 + $0x1d8] sm:$0xff]
    %v125 = vld [vmem:[#allocation2 + $0x1e0] sm:$0xff]
    %v126 = vld [vmem:[#allocation2 + $0x1e8] sm:$0xff]
    %v127 = vld [vmem:[#allocation2 + $0x1f0] sm:$0xff]
    %v128 = vld [vmem:[#allocation2 + $0x1f8] sm:$0xff]
    %v129 = vld [vmem:[#allocation2 + $0x200] sm:$0xff]
    %v130 = vld [vmem:[#allocation2 + $0x208] sm:$0xff]
    %v131 = vld [vmem:[#allocation2 + $0x210] sm:$0xff]
    %v132 = vld [vmem:[#allocation2 + $0x218] sm:$0xff]
    %v133 = vld [vmem:[#allocation2 + $0x220] sm:$0xff]
    %v134 = vld [vmem:[#allocation2 + $0x228] sm:$0xff]
    %v135 = vld [vmem:[#allocation2 + $0x230] sm:$0xff]
    %v136 = vld [vmem:[#allocation2 + $0x238] sm:$0xff]
    %v137 = vld [vmem:[#allocation2 + $0x240] sm:$0xff]
    %v138 = vld [vmem:[#allocation2 + $0x248] sm:$0xff]
    %v139 = vld [vmem:[#allocation2 + $0x250] sm:$0xff]
    %v140 = vld [vmem:[#allocation2 + $0x258] sm:$0xff]
    %v141 = vld [vmem:[#allocation2 + $0x260] sm:$0xff]
    %v142 = vld [vmem:[#allocation2 + $0x268] sm:$0xff]
    %v143 = vld [vmem:[#allocation2 + $0x270] sm:$0xff]
    %v144 = vld [vmem:[#allocation2 + $0x278] sm:$0xff]
    %v145 = vld [vmem:[#allocation2 + $0x280] sm:$0xff]
    %v146 = vld [vmem:[#allocation2 + $0x288] sm:$0xff]
    %v147 = vld [vmem:[#allocation2 + $0x290] sm:$0xff]
    %v148 = vld [vmem:[#allocation2 + $0x298] sm:$0xff]
    %v149 = vld [vmem:[#allocation2 + $0x2a0] sm:$0xff]
    %v150 = vld [vmem:[#allocation2 + $0x2a8] sm:$0xff]
    %v151 = vld [vmem:[#allocation2 + $0x2b0] sm:$0xff]
    %v152 = vld [vmem:[#allocation2 + $0x2b8] sm:$0xff]
    %v153 = vld [vmem:[#allocation2 + $0x2c0] sm:$0xff]
    %v154 = vld [vmem:[#allocation2 + $0x2c8] sm:$0xff]
    %v155 = vld [vmem:[#allocation2 + $0x2d0] sm:$0xff]
    %v156 = vld [vmem:[#allocation2 + $0x2d8] sm:$0xff]
    %v157 = vld [vmem:[#allocation2 + $0x2e0] sm:$0xff]
    %v158 = vld [vmem:[#allocation2 + $0x2e8] sm:$0xff]
    %v159 = vld [vmem:[#allocation2 + $0x2f0] sm:$0xff]
    %v160 = vld [vmem:[#allocation2 + $0x2f8] sm:$0xff]
    %v161 = vld [vmem:[#allocation2 + $0x300] sm:$0xff]
    %v162 = vld [vmem:[#allocation2 + $0x308] sm:$0xff]
    %v163 = vld [vmem:[#allocation2 + $0x310] sm:$0xff]
    %v164 = vld [vmem:[#allocation2 + $0x318] sm:$0xff]
    %v165 = vld [vmem:[#allocation2 + $0x320] sm:$0xff]
    %v166 = vld [vmem:[#allocation2 + $0x328] sm:$0xff]
    %v167 = vld [vmem:[#allocation2 + $0x330] sm:$0xff]
    %v168 = vld [vmem:[#allocation2 + $0x338] sm:$0xff]
    %v169 = vld [vmem:[#allocation2 + $0x340] sm:$0xff]
    %v170 = vld [vmem:[#allocation2 + $0x348] sm:$0xff]
    %v171 = vld [vmem:[#allocation2 + $0x350] sm:$0xff]
    %v172 = vld [vmem:[#allocation2 + $0x358] sm:$0xff]
    %v173 = vld [vmem:[#allocation2 + $0x360] sm:$0xff]
    %v174 = vld [vmem:[#allocation2 + $0x368] sm:$0xff]
    %v175 = vld [vmem:[#allocation2 + $0x370] sm:$0xff]
    %v176 = vld [vmem:[#allocation2 + $0x378] sm:$0xff]
    %v177 = vld [vmem:[#allocation2 + $0x380] sm:$0xff]
    %v178 = vld [vmem:[#allocation2 + $0x388] sm:$0xff]
    %v179 = vld [vmem:[#allocation2 + $0x390] sm:$0xff]
    %v180 = vld [vmem:[#allocation2 + $0x398] sm:$0xff]
    %v181 = vld [vmem:[#allocation2 + $0x3a0] sm:$0xff]
    %v182 = vld [vmem:[#allocation2 + $0x3a8] sm:$0xff]
    %v183 = vld [vmem:[#allocation2 + $0x3b0] sm:$0xff]
    %v184 = vld [vmem:[#allocation2 + $0x3b8] sm:$0xff]
    %v185 = vld [vmem:[#allocation2 + $0x3c0] sm:$0xff]
    %v186 = vld [vmem:[#allocation2 + $0x3c8] sm:$0xff]
    %v187 = vld [vmem:[#allocation2 + $0x3d0] sm:$0xff]
    %v188 = vld [vmem:[#allocation2 + $0x3d8] sm:$0xff]
    %v189 = vld [vmem:[#allocation2 + $0x3e0] sm:$0xff]
    %v190 = vld [vmem:[#allocation2 + $0x3e8] sm:$0xff]
    %v191 = vld [vmem:[#allocation2 + $0x3f0] sm:$0xff]
    %v192 = vld [vmem:[#allocation2 + $0x3f8] sm:$0xff]
    %v193 = vld [vmem:[#allocation2 + $0x400] sm:$0xff]
    %v194 = vld [vmem:[#allocation2 + $0x408] sm:$0xff]
    %v195 = vld [vmem:[#allocation2 + $0x410] sm:$0xff]
    %v196 = vld [vmem:[#allocation2 + $0x418] sm:$0xff]
    %v197 = vld [vmem:[#allocation2 + $0x420] sm:$0xff]
    %v198 = vld [vmem:[#allocation2 + $0x428] sm:$0xff]
    %v199 = vld [vmem:[#allocation2 + $0x430] sm:$0xff]
    %v200 = vld [vmem:[#allocation2 + $0x438] sm:$0xff]
    %v201 = vld [vmem:[#allocation2 + $0x440] sm:$0xff]
    %v202 = vld [vmem:[#allocation2 + $0x448] sm:$0xff]
    %v203 = vld [vmem:[#allocation2 + $0x450] sm:$0xff]
    %v204 = vld [vmem:[#allocation2 + $0x458] sm:$0xff]
    %v205 = vld [vmem:[#allocation2 + $0x460] sm:$0xff]
    %v206 = vld [vmem:[#allocation2 + $0x468] sm:$0xff]
    %v207 = vld [vmem:[#allocation2 + $0x470] sm:$0xff]
    %v208 = vld [vmem:[#allocation2 + $0x478] sm:$0xff]
    %v209 = vld [vmem:[#allocation2 + $0x480] sm:$0xff]
    %v210 = vld [vmem:[#allocation2 + $0x488] sm:$0xff]
    %v211 = vld [vmem:[#allocation2 + $0x490] sm:$0xff]
    %v212 = vld [vmem:[#allocation2 + $0x498] sm:$0xff]
    %v213 = vld [vmem:[#allocation2 + $0x4a0] sm:$0xff]
    %v214 = vld [vmem:[#allocation2 + $0x4a8] sm:$0xff]
    %v215 = vld [vmem:[#allocation2 + $0x4b0] sm:$0xff]
    %v216 = vld [vmem:[#allocation2 + $0x4b8] sm:$0xff]
    %v217 = vld [vmem:[#allocation2 + $0x4c0] sm:$0xff]
    %v218 = vld [vmem:[#allocation2 + $0x4c8] sm:$0xff]
    %v219 = vld [vmem:[#allocation2 + $0x4d0] sm:$0xff]
    %v220 = vld [vmem:[#allocation2 + $0x4d8] sm:$0xff]
    %v221 = vld [vmem:[#allocation2 + $0x4e0] sm:$0xff]
    %v222 = vld [vmem:[#allocation2 + $0x4e8] sm:$0xff]
    %v223 = vld [vmem:[#allocation2 + $0x4f0] sm:$0xff]
    %v224 = vld [vmem:[#allocation2 + $0x4f8] sm:$0xff]
    %v225 = vld [vmem:[#allocation2 + $0x500] sm:$0xff]
    %v226 = vld [vmem:[#allocation2 + $0x508] sm:$0xff]
    %v227 = vld [vmem:[#allocation2 + $0x510] sm:$0xff]
    %v228 = vld [vmem:[#allocation2 + $0x518] sm:$0xff]
    %v229 = vld [vmem:[#allocation2 + $0x520] sm:$0xff]
    %v230 = vld [vmem:[#allocation2 + $0x528] sm:$0xff]
    %v231 = vld [vmem:[#allocation2 + $0x530] sm:$0xff]
    %v232 = vld [vmem:[#allocation2 + $0x538] sm:$0xff]
    %v233 = vld [vmem:[#allocation2 + $0x540] sm:$0xff]
    %v234 = vld [vmem:[#allocation2 + $0x548] sm:$0xff]
    %v235 = vld [vmem:[#allocation2 + $0x550] sm:$0xff]
    %v236 = vld [vmem:[#allocation2 + $0x558] sm:$0xff]
    %v237 = vld [vmem:[#allocation2 + $0x560] sm:$0xff]
    %v238 = vld [vmem:[#allocation2 + $0x568] sm:$0xff]
    %v239 = vld [vmem:[#allocation2 + $0x570] sm:$0xff]
    %v240 = vld [vmem:[#allocation2 + $0x578] sm:$0xff]
    %v241 = vld [vmem:[#allocation2 + $0x580] sm:$0xff]
    %v242 = vld [vmem:[#allocation2 + $0x588] sm:$0xff]
    %v243 = vld [vmem:[#allocation2 + $0x590] sm:$0xff]
    %v244 = vld [vmem:[#allocation2 + $0x598] sm:$0xff]
    %v245 = vld [vmem:[#allocation2 + $0x5a0] sm:$0xff]
    %v246 = vld [vmem:[#allocation2 + $0x5a8] sm:$0xff]
    %v247 = vld [vmem:[#allocation2 + $0x5b0] sm:$0xff]
    %v248 = vld [vmem:[#allocation2 + $0x5b8] sm:$0xff]
    %v249 = vld [vmem:[#allocation2 + $0x5c0] sm:$0xff]
    %v250 = vld [vmem:[#allocation2 + $0x5c8] sm:$0xff]
    %v251 = vld [vmem:[#allocation2 + $0x5d0] sm:$0xff]
    %v252 = vld [vmem:[#allocation2 + $0x5d8] sm:$0xff]
    %v253 = vld [vmem:[#allocation2 + $0x5e0] sm:$0xff]
    %v254 = vld [vmem:[#allocation2 + $0x5e8] sm:$0xff]
    %v255 = vld [vmem:[#allocation2 + $0x5f0] sm:$0xff]
    %v256 = vld [vmem:[#allocation2 + $0x5f8] sm:$0xff]
    %v257 = vld [vmem:[#allocation2 + $0x600] sm:$0xff]
    %v258 = vld [vmem:[#allocation2 + $0x608] sm:$0xff]
    %v259 = vld [vmem:[#allocation2 + $0x610] sm:$0xff]
    %v260 = vld [vmem:[#allocation2 + $0x618] sm:$0xff]
    %v261 = vld [vmem:[#allocation2 + $0x620] sm:$0xff]
    %v262 = vld [vmem:[#allocation2 + $0x628] sm:$0xff]
    %v263 = vld [vmem:[#allocation2 + $0x630] sm:$0xff]
    %v264 = vld [vmem:[#allocation2 + $0x638] sm:$0xff]
    %v265 = vld [vmem:[#allocation2 + $0x640] sm:$0xff]
    %v266 = vld [vmem:[#allocation2 + $0x648] sm:$0xff]
    %v267 = vld [vmem:[#allocation2 + $0x650] sm:$0xff]
    %v268 = vld [vmem:[#allocation2 + $0x658] sm:$0xff]
    %v269 = vld [vmem:[#allocation2 + $0x660] sm:$0xff]
    %v270 = vld [vmem:[#allocation2 + $0x668] sm:$0xff]
    %v271 = vld [vmem:[#allocation2 + $0x670] sm:$0xff]
    %v272 = vld [vmem:[#allocation2 + $0x678] sm:$0xff]
    %v273 = vld [vmem:[#allocation2 + $0x680] sm:$0xff]
    %v274 = vld [vmem:[#allocation2 + $0x688] sm:$0xff]
    %v275 = vld [vmem:[#allocation2 + $0x690] sm:$0xff]
    %v276 = vld [vmem:[#allocation2 + $0x698] sm:$0xff]
    %v277 = vld [vmem:[#allocation2 + $0x6a0] sm:$0xff]
    %v278 = vld [vmem:[#allocation2 + $0x6a8] sm:$0xff]
    %v279 = vld [vmem:[#allocation2 + $0x6b0] sm:$0xff]
    %v280 = vld [vmem:[#allocation2 + $0x6b8] sm:$0xff]
    %v281 = vld [vmem:[#allocation2 + $0x6c0] sm:$0xff]
    %v282 = vld [vmem:[#allocation2 + $0x6c8] sm:$0xff]
    %v283 = vld [vmem:[#allocation2 + $0x6d0] sm:$0xff]
    %v284 = vld [vmem:[#allocation2 + $0x6d8] sm:$0xff]
    %v285 = vld [vmem:[#allocation2 + $0x6e0] sm:$0xff]
    %v286 = vld [vmem:[#allocation2 + $0x6e8] sm:$0xff]
    %v287 = vld [vmem:[#allocation2 + $0x6f0] sm:$0xff]
    %v288 = vld [vmem:[#allocation2 + $0x6f8] sm:$0xff]
    %v289 = vld [vmem:[#allocation2 + $0x700] sm:$0xff]
    %v290 = vld [vmem:[#allocation2 + $0x708] sm:$0xff]
    %v291 = vld [vmem:[#allocation2 + $0x710] sm:$0xff]
    %v292 = vld [vmem:[#allocation2 + $0x718] sm:$0xff]
    %v293 = vld [vmem:[#allocation2 + $0x720] sm:$0xff]
    %v294 = vld [vmem:[#allocation2 + $0x728] sm:$0xff]
    %v295 = vld [vmem:[#allocation2 + $0x730] sm:$0xff]
    %v296 = vld [vmem:[#allocation2 + $0x738] sm:$0xff]
    %v297 = vld [vmem:[#allocation2 + $0x740] sm:$0xff]
    %v298 = vld [vmem:[#allocation2 + $0x748] sm:$0xff]
    %v299 = vld [vmem:[#allocation2 + $0x750] sm:$0xff]
    %v300 = vld [vmem:[#allocation2 + $0x758] sm:$0xff]
    %v301 = vld [vmem:[#allocation2 + $0x760] sm:$0xff]
    %v302 = vld [vmem:[#allocation2 + $0x768] sm:$0xff]
    %v303 = vld [vmem:[#allocation2 + $0x770] sm:$0xff]
    %v304 = vld [vmem:[#allocation2 + $0x778] sm:$0xff]
    %v305 = vld [vmem:[#allocation2 + $0x780] sm:$0xff]
    %v306 = vld [vmem:[#allocation2 + $0x788] sm:$0xff]
    %v307 = vld [vmem:[#allocation2 + $0x790] sm:$0xff]
    %v308 = vld [vmem:[#allocation2 + $0x798] sm:$0xff]
    %v309 = vld [vmem:[#allocation2 + $0x7a0] sm:$0xff]
    %v310 = vld [vmem:[#allocation2 + $0x7a8] sm:$0xff]
    %v311 = vld [vmem:[#allocation2 + $0x7b0] sm:$0xff]
    %v312 = vld [vmem:[#allocation2 + $0x7b8] sm:$0xff]
    %v313 = vld [vmem:[#allocation2 + $0x7c0] sm:$0xff]
    %v314 = vld [vmem:[#allocation2 + $0x7c8] sm:$0xff]
    %v315 = vld [vmem:[#allocation2 + $0x7d0] sm:$0xff]
    %v316 = vld [vmem:[#allocation2 + $0x7d8] sm:$0xff]
    %v317 = vld [vmem:[#allocation2 + $0x7e0] sm:$0xff]
    %v318 = vld [vmem:[#allocation2 + $0x7e8] sm:$0xff]
    %v319 = vld [vmem:[#allocation2 + $0x7f0] sm:$0xff]
    %v320 = vld [vmem:[#allocation2 + $0x7f8] sm:$0xff]
    %v321 = vld [vmem:[%s2] sm:$0xf]
    %v323 = vlaneseq
    %v324 = vshrl.u32 %v323, 7
    %v325 = vsub.s32 0, %v324
    %v326 = vrot.slane %v321, %v325
    %v327 = vlaneseq
    %v328 = vshrl.u32 %v327, 7
    %v329 = vsub.s32 1, %v328
    %v330 = vrot.slane %v321, %v329
    %v331 = vlaneseq
    %v332 = vshrl.u32 %v331, 7
    %v333 = vsub.s32 2, %v332
    %v334 = vrot.slane %v321, %v333
    %v335 = vlaneseq
    %v336 = vshrl.u32 %v335, 7
    %v337 = vsub.s32 3, %v336
    %v338 = vrot.slane %v321, %v337
    %v599 = vunpack.c.l.b16 %v65
    %v600 = vunpack.c.h.b16 %v65
    %v601 = vunpack.c.l.b16 %v66
    %v602 = vunpack.c.h.b16 %v66
    %v603 = vunpack.c.l.b16 %v67
    %v604 = vunpack.c.h.b16 %v67
    %v605 = vunpack.c.l.b16 %v68
    %v606 = vunpack.c.h.b16 %v68
    %v607 = vunpack.c.l.b16 %v69
    %v608 = vunpack.c.h.b16 %v69
    %v609 = vunpack.c.l.b16 %v70
    %v610 = vunpack.c.h.b16 %v70
    %v611 = vunpack.c.l.b16 %v71
    %v612 = vunpack.c.h.b16 %v71
    %v613 = vunpack.c.l.b16 %v72
    %v614 = vunpack.c.h.b16 %v72
    %v615 = vunpack.c.l.b16 %v73
    %v616 = vunpack.c.h.b16 %v73
    %v617 = vunpack.c.l.b16 %v74
    %v618 = vunpack.c.h.b16 %v74
    %v619 = vunpack.c.l.b16 %v75
    %v620 = vunpack.c.h.b16 %v75
    %v621 = vunpack.c.l.b16 %v76
    %v622 = vunpack.c.h.b16 %v76
    %v623 = vunpack.c.l.b16 %v77
    %v624 = vunpack.c.h.b16 %v77
    %v625 = vunpack.c.l.b16 %v78
    %v626 = vunpack.c.h.b16 %v78
    %v627 = vunpack.c.l.b16 %v79
    %v628 = vunpack.c.h.b16 %v79
    %v629 = vunpack.c.l.b16 %v80
    %v630 = vunpack.c.h.b16 %v80
    %v631 = vunpack.c.l.b16 %v81
    %v632 = vunpack.c.h.b16 %v81
    %v633 = vunpack.c.l.b16 %v82
    %v634 = vunpack.c.h.b16 %v82
    %v635 = vunpack.c.l.b16 %v83
    %v636 = vunpack.c.h.b16 %v83
    %v637 = vunpack.c.l.b16 %v84
    %v638 = vunpack.c.h.b16 %v84
    %v639 = vunpack.c.l.b16 %v85
    %v640 = vunpack.c.h.b16 %v85
    %v641 = vunpack.c.l.b16 %v86
    %v642 = vunpack.c.h.b16 %v86
    %v643 = vunpack.c.l.b16 %v87
    %v644 = vunpack.c.h.b16 %v87
    %v645 = vunpack.c.l.b16 %v88
    %v646 = vunpack.c.h.b16 %v88
    %v647 = vunpack.c.l.b16 %v89
    %v648 = vunpack.c.h.b16 %v89
    %v649 = vunpack.c.l.b16 %v90
    %v650 = vunpack.c.h.b16 %v90
    %v651 = vunpack.c.l.b16 %v91
    %v652 = vunpack.c.h.b16 %v91
    %v653 = vunpack.c.l.b16 %v92
    %v654 = vunpack.c.h.b16 %v92
    %v655 = vunpack.c.l.b16 %v93
    %v656 = vunpack.c.h.b16 %v93
    %v657 = vunpack.c.l.b16 %v94
    %v658 = vunpack.c.h.b16 %v94
    %v659 = vunpack.c.l.b16 %v95
    %v660 = vunpack.c.h.b16 %v95
    %v661 = vunpack.c.l.b16 %v96
    %v662 = vunpack.c.h.b16 %v96
    %v663 = vunpack.c.l.b16 %v97
    %v664 = vunpack.c.h.b16 %v97
    %v665 = vunpack.c.l.b16 %v98
    %v666 = vunpack.c.h.b16 %v98
    %v667 = vunpack.c.l.b16 %v99
    %v668 = vunpack.c.h.b16 %v99
    %v669 = vunpack.c.l.b16 %v100
    %v670 = vunpack.c.h.b16 %v100
    %v671 = vunpack.c.l.b16 %v101
    %v672 = vunpack.c.h.b16 %v101
    %v673 = vunpack.c.l.b16 %v102
    %v674 = vunpack.c.h.b16 %v102
    %v675 = vunpack.c.l.b16 %v103
    %v676 = vunpack.c.h.b16 %v103
    %v677 = vunpack.c.l.b16 %v104
    %v678 = vunpack.c.h.b16 %v104
    %v679 = vunpack.c.l.b16 %v105
    %v680 = vunpack.c.h.b16 %v105
    %v681 = vunpack.c.l.b16 %v106
    %v682 = vunpack.c.h.b16 %v106
    %v683 = vunpack.c.l.b16 %v107
    %v684 = vunpack.c.h.b16 %v107
    %v685 = vunpack.c.l.b16 %v108
    %v686 = vunpack.c.h.b16 %v108
    %v687 = vunpack.c.l.b16 %v109
    %v688 = vunpack.c.h.b16 %v109
    %v689 = vunpack.c.l.b16 %v110
    %v690 = vunpack.c.h.b16 %v110
    %v691 = vunpack.c.l.b16 %v111
    %v692 = vunpack.c.h.b16 %v111
    %v693 = vunpack.c.l.b16 %v112
    %v694 = vunpack.c.h.b16 %v112
    %v695 = vunpack.c.l.b16 %v113
    %v696 = vunpack.c.h.b16 %v113
    %v697 = vunpack.c.l.b16 %v114
    %v698 = vunpack.c.h.b16 %v114
    %v699 = vunpack.c.l.b16 %v115
    %v700 = vunpack.c.h.b16 %v115
    %v701 = vunpack.c.l.b16 %v116
    %v702 = vunpack.c.h.b16 %v116
    %v703 = vunpack.c.l.b16 %v117
    %v704 = vunpack.c.h.b16 %v117
    %v705 = vunpack.c.l.b16 %v118
    %v706 = vunpack.c.h.b16 %v118
    %v707 = vunpack.c.l.b16 %v119
    %v708 = vunpack.c.h.b16 %v119
    %v709 = vunpack.c.l.b16 %v120
    %v710 = vunpack.c.h.b16 %v120
    %v711 = vunpack.c.l.b16 %v121
    %v712 = vunpack.c.h.b16 %v121
    %v713 = vunpack.c.l.b16 %v122
    %v714 = vunpack.c.h.b16 %v122
    %v715 = vunpack.c.l.b16 %v123
    %v716 = vunpack.c.h.b16 %v123
    %v717 = vunpack.c.l.b16 %v124
    %v718 = vunpack.c.h.b16 %v124
    %v719 = vunpack.c.l.b16 %v125
    %v720 = vunpack.c.h.b16 %v125
    %v721 = vunpack.c.l.b16 %v126
    %v722 = vunpack.c.h.b16 %v126
    %v723 = vunpack.c.l.b16 %v127
    %v724 = vunpack.c.h.b16 %v127
    %v725 = vunpack.c.l.b16 %v128
    %v726 = vunpack.c.h.b16 %v128
    %v727 = vunpack.c.l.b16 %v129
    %v728 = vunpack.c.h.b16 %v129
    %v729 = vunpack.c.l.b16 %v130
    %v730 = vunpack.c.h.b16 %v130
    %v731 = vunpack.c.l.b16 %v131
    %v732 = vunpack.c.h.b16 %v131
    %v733 = vunpack.c.l.b16 %v132
    %v734 = vunpack.c.h.b16 %v132
    %v735 = vunpack.c.l.b16 %v133
    %v736 = vunpack.c.h.b16 %v133
    %v737 = vunpack.c.l.b16 %v134
    %v738 = vunpack.c.h.b16 %v134
    %v739 = vunpack.c.l.b16 %v135
    %v740 = vunpack.c.h.b16 %v135
    %v741 = vunpack.c.l.b16 %v136
    %v742 = vunpack.c.h.b16 %v136
    %v743 = vunpack.c.l.b16 %v137
    %v744 = vunpack.c.h.b16 %v137
    %v745 = vunpack.c.l.b16 %v138
    %v746 = vunpack.c.h.b16 %v138
    %v747 = vunpack.c.l.b16 %v139
    %v748 = vunpack.c.h.b16 %v139
    %v749 = vunpack.c.l.b16 %v140
    %v750 = vunpack.c.h.b16 %v140
    %v751 = vunpack.c.l.b16 %v141
    %v752 = vunpack.c.h.b16 %v141
    %v753 = vunpack.c.l.b16 %v142
    %v754 = vunpack.c.h.b16 %v142
    %v755 = vunpack.c.l.b16 %v143
    %v756 = vunpack.c.h.b16 %v143
    %v757 = vunpack.c.l.b16 %v144
    %v758 = vunpack.c.h.b16 %v144
    %v759 = vunpack.c.l.b16 %v145
    %v760 = vunpack.c.h.b16 %v145
    %v761 = vunpack.c.l.b16 %v146
    %v762 = vunpack.c.h.b16 %v146
    %v763 = vunpack.c.l.b16 %v147
    %v764 = vunpack.c.h.b16 %v147
    %v765 = vunpack.c.l.b16 %v148
    %v766 = vunpack.c.h.b16 %v148
    %v767 = vunpack.c.l.b16 %v149
    %v768 = vunpack.c.h.b16 %v149
    %v769 = vunpack.c.l.b16 %v150
    %v770 = vunpack.c.h.b16 %v150
    %v771 = vunpack.c.l.b16 %v151
    %v772 = vunpack.c.h.b16 %v151
    %v773 = vunpack.c.l.b16 %v152
    %v774 = vunpack.c.h.b16 %v152
    %v775 = vunpack.c.l.b16 %v153
    %v776 = vunpack.c.h.b16 %v153
    %v777 = vunpack.c.l.b16 %v154
    %v778 = vunpack.c.h.b16 %v154
    %v779 = vunpack.c.l.b16 %v155
    %v780 = vunpack.c.h.b16 %v155
    %v781 = vunpack.c.l.b16 %v156
    %v782 = vunpack.c.h.b16 %v156
    %v783 = vunpack.c.l.b16 %v157
    %v784 = vunpack.c.h.b16 %v157
    %v785 = vunpack.c.l.b16 %v158
    %v786 = vunpack.c.h.b16 %v158
    %v787 = vunpack.c.l.b16 %v159
    %v788 = vunpack.c.h.b16 %v159
    %v789 = vunpack.c.l.b16 %v160
    %v790 = vunpack.c.h.b16 %v160
    %v791 = vunpack.c.l.b16 %v161
    %v792 = vunpack.c.h.b16 %v161
    %v793 = vunpack.c.l.b16 %v162
    %v794 = vunpack.c.h.b16 %v162
    %v795 = vunpack.c.l.b16 %v163
    %v796 = vunpack.c.h.b16 %v163
    %v797 = vunpack.c.l.b16 %v164
    %v798 = vunpack.c.h.b16 %v164
    %v799 = vunpack.c.l.b16 %v165
    %v800 = vunpack.c.h.b16 %v165
    %v801 = vunpack.c.l.b16 %v166
    %v802 = vunpack.c.h.b16 %v166
    %v803 = vunpack.c.l.b16 %v167
    %v804 = vunpack.c.h.b16 %v167
    %v805 = vunpack.c.l.b16 %v168
    %v806 = vunpack.c.h.b16 %v168
    %v807 = vunpack.c.l.b16 %v169
    %v808 = vunpack.c.h.b16 %v169
    %v809 = vunpack.c.l.b16 %v170
    %v810 = vunpack.c.h.b16 %v170
    %v811 = vunpack.c.l.b16 %v171
    %v812 = vunpack.c.h.b16 %v171
    %v813 = vunpack.c.l.b16 %v172
    %v814 = vunpack.c.h.b16 %v172
    %v815 = vunpack.c.l.b16 %v173
    %v816 = vunpack.c.h.b16 %v173
    %v817 = vunpack.c.l.b16 %v174
    %v818 = vunpack.c.h.b16 %v174
    %v819 = vunpack.c.l.b16 %v175
    %v820 = vunpack.c.h.b16 %v175
    %v821 = vunpack.c.l.b16 %v176
    %v822 = vunpack.c.h.b16 %v176
    %v823 = vunpack.c.l.b16 %v177
    %v824 = vunpack.c.h.b16 %v177
    %v825 = vunpack.c.l.b16 %v178
    %v826 = vunpack.c.h.b16 %v178
    %v827 = vunpack.c.l.b16 %v179
    %v828 = vunpack.c.h.b16 %v179
    %v829 = vunpack.c.l.b16 %v180
    %v830 = vunpack.c.h.b16 %v180
    %v831 = vunpack.c.l.b16 %v181
    %v832 = vunpack.c.h.b16 %v181
    %v833 = vunpack.c.l.b16 %v182
    %v834 = vunpack.c.h.b16 %v182
    %v835 = vunpack.c.l.b16 %v183
    %v836 = vunpack.c.h.b16 %v183
    %v837 = vunpack.c.l.b16 %v184
    %v838 = vunpack.c.h.b16 %v184
    %v839 = vunpack.c.l.b16 %v185
    %v840 = vunpack.c.h.b16 %v185
    %v841 = vunpack.c.l.b16 %v186
    %v842 = vunpack.c.h.b16 %v186
    %v843 = vunpack.c.l.b16 %v187
    %v844 = vunpack.c.h.b16 %v187
    %v845 = vunpack.c.l.b16 %v188
    %v846 = vunpack.c.h.b16 %v188
    %v847 = vunpack.c.l.b16 %v189
    %v848 = vunpack.c.h.b16 %v189
    %v849 = vunpack.c.l.b16 %v190
    %v850 = vunpack.c.h.b16 %v190
    %v851 = vunpack.c.l.b16 %v191
    %v852 = vunpack.c.h.b16 %v191
    %v853 = vunpack.c.l.b16 %v192
    %v854 = vunpack.c.h.b16 %v192
    %v855 = vunpack.c.l.b16 %v193
    %v856 = vunpack.c.h.b16 %v193
    %v857 = vunpack.c.l.b16 %v194
    %v858 = vunpack.c.h.b16 %v194
    %v859 = vunpack.c.l.b16 %v195
    %v860 = vunpack.c.h.b16 %v195
    %v861 = vunpack.c.l.b16 %v196
    %v862 = vunpack.c.h.b16 %v196
    %v863 = vunpack.c.l.b16 %v197
    %v864 = vunpack.c.h.b16 %v197
    %v865 = vunpack.c.l.b16 %v198
    %v866 = vunpack.c.h.b16 %v198
    %v867 = vunpack.c.l.b16 %v199
    %v868 = vunpack.c.h.b16 %v199
    %v869 = vunpack.c.l.b16 %v200
    %v870 = vunpack.c.h.b16 %v200
    %v871 = vunpack.c.l.b16 %v201
    %v872 = vunpack.c.h.b16 %v201
    %v873 = vunpack.c.l.b16 %v202
    %v874 = vunpack.c.h.b16 %v202
    %v875 = vunpack.c.l.b16 %v203
    %v876 = vunpack.c.h.b16 %v203
    %v877 = vunpack.c.l.b16 %v204
    %v878 = vunpack.c.h.b16 %v204
    %v879 = vunpack.c.l.b16 %v205
    %v880 = vunpack.c.h.b16 %v205
    %v881 = vunpack.c.l.b16 %v206
    %v882 = vunpack.c.h.b16 %v206
    %v883 = vunpack.c.l.b16 %v207
    %v884 = vunpack.c.h.b16 %v207
    %v885 = vunpack.c.l.b16 %v208
    %v886 = vunpack.c.h.b16 %v208
    %v887 = vunpack.c.l.b16 %v209
    %v888 = vunpack.c.h.b16 %v209
    %v889 = vunpack.c.l.b16 %v210
    %v890 = vunpack.c.h.b16 %v210
    %v891 = vunpack.c.l.b16 %v211
    %v892 = vunpack.c.h.b16 %v211
    %v893 = vunpack.c.l.b16 %v212
    %v894 = vunpack.c.h.b16 %v212
    %v895 = vunpack.c.l.b16 %v213
    %v896 = vunpack.c.h.b16 %v213
    %v897 = vunpack.c.l.b16 %v214
    %v898 = vunpack.c.h.b16 %v214
    %v899 = vunpack.c.l.b16 %v215
    %v900 = vunpack.c.h.b16 %v215
    %v901 = vunpack.c.l.b16 %v216
    %v902 = vunpack.c.h.b16 %v216
    %v903 = vunpack.c.l.b16 %v217
    %v904 = vunpack.c.h.b16 %v217
    %v905 = vunpack.c.l.b16 %v218
    %v906 = vunpack.c.h.b16 %v218
    %v907 = vunpack.c.l.b16 %v219
    %v908 = vunpack.c.h.b16 %v219
    %v909 = vunpack.c.l.b16 %v220
    %v910 = vunpack.c.h.b16 %v220
    %v911 = vunpack.c.l.b16 %v221
    %v912 = vunpack.c.h.b16 %v221
    %v913 = vunpack.c.l.b16 %v222
    %v914 = vunpack.c.h.b16 %v222
    %v915 = vunpack.c.l.b16 %v223
    %v916 = vunpack.c.h.b16 %v223
    %v917 = vunpack.c.l.b16 %v224
    %v918 = vunpack.c.h.b16 %v224
    %v919 = vunpack.c.l.b16 %v225
    %v920 = vunpack.c.h.b16 %v225
    %v921 = vunpack.c.l.b16 %v226
    %v922 = vunpack.c.h.b16 %v226
    %v923 = vunpack.c.l.b16 %v227
    %v924 = vunpack.c.h.b16 %v227
    %v925 = vunpack.c.l.b16 %v228
    %v926 = vunpack.c.h.b16 %v228
    %v927 = vunpack.c.l.b16 %v229
    %v928 = vunpack.c.h.b16 %v229
    %v929 = vunpack.c.l.b16 %v230
    %v930 = vunpack.c.h.b16 %v230
    %v931 = vunpack.c.l.b16 %v231
    %v932 = vunpack.c.h.b16 %v231
    %v933 = vunpack.c.l.b16 %v232
    %v934 = vunpack.c.h.b16 %v232
    %v935 = vunpack.c.l.b16 %v233
    %v936 = vunpack.c.h.b16 %v233
    %v937 = vunpack.c.l.b16 %v234
    %v938 = vunpack.c.h.b16 %v234
    %v939 = vunpack.c.l.b16 %v235
    %v940 = vunpack.c.h.b16 %v235
    %v941 = vunpack.c.l.b16 %v236
    %v942 = vunpack.c.h.b16 %v236
    %v943 = vunpack.c.l.b16 %v237
    %v944 = vunpack.c.h.b16 %v237
    %v945 = vunpack.c.l.b16 %v238
    %v946 = vunpack.c.h.b16 %v238
    %v947 = vunpack.c.l.b16 %v239
    %v948 = vunpack.c.h.b16 %v239
    %v949 = vunpack.c.l.b16 %v240
    %v950 = vunpack.c.h.b16 %v240
    %v951 = vunpack.c.l.b16 %v241
    %v952 = vunpack.c.h.b16 %v241
    %v953 = vunpack.c.l.b16 %v242
    %v954 = vunpack.c.h.b16 %v242
    %v955 = vunpack.c.l.b16 %v243
    %v956 = vunpack.c.h.b16 %v243
    %v957 = vunpack.c.l.b16 %v244
    %v958 = vunpack.c.h.b16 %v244
    %v959 = vunpack.c.l.b16 %v245
    %v960 = vunpack.c.h.b16 %v245
    %v961 = vunpack.c.l.b16 %v246
    %v962 = vunpack.c.h.b16 %v246
    %v963 = vunpack.c.l.b16 %v247
    %v964 = vunpack.c.h.b16 %v247
    %v965 = vunpack.c.l.b16 %v248
    %v966 = vunpack.c.h.b16 %v248
    %v967 = vunpack.c.l.b16 %v249
    %v968 = vunpack.c.h.b16 %v249
    %v969 = vunpack.c.l.b16 %v250
    %v970 = vunpack.c.h.b16 %v250
    %v971 = vunpack.c.l.b16 %v251
    %v972 = vunpack.c.h.b16 %v251
    %v973 = vunpack.c.l.b16 %v252
    %v974 = vunpack.c.h.b16 %v252
    %v975 = vunpack.c.l.b16 %v253
    %v976 = vunpack.c.h.b16 %v253
    %v977 = vunpack.c.l.b16 %v254
    %v978 = vunpack.c.h.b16 %v254
    %v979 = vunpack.c.l.b16 %v255
    %v980 = vunpack.c.h.b16 %v255
    %v981 = vunpack.c.l.b16 %v256
    %v982 = vunpack.c.h.b16 %v256
    %v983 = vunpack.c.l.b16 %v257
    %v984 = vunpack.c.h.b16 %v257
    %v985 = vunpack.c.l.b16 %v258
    %v986 = vunpack.c.h.b16 %v258
    %v987 = vunpack.c.l.b16 %v259
    %v988 = vunpack.c.h.b16 %v259
    %v989 = vunpack.c.l.b16 %v260
    %v990 = vunpack.c.h.b16 %v260
    %v991 = vunpack.c.l.b16 %v261
    %v992 = vunpack.c.h.b16 %v261
    %v993 = vunpack.c.l.b16 %v262
    %v994 = vunpack.c.h.b16 %v262
    %v995 = vunpack.c.l.b16 %v263
    %v996 = vunpack.c.h.b16 %v263
    %v997 = vunpack.c.l.b16 %v264
    %v998 = vunpack.c.h.b16 %v264
    %v999 = vunpack.c.l.b16 %v265
    %v1000 = vunpack.c.h.b16 %v265
    %v1001 = vunpack.c.l.b16 %v266
    %v1002 = vunpack.c.h.b16 %v266
    %v1003 = vunpack.c.l.b16 %v267
    %v1004 = vunpack.c.h.b16 %v267
    %v1005 = vunpack.c.l.b16 %v268
    %v1006 = vunpack.c.h.b16 %v268
    %v1007 = vunpack.c.l.b16 %v269
    %v1008 = vunpack.c.h.b16 %v269
    %v1009 = vunpack.c.l.b16 %v270
    %v1010 = vunpack.c.h.b16 %v270
    %v1011 = vunpack.c.l.b16 %v271
    %v1012 = vunpack.c.h.b16 %v271
    %v1013 = vunpack.c.l.b16 %v272
    %v1014 = vunpack.c.h.b16 %v272
    %v1015 = vunpack.c.l.b16 %v273
    %v1016 = vunpack.c.h.b16 %v273
    %v1017 = vunpack.c.l.b16 %v274
    %v1018 = vunpack.c.h.b16 %v274
    %v1019 = vunpack.c.l.b16 %v275
    %v1020 = vunpack.c.h.b16 %v275
    %v1021 = vunpack.c.l.b16 %v276
    %v1022 = vunpack.c.h.b16 %v276
    %v1023 = vunpack.c.l.b16 %v277
    %v1024 = vunpack.c.h.b16 %v277
    %v1025 = vunpack.c.l.b16 %v278
    %v1026 = vunpack.c.h.b16 %v278
    %v1027 = vunpack.c.l.b16 %v279
    %v1028 = vunpack.c.h.b16 %v279
    %v1029 = vunpack.c.l.b16 %v280
    %v1030 = vunpack.c.h.b16 %v280
    %v1031 = vunpack.c.l.b16 %v281
    %v1032 = vunpack.c.h.b16 %v281
    %v1033 = vunpack.c.l.b16 %v282
    %v1034 = vunpack.c.h.b16 %v282
    %v1035 = vunpack.c.l.b16 %v283
    %v1036 = vunpack.c.h.b16 %v283
    %v1037 = vunpack.c.l.b16 %v284
    %v1038 = vunpack.c.h.b16 %v284
    %v1039 = vunpack.c.l.b16 %v285
    %v1040 = vunpack.c.h.b16 %v285
    %v1041 = vunpack.c.l.b16 %v286
    %v1042 = vunpack.c.h.b16 %v286
    %v1043 = vunpack.c.l.b16 %v287
    %v1044 = vunpack.c.h.b16 %v287
    %v1045 = vunpack.c.l.b16 %v288
    %v1046 = vunpack.c.h.b16 %v288
    %v1047 = vunpack.c.l.b16 %v289
    %v1048 = vunpack.c.h.b16 %v289
    %v1049 = vunpack.c.l.b16 %v290
    %v1050 = vunpack.c.h.b16 %v290
    %v1051 = vunpack.c.l.b16 %v291
    %v1052 = vunpack.c.h.b16 %v291
    %v1053 = vunpack.c.l.b16 %v292
    %v1054 = vunpack.c.h.b16 %v292
    %v1055 = vunpack.c.l.b16 %v293
    %v1056 = vunpack.c.h.b16 %v293
    %v1057 = vunpack.c.l.b16 %v294
    %v1058 = vunpack.c.h.b16 %v294
    %v1059 = vunpack.c.l.b16 %v295
    %v1060 = vunpack.c.h.b16 %v295
    %v1061 = vunpack.c.l.b16 %v296
    %v1062 = vunpack.c.h.b16 %v296
    %v1063 = vunpack.c.l.b16 %v297
    %v1064 = vunpack.c.h.b16 %v297
    %v1065 = vunpack.c.l.b16 %v298
    %v1066 = vunpack.c.h.b16 %v298
    %v1067 = vunpack.c.l.b16 %v299
    %v1068 = vunpack.c.h.b16 %v299
    %v1069 = vunpack.c.l.b16 %v300
    %v1070 = vunpack.c.h.b16 %v300
    %v1071 = vunpack.c.l.b16 %v301
    %v1072 = vunpack.c.h.b16 %v301
    %v1073 = vunpack.c.l.b16 %v302
    %v1074 = vunpack.c.h.b16 %v302
    %v1075 = vunpack.c.l.b16 %v303
    %v1076 = vunpack.c.h.b16 %v303
    %v1077 = vunpack.c.l.b16 %v304
    %v1078 = vunpack.c.h.b16 %v304
    %v1079 = vunpack.c.l.b16 %v305
    %v1080 = vunpack.c.h.b16 %v305
    %v1081 = vunpack.c.l.b16 %v306
    %v1082 = vunpack.c.h.b16 %v306
    %v1083 = vunpack.c.l.b16 %v307
    %v1084 = vunpack.c.h.b16 %v307
    %v1085 = vunpack.c.l.b16 %v308
    %v1086 = vunpack.c.h.b16 %v308
    %v1087 = vunpack.c.l.b16 %v309
    %v1088 = vunpack.c.h.b16 %v309
    %v1089 = vunpack.c.l.b16 %v310
    %v1090 = vunpack.c.h.b16 %v310
    %v1091 = vunpack.c.l.b16 %v311
    %v1092 = vunpack.c.h.b16 %v311
    %v1093 = vunpack.c.l.b16 %v312
    %v1094 = vunpack.c.h.b16 %v312
    %v1095 = vunpack.c.l.b16 %v313
    %v1096 = vunpack.c.h.b16 %v313
    %v1097 = vunpack.c.l.b16 %v314
    %v1098 = vunpack.c.h.b16 %v314
    %v1099 = vunpack.c.l.b16 %v315
    %v1100 = vunpack.c.h.b16 %v315
    %v1101 = vunpack.c.l.b16 %v316
    %v1102 = vunpack.c.h.b16 %v316
    %v1103 = vunpack.c.l.b16 %v317
    %v1104 = vunpack.c.h.b16 %v317
    %v1105 = vunpack.c.l.b16 %v318
    %v1106 = vunpack.c.h.b16 %v318
    %v1107 = vunpack.c.l.b16 %v319
    %v1108 = vunpack.c.h.b16 %v319
    %v1109 = vunpack.c.l.b16 %v320
    %v1110 = vunpack.c.h.b16 %v320
    %v1111 = vpack.c.b16 %v603, %v599
    %v1112 = vpack.c.b16 %v604, %v600
    %v1113 = vpack.c.b16 %v605, %v601
    %v1114 = vpack.c.b16 %v606, %v602
    %v1115 = vpack.c.b16 %v611, %v607
    %v1116 = vpack.c.b16 %v612, %v608
    %v1117 = vpack.c.b16 %v613, %v609
    %v1118 = vpack.c.b16 %v614, %v610
    %v1119 = vpack.c.b16 %v619, %v615
    %v1120 = vpack.c.b16 %v620, %v616
    %v1121 = vpack.c.b16 %v621, %v617
    %v1122 = vpack.c.b16 %v622, %v618
    %v1123 = vpack.c.b16 %v627, %v623
    %v1124 = vpack.c.b16 %v628, %v624
    %v1125 = vpack.c.b16 %v629, %v625
    %v1126 = vpack.c.b16 %v630, %v626
    %v1127 = vpack.c.b16 %v635, %v631
    %v1128 = vpack.c.b16 %v636, %v632
    %v1129 = vpack.c.b16 %v637, %v633
    %v1130 = vpack.c.b16 %v638, %v634
    %v1131 = vpack.c.b16 %v643, %v639
    %v1132 = vpack.c.b16 %v644, %v640
    %v1133 = vpack.c.b16 %v645, %v641
    %v1134 = vpack.c.b16 %v646, %v642
    %v1135 = vpack.c.b16 %v651, %v647
    %v1136 = vpack.c.b16 %v652, %v648
    %v1137 = vpack.c.b16 %v653, %v649
    %v1138 = vpack.c.b16 %v654, %v650
    %v1139 = vpack.c.b16 %v659, %v655
    %v1140 = vpack.c.b16 %v660, %v656
    %v1141 = vpack.c.b16 %v661, %v657
    %v1142 = vpack.c.b16 %v662, %v658
    %v1143 = vpack.c.b16 %v667, %v663
    %v1144 = vpack.c.b16 %v668, %v664
    %v1145 = vpack.c.b16 %v669, %v665
    %v1146 = vpack.c.b16 %v670, %v666
    %v1147 = vpack.c.b16 %v675, %v671
    %v1148 = vpack.c.b16 %v676, %v672
    %v1149 = vpack.c.b16 %v677, %v673
    %v1150 = vpack.c.b16 %v678, %v674
    %v1151 = vpack.c.b16 %v683, %v679
    %v1152 = vpack.c.b16 %v684, %v680
    %v1153 = vpack.c.b16 %v685, %v681
    %v1154 = vpack.c.b16 %v686, %v682
    %v1155 = vpack.c.b16 %v691, %v687
    %v1156 = vpack.c.b16 %v692, %v688
    %v1157 = vpack.c.b16 %v693, %v689
    %v1158 = vpack.c.b16 %v694, %v690
    %v1159 = vpack.c.b16 %v699, %v695
    %v1160 = vpack.c.b16 %v700, %v696
    %v1161 = vpack.c.b16 %v701, %v697
    %v1162 = vpack.c.b16 %v702, %v698
    %v1163 = vpack.c.b16 %v707, %v703
    %v1164 = vpack.c.b16 %v708, %v704
    %v1165 = vpack.c.b16 %v709, %v705
    %v1166 = vpack.c.b16 %v710, %v706
    %v1167 = vpack.c.b16 %v715, %v711
    %v1168 = vpack.c.b16 %v716, %v712
    %v1169 = vpack.c.b16 %v717, %v713
    %v1170 = vpack.c.b16 %v718, %v714
    %v1171 = vpack.c.b16 %v723, %v719
    %v1172 = vpack.c.b16 %v724, %v720
    %v1173 = vpack.c.b16 %v725, %v721
    %v1174 = vpack.c.b16 %v726, %v722
    %v1175 = vpack.c.b16 %v731, %v727
    %v1176 = vpack.c.b16 %v732, %v728
    %v1177 = vpack.c.b16 %v733, %v729
    %v1178 = vpack.c.b16 %v734, %v730
    %v1179 = vpack.c.b16 %v739, %v735
    %v1180 = vpack.c.b16 %v740, %v736
    %v1181 = vpack.c.b16 %v741, %v737
    %v1182 = vpack.c.b16 %v742, %v738
    %v1183 = vpack.c.b16 %v747, %v743
    %v1184 = vpack.c.b16 %v748, %v744
    %v1185 = vpack.c.b16 %v749, %v745
    %v1186 = vpack.c.b16 %v750, %v746
    %v1187 = vpack.c.b16 %v755, %v751
    %v1188 = vpack.c.b16 %v756, %v752
    %v1189 = vpack.c.b16 %v757, %v753
    %v1190 = vpack.c.b16 %v758, %v754
    %v1191 = vpack.c.b16 %v763, %v759
    %v1192 = vpack.c.b16 %v764, %v760
    %v1193 = vpack.c.b16 %v765, %v761
    %v1194 = vpack.c.b16 %v766, %v762
    %v1195 = vpack.c.b16 %v771, %v767
    %v1196 = vpack.c.b16 %v772, %v768
    %v1197 = vpack.c.b16 %v773, %v769
    %v1198 = vpack.c.b16 %v774, %v770
    %v1199 = vpack.c.b16 %v779, %v775
    %v1200 = vpack.c.b16 %v780, %v776
    %v1201 = vpack.c.b16 %v781, %v777
    %v1202 = vpack.c.b16 %v782, %v778
    %v1203 = vpack.c.b16 %v787, %v783
    %v1204 = vpack.c.b16 %v788, %v784
    %v1205 = vpack.c.b16 %v789, %v785
    %v1206 = vpack.c.b16 %v790, %v786
    %v1207 = vpack.c.b16 %v795, %v791
    %v1208 = vpack.c.b16 %v796, %v792
    %v1209 = vpack.c.b16 %v797, %v793
    %v1210 = vpack.c.b16 %v798, %v794
    %v1211 = vpack.c.b16 %v803, %v799
    %v1212 = vpack.c.b16 %v804, %v800
    %v1213 = vpack.c.b16 %v805, %v801
    %v1214 = vpack.c.b16 %v806, %v802
    %v1215 = vpack.c.b16 %v811, %v807
    %v1216 = vpack.c.b16 %v812, %v808
    %v1217 = vpack.c.b16 %v813, %v809
    %v1218 = vpack.c.b16 %v814, %v810
    %v1219 = vpack.c.b16 %v819, %v815
    %v1220 = vpack.c.b16 %v820, %v816
    %v1221 = vpack.c.b16 %v821, %v817
    %v1222 = vpack.c.b16 %v822, %v818
    %v1223 = vpack.c.b16 %v827, %v823
    %v1224 = vpack.c.b16 %v828, %v824
    %v1225 = vpack.c.b16 %v829, %v825
    %v1226 = vpack.c.b16 %v830, %v826
    %v1227 = vpack.c.b16 %v835, %v831
    %v1228 = vpack.c.b16 %v836, %v832
    %v1229 = vpack.c.b16 %v837, %v833
    %v1230 = vpack.c.b16 %v838, %v834
    %v1231 = vpack.c.b16 %v843, %v839
    %v1232 = vpack.c.b16 %v844, %v840
    %v1233 = vpack.c.b16 %v845, %v841
    %v1234 = vpack.c.b16 %v846, %v842
    %v1235 = vpack.c.b16 %v851, %v847
    %v1236 = vpack.c.b16 %v852, %v848
    %v1237 = vpack.c.b16 %v853, %v849
    %v1238 = vpack.c.b16 %v854, %v850
    %v1239 = vpack.c.b16 %v859, %v855
    %v1240 = vpack.c.b16 %v860, %v856
    %v1241 = vpack.c.b16 %v861, %v857
    %v1242 = vpack.c.b16 %v862, %v858
    %v1243 = vpack.c.b16 %v867, %v863
    %v1244 = vpack.c.b16 %v868, %v864
    %v1245 = vpack.c.b16 %v869, %v865
    %v1246 = vpack.c.b16 %v870, %v866
    %v1247 = vpack.c.b16 %v875, %v871
    %v1248 = vpack.c.b16 %v876, %v872
    %v1249 = vpack.c.b16 %v877, %v873
    %v1250 = vpack.c.b16 %v878, %v874
    %v1251 = vpack.c.b16 %v883, %v879
    %v1252 = vpack.c.b16 %v884, %v880
    %v1253 = vpack.c.b16 %v885, %v881
    %v1254 = vpack.c.b16 %v886, %v882
    %v1255 = vpack.c.b16 %v891, %v887
    %v1256 = vpack.c.b16 %v892, %v888
    %v1257 = vpack.c.b16 %v893, %v889
    %v1258 = vpack.c.b16 %v894, %v890
    %v1259 = vpack.c.b16 %v899, %v895
    %v1260 = vpack.c.b16 %v900, %v896
    %v1261 = vpack.c.b16 %v901, %v897
    %v1262 = vpack.c.b16 %v902, %v898
    %v1263 = vpack.c.b16 %v907, %v903
    %v1264 = vpack.c.b16 %v908, %v904
    %v1265 = vpack.c.b16 %v909, %v905
    %v1266 = vpack.c.b16 %v910, %v906
    %v1267 = vpack.c.b16 %v915, %v911
    %v1268 = vpack.c.b16 %v916, %v912
    %v1269 = vpack.c.b16 %v917, %v913
    %v1270 = vpack.c.b16 %v918, %v914
    %v1271 = vpack.c.b16 %v923, %v919
    %v1272 = vpack.c.b16 %v924, %v920
    %v1273 = vpack.c.b16 %v925, %v921
    %v1274 = vpack.c.b16 %v926, %v922
    %v1275 = vpack.c.b16 %v931, %v927
    %v1276 = vpack.c.b16 %v932, %v928
    %v1277 = vpack.c.b16 %v933, %v929
    %v1278 = vpack.c.b16 %v934, %v930
    %v1279 = vpack.c.b16 %v939, %v935
    %v1280 = vpack.c.b16 %v940, %v936
    %v1281 = vpack.c.b16 %v941, %v937
    %v1282 = vpack.c.b16 %v942, %v938
    %v1283 = vpack.c.b16 %v947, %v943
    %v1284 = vpack.c.b16 %v948, %v944
    %v1285 = vpack.c.b16 %v949, %v945
    %v1286 = vpack.c.b16 %v950, %v946
    %v1287 = vpack.c.b16 %v955, %v951
    %v1288 = vpack.c.b16 %v956, %v952
    %v1289 = vpack.c.b16 %v957, %v953
    %v1290 = vpack.c.b16 %v958, %v954
    %v1291 = vpack.c.b16 %v963, %v959
    %v1292 = vpack.c.b16 %v964, %v960
    %v1293 = vpack.c.b16 %v965, %v961
    %v1294 = vpack.c.b16 %v966, %v962
    %v1295 = vpack.c.b16 %v971, %v967
    %v1296 = vpack.c.b16 %v972, %v968
    %v1297 = vpack.c.b16 %v973, %v969
    %v1298 = vpack.c.b16 %v974, %v970
    %v1299 = vpack.c.b16 %v979, %v975
    %v1300 = vpack.c.b16 %v980, %v976
    %v1301 = vpack.c.b16 %v981, %v977
    %v1302 = vpack.c.b16 %v982, %v978
    %v1303 = vpack.c.b16 %v987, %v983
    %v1304 = vpack.c.b16 %v988, %v984
    %v1305 = vpack.c.b16 %v989, %v985
    %v1306 = vpack.c.b16 %v990, %v986
    %v1307 = vpack.c.b16 %v995, %v991
    %v1308 = vpack.c.b16 %v996, %v992
    %v1309 = vpack.c.b16 %v997, %v993
    %v1310 = vpack.c.b16 %v998, %v994
    %v1311 = vpack.c.b16 %v1003, %v999
    %v1312 = vpack.c.b16 %v1004, %v1000
    %v1313 = vpack.c.b16 %v1005, %v1001
    %v1314 = vpack.c.b16 %v1006, %v1002
    %v1315 = vpack.c.b16 %v1011, %v1007
    %v1316 = vpack.c.b16 %v1012, %v1008
    %v1317 = vpack.c.b16 %v1013, %v1009
    %v1318 = vpack.c.b16 %v1014, %v1010
    %v1319 = vpack.c.b16 %v1019, %v1015
    %v1320 = vpack.c.b16 %v1020, %v1016
    %v1321 = vpack.c.b16 %v1021, %v1017
    %v1322 = vpack.c.b16 %v1022, %v1018
    %v1323 = vpack.c.b16 %v1027, %v1023
    %v1324 = vpack.c.b16 %v1028, %v1024
    %v1325 = vpack.c.b16 %v1029, %v1025
    %v1326 = vpack.c.b16 %v1030, %v1026
    %v1327 = vpack.c.b16 %v1035, %v1031
    %v1328 = vpack.c.b16 %v1036, %v1032
    %v1329 = vpack.c.b16 %v1037, %v1033
    %v1330 = vpack.c.b16 %v1038, %v1034
    %v1331 = vpack.c.b16 %v1043, %v1039
    %v1332 = vpack.c.b16 %v1044, %v1040
    %v1333 = vpack.c.b16 %v1045, %v1041
    %v1334 = vpack.c.b16 %v1046, %v1042
    %v1335 = vpack.c.b16 %v1051, %v1047
    %v1336 = vpack.c.b16 %v1052, %v1048
    %v1337 = vpack.c.b16 %v1053, %v1049
    %v1338 = vpack.c.b16 %v1054, %v1050
    %v1339 = vpack.c.b16 %v1059, %v1055
    %v1340 = vpack.c.b16 %v1060, %v1056
    %v1341 = vpack.c.b16 %v1061, %v1057
    %v1342 = vpack.c.b16 %v1062, %v1058
    %v1343 = vpack.c.b16 %v1067, %v1063
    %v1344 = vpack.c.b16 %v1068, %v1064
    %v1345 = vpack.c.b16 %v1069, %v1065
    %v1346 = vpack.c.b16 %v1070, %v1066
    %v1347 = vpack.c.b16 %v1075, %v1071
    %v1348 = vpack.c.b16 %v1076, %v1072
    %v1349 = vpack.c.b16 %v1077, %v1073
    %v1350 = vpack.c.b16 %v1078, %v1074
    %v1351 = vpack.c.b16 %v1083, %v1079
    %v1352 = vpack.c.b16 %v1084, %v1080
    %v1353 = vpack.c.b16 %v1085, %v1081
    %v1354 = vpack.c.b16 %v1086, %v1082
    %v1355 = vpack.c.b16 %v1091, %v1087
    %v1356 = vpack.c.b16 %v1092, %v1088
    %v1357 = vpack.c.b16 %v1093, %v1089
    %v1358 = vpack.c.b16 %v1094, %v1090
    %v1359 = vpack.c.b16 %v1099, %v1095
    %v1360 = vpack.c.b16 %v1100, %v1096
    %v1361 = vpack.c.b16 %v1101, %v1097
    %v1362 = vpack.c.b16 %v1102, %v1098
    %v1363 = vpack.c.b16 %v1107, %v1103
    %v1364 = vpack.c.b16 %v1108, %v1104
    %v1365 = vpack.c.b16 %v1109, %v1105
    %v1366 = vpack.c.b16 %v1110, %v1106
    %1623 = vmatprep.subr.bf16.mxu0 %v1140
    %1624 = vmatpush1.bf16.msra.mxu0 %v1139
    %1625 = vmatprep.subr.bf16.mxu0 %v1136
    %1626 = vmatpush1.bf16.msra.mxu0 %v1135
    %1627 = vmatprep.subr.bf16.mxu0 %v1132
    %1628 = vmatpush1.bf16.msra.mxu0 %v1131
    %1629 = vmatprep.subr.bf16.mxu0 %v1128
    %1630 = vmatpush1.bf16.msra.mxu0 %v1127
    %1631 = vmatprep.subr.bf16.mxu0 %v1124
    %1632 = vmatpush1.bf16.msra.mxu0 %v1123
    %1633 = vmatprep.subr.bf16.mxu0 %v1120
    %1634 = vmatpush1.bf16.msra.mxu0 %v1119
    %1635 = vmatprep.subr.bf16.mxu0 %v1116
    %1636 = vmatpush1.bf16.msra.mxu0 %v1115
    %1637 = vmatprep.subr.bf16.mxu0 %v1112
    %1638 = vmatpush1.bf16.msra.mxu0 %v1111
    %1639 = vmatprep.subr.bf16.mxu0 %v1172
    %1640 = vmatpush2.bf16.msra.mxu0 %v1171
    %1641 = vmatprep.subr.bf16.mxu0 %v1168
    %1642 = vmatpush2.bf16.msra.mxu0 %v1167
    %1643 = vmatprep.subr.bf16.mxu0 %v1164
    %1644 = vmatpush2.bf16.msra.mxu0 %v1163
    %1645 = vmatprep.subr.bf16.mxu0 %v1160
    %1646 = vmatpush2.bf16.msra.mxu0 %v1159
    %1647 = vmatprep.subr.bf16.mxu0 %v1156
    %1648 = vmatpush2.bf16.msra.mxu0 %v1155
    %1649 = vmatprep.subr.bf16.mxu0 %v1152
    %1650 = vmatpush2.bf16.msra.mxu0 %v1151
    %1651 = vmatprep.subr.bf16.mxu0 %v1148
    %1652 = vmatpush2.bf16.msra.mxu0 %v1147
    %1653 = vmatprep.subr.bf16.mxu0 %v1144
    %1654 = vmatpush2.bf16.msra.mxu0 %v1143
    %1655 = vmatprep.mubr.bf16.mxu0 %v58
    %1656 = vmatmul.mubr.bf16.gmra.mxu0 %v57
    %v1657 = vpop.f32.mrf.mxu0
    %v1658 = vadd.f32 %v326, %v1657
    %v1659 = vpop.f32.mrf.mxu0
    %v1660 = vadd.f32 %v330, %v1659
    %v1661 = vpop.f32.mrf.mxu0
    %v1662 = vpop.f32.mrf.mxu0
    %1663 = vdwg.mxu0
    %1664 = vmatprep.subr.bf16.mxu0 %v1204
    %1665 = vmatpush1.bf16.msra.mxu0 %v1203
    %1666 = vmatprep.subr.bf16.mxu0 %v1200
    %1667 = vmatpush1.bf16.msra.mxu0 %v1199
    %1668 = vmatprep.subr.bf16.mxu0 %v1196
    %1669 = vmatpush1.bf16.msra.mxu0 %v1195
    %1670 = vmatprep.subr.bf16.mxu0 %v1192
    %1671 = vmatpush1.bf16.msra.mxu0 %v1191
    %1672 = vmatprep.subr.bf16.mxu0 %v1188
    %1673 = vmatpush1.bf16.msra.mxu0 %v1187
    %1674 = vmatprep.subr.bf16.mxu0 %v1184
    %1675 = vmatpush1.bf16.msra.mxu0 %v1183
    %1676 = vmatprep.subr.bf16.mxu0 %v1180
    %1677 = vmatpush1.bf16.msra.mxu0 %v1179
    %1678 = vmatprep.subr.bf16.mxu0 %v1176
    %1679 = vmatpush1.bf16.msra.mxu0 %v1175
    %1680 = vmatprep.subr.bf16.mxu0 %v1236
    %1681 = vmatpush2.bf16.msra.mxu0 %v1235
    %1682 = vmatprep.subr.bf16.mxu0 %v1232
    %1683 = vmatpush2.bf16.msra.mxu0 %v1231
    %1684 = vmatprep.subr.bf16.mxu0 %v1228
    %1685 = vmatpush2.bf16.msra.mxu0 %v1227
    %1686 = vmatprep.subr.bf16.mxu0 %v1224
    %1687 = vmatpush2.bf16.msra.mxu0 %v1223
    %1688 = vmatprep.subr.bf16.mxu0 %v1220
    %1689 = vmatpush2.bf16.msra.mxu0 %v1219
    %1690 = vmatprep.subr.bf16.mxu0 %v1216
    %1691 = vmatpush2.bf16.msra.mxu0 %v1215
    %1692 = vmatprep.subr.bf16.mxu0 %v1212
    %1693 = vmatpush2.bf16.msra.mxu0 %v1211
    %1694 = vmatprep.subr.bf16.mxu0 %v1208
    %1695 = vmatpush2.bf16.msra.mxu0 %v1207
    %1696 = vmatprep.mubr.bf16.mxu0 %v60
    %1697 = vmatmul.mubr.bf16.gmra.mxu0 %v59
    %v1698 = vpop.f32.mrf.mxu0
    %v1699 = vadd.f32 %v1658, %v1698
    %v1700 = vpop.f32.mrf.mxu0
    %v1701 = vadd.f32 %v1660, %v1700
    %v1702 = vpop.f32.mrf.mxu0
    %v1703 = vpop.f32.mrf.mxu0
    %1704 = vdwg.mxu0
    %1705 = vmatprep.subr.bf16.mxu0 %v1268
    %1706 = vmatpush1.bf16.msra.mxu0 %v1267
    %1707 = vmatprep.subr.bf16.mxu0 %v1264
    %1708 = vmatpush1.bf16.msra.mxu0 %v1263
    %1709 = vmatprep.subr.bf16.mxu0 %v1260
    %1710 = vmatpush1.bf16.msra.mxu0 %v1259
    %1711 = vmatprep.subr.bf16.mxu0 %v1256
    %1712 = vmatpush1.bf16.msra.mxu0 %v1255
    %1713 = vmatprep.subr.bf16.mxu0 %v1252
    %1714 = vmatpush1.bf16.msra.mxu0 %v1251
    %1715 = vmatprep.subr.bf16.mxu0 %v1248
    %1716 = vmatpush1.bf16.msra.mxu0 %v1247
    %1717 = vmatprep.subr.bf16.mxu0 %v1244
    %1718 = vmatpush1.bf16.msra.mxu0 %v1243
    %1719 = vmatprep.subr.bf16.mxu0 %v1240
    %1720 = vmatpush1.bf16.msra.mxu0 %v1239
    %1721 = vmatprep.subr.bf16.mxu0 %v1300
    %1722 = vmatpush2.bf16.msra.mxu0 %v1299
    %1723 = vmatprep.subr.bf16.mxu0 %v1296
    %1724 = vmatpush2.bf16.msra.mxu0 %v1295
    %1725 = vmatprep.subr.bf16.mxu0 %v1292
    %1726 = vmatpush2.bf16.msra.mxu0 %v1291
    %1727 = vmatprep.subr.bf16.mxu0 %v1288
    %1728 = vmatpush2.bf16.msra.mxu0 %v1287
    %1729 = vmatprep.subr.bf16.mxu0 %v1284
    %1730 = vmatpush2.bf16.msra.mxu0 %v1283
    %1731 = vmatprep.subr.bf16.mxu0 %v1280
    %1732 = vmatpush2.bf16.msra.mxu0 %v1279
    %1733 = vmatprep.subr.bf16.mxu0 %v1276
    %1734 = vmatpush2.bf16.msra.mxu0 %v1275
    %1735 = vmatprep.subr.bf16.mxu0 %v1272
    %1736 = vmatpush2.bf16.msra.mxu0 %v1271
    %1737 = vmatprep.mubr.bf16.mxu0 %v62
    %1738 = vmatmul.mubr.bf16.gmra.mxu0 %v61
    %v1739 = vpop.f32.mrf.mxu0
    %v1740 = vadd.f32 %v1699, %v1739
    %v1741 = vpop.f32.mrf.mxu0
    %v1742 = vadd.f32 %v1701, %v1741
    %v1743 = vpop.f32.mrf.mxu0
    %v1744 = vpop.f32.mrf.mxu0
    %1745 = vdwg.mxu0
    %1746 = vmatprep.subr.bf16.mxu0 %v1332
    %1747 = vmatpush1.bf16.msra.mxu0 %v1331
    %1748 = vmatprep.subr.bf16.mxu0 %v1328
    %1749 = vmatpush1.bf16.msra.mxu0 %v1327
    %1750 = vmatprep.subr.bf16.mxu0 %v1324
    %1751 = vmatpush1.bf16.msra.mxu0 %v1323
    %1752 = vmatprep.subr.bf16.mxu0 %v1320
    %1753 = vmatpush1.bf16.msra.mxu0 %v1319
    %1754 = vmatprep.subr.bf16.mxu0 %v1316
    %1755 = vmatpush1.bf16.msra.mxu0 %v1315
    %1756 = vmatprep.subr.bf16.mxu0 %v1312
    %1757 = vmatpush1.bf16.msra.mxu0 %v1311
    %1758 = vmatprep.subr.bf16.mxu0 %v1308
    %1759 = vmatpush1.bf16.msra.mxu0 %v1307
    %1760 = vmatprep.subr.bf16.mxu0 %v1304
    %1761 = vmatpush1.bf16.msra.mxu0 %v1303
    %1762 = vmatprep.subr.bf16.mxu0 %v1364
    %1763 = vmatpush2.bf16.msra.mxu0 %v1363
    %1764 = vmatprep.subr.bf16.mxu0 %v1360
    %1765 = vmatpush2.bf16.msra.mxu0 %v1359
    %1766 = vmatprep.subr.bf16.mxu0 %v1356
    %1767 = vmatpush2.bf16.msra.mxu0 %v1355
    %1768 = vmatprep.subr.bf16.mxu0 %v1352
    %1769 = vmatpush2.bf16.msra.mxu0 %v1351
    %1770 = vmatprep.subr.bf16.mxu0 %v1348
    %1771 = vmatpush2.bf16.msra.mxu0 %v1347
    %1772 = vmatprep.subr.bf16.mxu0 %v1344
    %1773 = vmatpush2.bf16.msra.mxu0 %v1343
    %1774 = vmatprep.subr.bf16.mxu0 %v1340
    %1775 = vmatpush2.bf16.msra.mxu0 %v1339
    %1776 = vmatprep.subr.bf16.mxu0 %v1336
    %1777 = vmatpush2.bf16.msra.mxu0 %v1335
    %1778 = vmatprep.mubr.bf16.mxu0 %v64
    %1779 = vmatmul.mubr.bf16.gmra.mxu0 %v63
    %v1780 = vpop.f32.mrf.mxu0
    %v1781 = vadd.f32 %v1740, %v1780
    %v1782 = vpop.f32.mrf.mxu0
    %v1783 = vadd.f32 %v1742, %v1782
    %v1784 = vpop.f32.mrf.mxu0
    %v1785 = vpop.f32.mrf.mxu0
    %1786 = vdwg.mxu0
    %1787 = vmatprep.subr.bf16.mxu0 %v1142
    %1788 = vmatpush1.bf16.msra.mxu0 %v1141
    %1789 = vmatprep.subr.bf16.mxu0 %v1138
    %1790 = vmatpush1.bf16.msra.mxu0 %v1137
    %1791 = vmatprep.subr.bf16.mxu0 %v1134
    %1792 = vmatpush1.bf16.msra.mxu0 %v1133
    %1793 = vmatprep.subr.bf16.mxu0 %v1130
    %1794 = vmatpush1.bf16.msra.mxu0 %v1129
    %1795 = vmatprep.subr.bf16.mxu0 %v1126
    %1796 = vmatpush1.bf16.msra.mxu0 %v1125
    %1797 = vmatprep.subr.bf16.mxu0 %v1122
    %1798 = vmatpush1.bf16.msra.mxu0 %v1121
    %1799 = vmatprep.subr.bf16.mxu0 %v1118
    %1800 = vmatpush1.bf16.msra.mxu0 %v1117
    %1801 = vmatprep.subr.bf16.mxu0 %v1114
    %1802 = vmatpush1.bf16.msra.mxu0 %v1113
    %1803 = vmatprep.subr.bf16.mxu0 %v1174
    %1804 = vmatpush2.bf16.msra.mxu0 %v1173
    %1805 = vmatprep.subr.bf16.mxu0 %v1170
    %1806 = vmatpush2.bf16.msra.mxu0 %v1169
    %1807 = vmatprep.subr.bf16.mxu0 %v1166
    %1808 = vmatpush2.bf16.msra.mxu0 %v1165
    %1809 = vmatprep.subr.bf16.mxu0 %v1162
    %1810 = vmatpush2.bf16.msra.mxu0 %v1161
    %1811 = vmatprep.subr.bf16.mxu0 %v1158
    %1812 = vmatpush2.bf16.msra.mxu0 %v1157
    %1813 = vmatprep.subr.bf16.mxu0 %v1154
    %1814 = vmatpush2.bf16.msra.mxu0 %v1153
    %1815 = vmatprep.subr.bf16.mxu0 %v1150
    %1816 = vmatpush2.bf16.msra.mxu0 %v1149
    %1817 = vmatprep.subr.bf16.mxu0 %v1146
    %1818 = vmatpush2.bf16.msra.mxu0 %v1145
    %1819 = vmatprep.mubr.bf16.mxu0 %v58
    %1820 = vmatmul.mubr.bf16.gmra.mxu0 %v57
    %v1821 = vpop.f32.mrf.mxu0
    %v1822 = vadd.f32 %v334, %v1821
    %v1823 = vpop.f32.mrf.mxu0
    %v1824 = vadd.f32 %v338, %v1823
    %v1825 = vpop.f32.mrf.mxu0
    %v1826 = vpop.f32.mrf.mxu0
    %1827 = vdwg.mxu0
    %1828 = vmatprep.subr.bf16.mxu0 %v1206
    %1829 = vmatpush1.bf16.msra.mxu0 %v1205
    %1830 = vmatprep.subr.bf16.mxu0 %v1202
    %1831 = vmatpush1.bf16.msra.mxu0 %v1201
    %1832 = vmatprep.subr.bf16.mxu0 %v1198
    %1833 = vmatpush1.bf16.msra.mxu0 %v1197
    %1834 = vmatprep.subr.bf16.mxu0 %v1194
    %1835 = vmatpush1.bf16.msra.mxu0 %v1193
    %1836 = vmatprep.subr.bf16.mxu0 %v1190
    %1837 = vmatpush1.bf16.msra.mxu0 %v1189
    %1838 = vmatprep.subr.bf16.mxu0 %v1186
    %1839 = vmatpush1.bf16.msra.mxu0 %v1185
    %1840 = vmatprep.subr.bf16.mxu0 %v1182
    %1841 = vmatpush1.bf16.msra.mxu0 %v1181
    %1842 = vmatprep.subr.bf16.mxu0 %v1178
    %1843 = vmatpush1.bf16.msra.mxu0 %v1177
    %1844 = vmatprep.subr.bf16.mxu0 %v1238
    %1845 = vmatpush2.bf16.msra.mxu0 %v1237
    %1846 = vmatprep.subr.bf16.mxu0 %v1234
    %1847 = vmatpush2.bf16.msra.mxu0 %v1233
    %1848 = vmatprep.subr.bf16.mxu0 %v1230
    %1849 = vmatpush2.bf16.msra.mxu0 %v1229
    %1850 = vmatprep.subr.bf16.mxu0 %v1226
    %1851 = vmatpush2.bf16.msra.mxu0 %v1225
    %1852 = vmatprep.subr.bf16.mxu0 %v1222
    %1853 = vmatpush2.bf16.msra.mxu0 %v1221
    %1854 = vmatprep.subr.bf16.mxu0 %v1218
    %1855 = vmatpush2.bf16.msra.mxu0 %v1217
    %1856 = vmatprep.subr.bf16.mxu0 %v1214
    %1857 = vmatpush2.bf16.msra.mxu0 %v1213
    %1858 = vmatprep.subr.bf16.mxu0 %v1210
    %1859 = vmatpush2.bf16.msra.mxu0 %v1209
    %1860 = vmatprep.mubr.bf16.mxu0 %v60
    %1861 = vmatmul.mubr.bf16.gmra.mxu0 %v59
    %v1862 = vpop.f32.mrf.mxu0
    %v1863 = vadd.f32 %v1822, %v1862
    %v1864 = vpop.f32.mrf.mxu0
    %v1865 = vadd.f32 %v1824, %v1864
    %v1866 = vpop.f32.mrf.mxu0
    %v1867 = vpop.f32.mrf.mxu0
    %1868 = vdwg.mxu0
    %1869 = vmatprep.subr.bf16.mxu0 %v1270
    %1870 = vmatpush1.bf16.msra.mxu0 %v1269
    %1871 = vmatprep.subr.bf16.mxu0 %v1266
    %1872 = vmatpush1.bf16.msra.mxu0 %v1265
    %1873 = vmatprep.subr.bf16.mxu0 %v1262
    %1874 = vmatpush1.bf16.msra.mxu0 %v1261
    %1875 = vmatprep.subr.bf16.mxu0 %v1258
    %1876 = vmatpush1.bf16.msra.mxu0 %v1257
    %1877 = vmatprep.subr.bf16.mxu0 %v1254
    %1878 = vmatpush1.bf16.msra.mxu0 %v1253
    %1879 = vmatprep.subr.bf16.mxu0 %v1250
    %1880 = vmatpush1.bf16.msra.mxu0 %v1249
    %1881 = vmatprep.subr.bf16.mxu0 %v1246
    %1882 = vmatpush1.bf16.msra.mxu0 %v1245
    %1883 = vmatprep.subr.bf16.mxu0 %v1242
    %1884 = vmatpush1.bf16.msra.mxu0 %v1241
    %1885 = vmatprep.subr.bf16.mxu0 %v1302
    %1886 = vmatpush2.bf16.msra.mxu0 %v1301
    %1887 = vmatprep.subr.bf16.mxu0 %v1298
    %1888 = vmatpush2.bf16.msra.mxu0 %v1297
    %1889 = vmatprep.subr.bf16.mxu0 %v1294
    %1890 = vmatpush2.bf16.msra.mxu0 %v1293
    %1891 = vmatprep.subr.bf16.mxu0 %v1290
    %1892 = vmatpush2.bf16.msra.mxu0 %v1289
    %1893 = vmatprep.subr.bf16.mxu0 %v1286
    %1894 = vmatpush2.bf16.msra.mxu0 %v1285
    %1895 = vmatprep.subr.bf16.mxu0 %v1282
    %1896 = vmatpush2.bf16.msra.mxu0 %v1281
    %1897 = vmatprep.subr.bf16.mxu0 %v1278
    %1898 = vmatpush2.bf16.msra.mxu0 %v1277
    %1899 = vmatprep.subr.bf16.mxu0 %v1274
    %1900 = vmatpush2.bf16.msra.mxu0 %v1273
    %1901 = vmatprep.mubr.bf16.mxu0 %v62
    %1902 = vmatmul.mubr.bf16.gmra.mxu0 %v61
    %v1903 = vpop.f32.mrf.mxu0
    %v1904 = vadd.f32 %v1863, %v1903
    %v1905 = vpop.f32.mrf.mxu0
    %v1906 = vadd.f32 %v1865, %v1905
    %v1907 = vpop.f32.mrf.mxu0
    %v1908 = vpop.f32.mrf.mxu0
    %1909 = vdwg.mxu0
    %1910 = vmatprep.subr.bf16.mxu0 %v1334
    %1911 = vmatpush1.bf16.msra.mxu0 %v1333
    %1912 = vmatprep.subr.bf16.mxu0 %v1330
    %1913 = vmatpush1.bf16.msra.mxu0 %v1329
    %1914 = vmatprep.subr.bf16.mxu0 %v1326
    %1915 = vmatpush1.bf16.msra.mxu0 %v1325
    %1916 = vmatprep.subr.bf16.mxu0 %v1322
    %1917 = vmatpush1.bf16.msra.mxu0 %v1321
    %1918 = vmatprep.subr.bf16.mxu0 %v1318
    %1919 = vmatpush1.bf16.msra.mxu0 %v1317
    %1920 = vmatprep.subr.bf16.mxu0 %v1314
    %1921 = vmatpush1.bf16.msra.mxu0 %v1313
    %1922 = vmatprep.subr.bf16.mxu0 %v1310
    %1923 = vmatpush1.bf16.msra.mxu0 %v1309
    %1924 = vmatprep.subr.bf16.mxu0 %v1306
    %1925 = vmatpush1.bf16.msra.mxu0 %v1305
    %1926 = vmatprep.subr.bf16.mxu0 %v1366
    %1927 = vmatpush2.bf16.msra.mxu0 %v1365
    %1928 = vmatprep.subr.bf16.mxu0 %v1362
    %1929 = vmatpush2.bf16.msra.mxu0 %v1361
    %1930 = vmatprep.subr.bf16.mxu0 %v1358
    %1931 = vmatpush2.bf16.msra.mxu0 %v1357
    %1932 = vmatprep.subr.bf16.mxu0 %v1354
    %1933 = vmatpush2.bf16.msra.mxu0 %v1353
    %1934 = vmatprep.subr.bf16.mxu0 %v1350
    %1935 = vmatpush2.bf16.msra.mxu0 %v1349
    %1936 = vmatprep.subr.bf16.mxu0 %v1346
    %1937 = vmatpush2.bf16.msra.mxu0 %v1345
    %1938 = vmatprep.subr.bf16.mxu0 %v1342
    %1939 = vmatpush2.bf16.msra.mxu0 %v1341
    %1940 = vmatprep.subr.bf16.mxu0 %v1338
    %1941 = vmatpush2.bf16.msra.mxu0 %v1337
    %1942 = vmatprep.mubr.bf16.mxu0 %v64
    %1943 = vmatmul.mubr.bf16.gmra.mxu0 %v63
    %v1944 = vpop.f32.mrf.mxu0
    %v1945 = vadd.f32 %v1904, %v1944
    %v1946 = vpop.f32.mrf.mxu0
    %v1947 = vadd.f32 %v1906, %v1946
    %v1948 = vpop.f32.mrf.mxu0
    %v1949 = vpop.f32.mrf.mxu0
    %1950 = vdwg.mxu0
    %v1951 = vmax.f32 %v1781, 0.0
    %v1952 = vmax.f32 %v1783, 0.0
    %v1953 = vmax.f32 %v1945, 0.0
    %v1954 = vmax.f32 %v1947, 0.0
    %v1955 = vpack.c.bf16 %v1951, %v1951
    %v1956 = vpack.c.bf16 %v1952, %v1952
    %v1957 = vpack.c.bf16 %v1953, %v1953
    %v1958 = vpack.c.bf16 %v1954, %v1954
    %v1959 = vld [vmem:[%s3] sm:$0xff]
    %v1960 = vld [vmem:[%s3 + $0x8] sm:$0xff]
    %v1961 = vld [vmem:[%s3 + $0x10] sm:$0xff]
    %v1962 = vld [vmem:[%s3 + $0x18] sm:$0xff]
    %v1963 = vld [vmem:[%s3 + $0x20] sm:$0xff]
    %v1964 = vld [vmem:[%s3 + $0x28] sm:$0xff]
    %v1965 = vld [vmem:[%s3 + $0x30] sm:$0xff]
    %v1966 = vld [vmem:[%s3 + $0x38] sm:$0xff]
    %v1967 = vld [vmem:[%s3 + $0x40] sm:$0xff]
    %v1968 = vld [vmem:[%s3 + $0x48] sm:$0xff]
    %v1969 = vld [vmem:[%s3 + $0x50] sm:$0xff]
    %v1970 = vld [vmem:[%s3 + $0x58] sm:$0xff]
    %v1971 = vld [vmem:[%s3 + $0x60] sm:$0xff]
    %v1972 = vld [vmem:[%s3 + $0x68] sm:$0xff]
    %v1973 = vld [vmem:[%s3 + $0x70] sm:$0xff]
    %v1974 = vld [vmem:[%s3 + $0x78] sm:$0xff]
    %v1975 = vld [vmem:[%s3 + $0x80] sm:$0xff]
    %v1976 = vld [vmem:[%s3 + $0x88] sm:$0xff]
    %v1977 = vld [vmem:[%s3 + $0x90] sm:$0xff]
    %v1978 = vld [vmem:[%s3 + $0x98] sm:$0xff]
    %v1979 = vld [vmem:[%s3 + $0xa0] sm:$0xff]
    %v1980 = vld [vmem:[%s3 + $0xa8] sm:$0xff]
    %v1981 = vld [vmem:[%s3 + $0xb0] sm:$0xff]
    %v1982 = vld [vmem:[%s3 + $0xb8] sm:$0xff]
    %v1983 = vld [vmem:[%s3 + $0xc0] sm:$0xff]
    %v1984 = vld [vmem:[%s3 + $0xc8] sm:$0xff]
    %v1985 = vld [vmem:[%s3 + $0xd0] sm:$0xff]
    %v1986 = vld [vmem:[%s3 + $0xd8] sm:$0xff]
    %v1987 = vld [vmem:[%s3 + $0xe0] sm:$0xff]
    %v1988 = vld [vmem:[%s3 + $0xe8] sm:$0xff]
    %v1989 = vld [vmem:[%s3 + $0xf0] sm:$0xff]
    %v1990 = vld [vmem:[%s3 + $0xf8] sm:$0xff]
    %v1991 = vld [vmem:[%s3 + $0x100] sm:$0xff]
    %v1992 = vld [vmem:[%s3 + $0x108] sm:$0xff]
    %v1993 = vld [vmem:[%s3 + $0x110] sm:$0xff]
    %v1994 = vld [vmem:[%s3 + $0x118] sm:$0xff]
    %v1995 = vld [vmem:[%s3 + $0x120] sm:$0xff]
    %v1996 = vld [vmem:[%s3 + $0x128] sm:$0xff]
    %v1997 = vld [vmem:[%s3 + $0x130] sm:$0xff]
    %v1998 = vld [vmem:[%s3 + $0x138] sm:$0xff]
    %v1999 = vld [vmem:[%s3 + $0x140] sm:$0xff]
    %v2000 = vld [vmem:[%s3 + $0x148] sm:$0xff]
    %v2001 = vld [vmem:[%s3 + $0x150] sm:$0xff]
    %v2002 = vld [vmem:[%s3 + $0x158] sm:$0xff]
    %v2003 = vld [vmem:[%s3 + $0x160] sm:$0xff]
    %v2004 = vld [vmem:[%s3 + $0x168] sm:$0xff]
    %v2005 = vld [vmem:[%s3 + $0x170] sm:$0xff]
    %v2006 = vld [vmem:[%s3 + $0x178] sm:$0xff]
    %v2007 = vld [vmem:[%s3 + $0x180] sm:$0xff]
    %v2008 = vld [vmem:[%s3 + $0x188] sm:$0xff]
    %v2009 = vld [vmem:[%s3 + $0x190] sm:$0xff]
    %v2010 = vld [vmem:[%s3 + $0x198] sm:$0xff]
    %v2011 = vld [vmem:[%s3 + $0x1a0] sm:$0xff]
    %v2012 = vld [vmem:[%s3 + $0x1a8] sm:$0xff]
    %v2013 = vld [vmem:[%s3 + $0x1b0] sm:$0xff]
    %v2014 = vld [vmem:[%s3 + $0x1b8] sm:$0xff]
    %v2015 = vld [vmem:[%s3 + $0x1c0] sm:$0xff]
    %v2016 = vld [vmem:[%s3 + $0x1c8] sm:$0xff]
    %v2017 = vld [vmem:[%s3 + $0x1d0] sm:$0xff]
    %v2018 = vld [vmem:[%s3 + $0x1d8] sm:$0xff]
    %v2019 = vld [vmem:[%s3 + $0x1e0] sm:$0xff]
    %v2020 = vld [vmem:[%s3 + $0x1e8] sm:$0xff]
    %v2021 = vld [vmem:[%s3 + $0x1f0] sm:$0xff]
    %v2022 = vld [vmem:[%s3 + $0x1f8] sm:$0xff]
    %v2023 = vld [vmem:[%s4] sm:$0x3]
    %v2025 = vlaneseq
    %v2026 = vshrl.u32 %v2025, 7
    %v2027 = vsub.s32 0, %v2026
    %v2028 = vrot.slane %v2023, %v2027
    %v2029 = vlaneseq
    %v2030 = vshrl.u32 %v2029, 7
    %v2031 = vsub.s32 1, %v2030
    %v2032 = vrot.slane %v2023, %v2031
    %v2099 = vunpack.c.l.b16 %v1959
    %v2100 = vunpack.c.h.b16 %v1959
    %v2101 = vunpack.c.l.b16 %v1960
    %v2102 = vunpack.c.h.b16 %v1960
    %v2103 = vunpack.c.l.b16 %v1961
    %v2104 = vunpack.c.h.b16 %v1961
    %v2105 = vunpack.c.l.b16 %v1962
    %v2106 = vunpack.c.h.b16 %v1962
    %v2107 = vunpack.c.l.b16 %v1963
    %v2108 = vunpack.c.h.b16 %v1963
    %v2109 = vunpack.c.l.b16 %v1964
    %v2110 = vunpack.c.h.b16 %v1964
    %v2111 = vunpack.c.l.b16 %v1965
    %v2112 = vunpack.c.h.b16 %v1965
    %v2113 = vunpack.c.l.b16 %v1966
    %v2114 = vunpack.c.h.b16 %v1966
    %v2115 = vunpack.c.l.b16 %v1967
    %v2116 = vunpack.c.h.b16 %v1967
    %v2117 = vunpack.c.l.b16 %v1968
    %v2118 = vunpack.c.h.b16 %v1968
    %v2119 = vunpack.c.l.b16 %v1969
    %v2120 = vunpack.c.h.b16 %v1969
    %v2121 = vunpack.c.l.b16 %v1970
    %v2122 = vunpack.c.h.b16 %v1970
    %v2123 = vunpack.c.l.b16 %v1971
    %v2124 = vunpack.c.h.b16 %v1971
    %v2125 = vunpack.c.l.b16 %v1972
    %v2126 = vunpack.c.h.b16 %v1972
    %v2127 = vunpack.c.l.b16 %v1973
    %v2128 = vunpack.c.h.b16 %v1973
    %v2129 = vunpack.c.l.b16 %v1974
    %v2130 = vunpack.c.h.b16 %v1974
    %v2131 = vunpack.c.l.b16 %v1975
    %v2132 = vunpack.c.h.b16 %v1975
    %v2133 = vunpack.c.l.b16 %v1976
    %v2134 = vunpack.c.h.b16 %v1976
    %v2135 = vunpack.c.l.b16 %v1977
    %v2136 = vunpack.c.h.b16 %v1977
    %v2137 = vunpack.c.l.b16 %v1978
    %v2138 = vunpack.c.h.b16 %v1978
    %v2139 = vunpack.c.l.b16 %v1979
    %v2140 = vunpack.c.h.b16 %v1979
    %v2141 = vunpack.c.l.b16 %v1980
    %v2142 = vunpack.c.h.b16 %v1980
    %v2143 = vunpack.c.l.b16 %v1981
    %v2144 = vunpack.c.h.b16 %v1981
    %v2145 = vunpack.c.l.b16 %v1982
    %v2146 = vunpack.c.h.b16 %v1982
    %v2147 = vunpack.c.l.b16 %v1983
    %v2148 = vunpack.c.h.b16 %v1983
    %v2149 = vunpack.c.l.b16 %v1984
    %v2150 = vunpack.c.h.b16 %v1984
    %v2151 = vunpack.c.l.b16 %v1985
    %v2152 = vunpack.c.h.b16 %v1985
    %v2153 = vunpack.c.l.b16 %v1986
    %v2154 = vunpack.c.h.b16 %v1986
    %v2155 = vunpack.c.l.b16 %v1987
    %v2156 = vunpack.c.h.b16 %v1987
    %v2157 = vunpack.c.l.b16 %v1988
    %v2158 = vunpack.c.h.b16 %v1988
    %v2159 = vunpack.c.l.b16 %v1989
    %v2160 = vunpack.c.h.b16 %v1989
    %v2161 = vunpack.c.l.b16 %v1990
    %v2162 = vunpack.c.h.b16 %v1990
    %v2163 = vunpack.c.l.b16 %v1991
    %v2164 = vunpack.c.h.b16 %v1991
    %v2165 = vunpack.c.l.b16 %v1992
    %v2166 = vunpack.c.h.b16 %v1992
    %v2167 = vunpack.c.l.b16 %v1993
    %v2168 = vunpack.c.h.b16 %v1993
    %v2169 = vunpack.c.l.b16 %v1994
    %v2170 = vunpack.c.h.b16 %v1994
    %v2171 = vunpack.c.l.b16 %v1995
    %v2172 = vunpack.c.h.b16 %v1995
    %v2173 = vunpack.c.l.b16 %v1996
    %v2174 = vunpack.c.h.b16 %v1996
    %v2175 = vunpack.c.l.b16 %v1997
    %v2176 = vunpack.c.h.b16 %v1997
    %v2177 = vunpack.c.l.b16 %v1998
    %v2178 = vunpack.c.h.b16 %v1998
    %v2179 = vunpack.c.l.b16 %v1999
    %v2180 = vunpack.c.h.b16 %v1999
    %v2181 = vunpack.c.l.b16 %v2000
    %v2182 = vunpack.c.h.b16 %v2000
    %v2183 = vunpack.c.l.b16 %v2001
    %v2184 = vunpack.c.h.b16 %v2001
    %v2185 = vunpack.c.l.b16 %v2002
    %v2186 = vunpack.c.h.b16 %v2002
    %v2187 = vunpack.c.l.b16 %v2003
    %v2188 = vunpack.c.h.b16 %v2003
    %v2189 = vunpack.c.l.b16 %v2004
    %v2190 = vunpack.c.h.b16 %v2004
    %v2191 = vunpack.c.l.b16 %v2005
    %v2192 = vunpack.c.h.b16 %v2005
    %v2193 = vunpack.c.l.b16 %v2006
    %v2194 = vunpack.c.h.b16 %v2006
    %v2195 = vunpack.c.l.b16 %v2007
    %v2196 = vunpack.c.h.b16 %v2007
    %v2197 = vunpack.c.l.b16 %v2008
    %v2198 = vunpack.c.h.b16 %v2008
    %v2199 = vunpack.c.l.b16 %v2009
    %v2200 = vunpack.c.h.b16 %v2009
    %v2201 = vunpack.c.l.b16 %v2010
    %v2202 = vunpack.c.h.b16 %v2010
    %v2203 = vunpack.c.l.b16 %v2011
    %v2204 = vunpack.c.h.b16 %v2011
    %v2205 = vunpack.c.l.b16 %v2012
    %v2206 = vunpack.c.h.b16 %v2012
    %v2207 = vunpack.c.l.b16 %v2013
    %v2208 = vunpack.c.h.b16 %v2013
    %v2209 = vunpack.c.l.b16 %v2014
    %v2210 = vunpack.c.h.b16 %v2014
    %v2211 = vunpack.c.l.b16 %v2015
    %v2212 = vunpack.c.h.b16 %v2015
    %v2213 = vunpack.c.l.b16 %v2016
    %v2214 = vunpack.c.h.b16 %v2016
    %v2215 = vunpack.c.l.b16 %v2017
    %v2216 = vunpack.c.h.b16 %v2017
    %v2217 = vunpack.c.l.b16 %v2018
    %v2218 = vunpack.c.h.b16 %v2018
    %v2219 = vunpack.c.l.b16 %v2019
    %v2220 = vunpack.c.h.b16 %v2019
    %v2221 = vunpack.c.l.b16 %v2020
    %v2222 = vunpack.c.h.b16 %v2020
    %v2223 = vunpack.c.l.b16 %v2021
    %v2224 = vunpack.c.h.b16 %v2021
    %v2225 = vunpack.c.l.b16 %v2022
    %v2226 = vunpack.c.h.b16 %v2022
    %v2227 = vpack.c.b16 %v2101, %v2099
    %v2228 = vpack.c.b16 %v2102, %v2100
    %v2229 = vpack.c.b16 %v2105, %v2103
    %v2230 = vpack.c.b16 %v2106, %v2104
    %v2231 = vpack.c.b16 %v2109, %v2107
    %v2232 = vpack.c.b16 %v2110, %v2108
    %v2233 = vpack.c.b16 %v2113, %v2111
    %v2234 = vpack.c.b16 %v2114, %v2112
    %v2235 = vpack.c.b16 %v2117, %v2115
    %v2236 = vpack.c.b16 %v2118, %v2116
    %v2237 = vpack.c.b16 %v2121, %v2119
    %v2238 = vpack.c.b16 %v2122, %v2120
    %v2239 = vpack.c.b16 %v2125, %v2123
    %v2240 = vpack.c.b16 %v2126, %v2124
    %v2241 = vpack.c.b16 %v2129, %v2127
    %v2242 = vpack.c.b16 %v2130, %v2128
    %v2243 = vpack.c.b16 %v2133, %v2131
    %v2244 = vpack.c.b16 %v2134, %v2132
    %v2245 = vpack.c.b16 %v2137, %v2135
    %v2246 = vpack.c.b16 %v2138, %v2136
    %v2247 = vpack.c.b16 %v2141, %v2139
    %v2248 = vpack.c.b16 %v2142, %v2140
    %v2249 = vpack.c.b16 %v2145, %v2143
    %v2250 = vpack.c.b16 %v2146, %v2144
    %v2251 = vpack.c.b16 %v2149, %v2147
    %v2252 = vpack.c.b16 %v2150, %v2148
    %v2253 = vpack.c.b16 %v2153, %v2151
    %v2254 = vpack.c.b16 %v2154, %v2152
    %v2255 = vpack.c.b16 %v2157, %v2155
    %v2256 = vpack.c.b16 %v2158, %v2156
    %v2257 = vpack.c.b16 %v2161, %v2159
    %v2258 = vpack.c.b16 %v2162, %v2160
    %v2259 = vpack.c.b16 %v2165, %v2163
    %v2260 = vpack.c.b16 %v2166, %v2164
    %v2261 = vpack.c.b16 %v2169, %v2167
    %v2262 = vpack.c.b16 %v2170, %v2168
    %v2263 = vpack.c.b16 %v2173, %v2171
    %v2264 = vpack.c.b16 %v2174, %v2172
    %v2265 = vpack.c.b16 %v2177, %v2175
    %v2266 = vpack.c.b16 %v2178, %v2176
    %v2267 = vpack.c.b16 %v2181, %v2179
    %v2268 = vpack.c.b16 %v2182, %v2180
    %v2269 = vpack.c.b16 %v2185, %v2183
    %v2270 = vpack.c.b16 %v2186, %v2184
    %v2271 = vpack.c.b16 %v2189, %v2187
    %v2272 = vpack.c.b16 %v2190, %v2188
    %v2273 = vpack.c.b16 %v2193, %v2191
    %v2274 = vpack.c.b16 %v2194, %v2192
    %v2275 = vpack.c.b16 %v2197, %v2195
    %v2276 = vpack.c.b16 %v2198, %v2196
    %v2277 = vpack.c.b16 %v2201, %v2199
    %v2278 = vpack.c.b16 %v2202, %v2200
    %v2279 = vpack.c.b16 %v2205, %v2203
    %v2280 = vpack.c.b16 %v2206, %v2204
    %v2281 = vpack.c.b16 %v2209, %v2207
    %v2282 = vpack.c.b16 %v2210, %v2208
    %v2283 = vpack.c.b16 %v2213, %v2211
    %v2284 = vpack.c.b16 %v2214, %v2212
    %v2285 = vpack.c.b16 %v2217, %v2215
    %v2286 = vpack.c.b16 %v2218, %v2216
    %v2287 = vpack.c.b16 %v2221, %v2219
    %v2288 = vpack.c.b16 %v2222, %v2220
    %v2289 = vpack.c.b16 %v2225, %v2223
    %v2290 = vpack.c.b16 %v2226, %v2224
    %2355 = vmatprep.subr.bf16.mxu0 %v2242
    %2356 = vmatpush1.bf16.msra.mxu0 %v2241
    %2357 = vmatprep.subr.bf16.mxu0 %v2240
    %2358 = vmatpush1.bf16.msra.mxu0 %v2239
    %2359 = vmatprep.subr.bf16.mxu0 %v2238
    %2360 = vmatpush1.bf16.msra.mxu0 %v2237
    %2361 = vmatprep.subr.bf16.mxu0 %v2236
    %2362 = vmatpush1.bf16.msra.mxu0 %v2235
    %2363 = vmatprep.subr.bf16.mxu0 %v2234
    %2364 = vmatpush1.bf16.msra.mxu0 %v2233
    %2365 = vmatprep.subr.bf16.mxu0 %v2232
    %2366 = vmatpush1.bf16.msra.mxu0 %v2231
    %2367 = vmatprep.subr.bf16.mxu0 %v2230
    %2368 = vmatpush1.bf16.msra.mxu0 %v2229
    %2369 = vmatprep.subr.bf16.mxu0 %v2228
    %2370 = vmatpush1.bf16.msra.mxu0 %v2227
    %2371 = vmatprep.subr.bf16.mxu0 %v2258
    %2372 = vmatpush2.bf16.msra.mxu0 %v2257
    %2373 = vmatprep.subr.bf16.mxu0 %v2256
    %2374 = vmatpush2.bf16.msra.mxu0 %v2255
    %2375 = vmatprep.subr.bf16.mxu0 %v2254
    %2376 = vmatpush2.bf16.msra.mxu0 %v2253
    %2377 = vmatprep.subr.bf16.mxu0 %v2252
    %2378 = vmatpush2.bf16.msra.mxu0 %v2251
    %2379 = vmatprep.subr.bf16.mxu0 %v2250
    %2380 = vmatpush2.bf16.msra.mxu0 %v2249
    %2381 = vmatprep.subr.bf16.mxu0 %v2248
    %2382 = vmatpush2.bf16.msra.mxu0 %v2247
    %2383 = vmatprep.subr.bf16.mxu0 %v2246
    %2384 = vmatpush2.bf16.msra.mxu0 %v2245
    %2385 = vmatprep.subr.bf16.mxu0 %v2244
    %2386 = vmatpush2.bf16.msra.mxu0 %v2243
    %2387 = vmatprep.mubr.bf16.mxu0 %v1956
    %2388 = vmatmul.mubr.bf16.gmra.mxu0 %v1955
    %v2389 = vpop.f32.mrf.mxu0
    %v2390 = vadd.f32 %v2028, %v2389
    %v2391 = vpop.f32.mrf.mxu0
    %v2392 = vadd.f32 %v2032, %v2391
    %v2393 = vpop.f32.mrf.mxu0
    %v2394 = vpop.f32.mrf.mxu0
    %2395 = vdwg.mxu0
    %2396 = vmatprep.subr.bf16.mxu0 %v2274
    %2397 = vmatpush1.bf16.msra.mxu0 %v2273
    %2398 = vmatprep.subr.bf16.mxu0 %v2272
    %2399 = vmatpush1.bf16.msra.mxu0 %v2271
    %2400 = vmatprep.subr.bf16.mxu0 %v2270
    %2401 = vmatpush1.bf16.msra.mxu0 %v2269
    %2402 = vmatprep.subr.bf16.mxu0 %v2268
    %2403 = vmatpush1.bf16.msra.mxu0 %v2267
    %2404 = vmatprep.subr.bf16.mxu0 %v2266
    %2405 = vmatpush1.bf16.msra.mxu0 %v2265
    %2406 = vmatprep.subr.bf16.mxu0 %v2264
    %2407 = vmatpush1.bf16.msra.mxu0 %v2263
    %2408 = vmatprep.subr.bf16.mxu0 %v2262
    %2409 = vmatpush1.bf16.msra.mxu0 %v2261
    %2410 = vmatprep.subr.bf16.mxu0 %v2260
    %2411 = vmatpush1.bf16.msra.mxu0 %v2259
    %2412 = vmatprep.subr.bf16.mxu0 %v2290
    %2413 = vmatpush2.bf16.msra.mxu0 %v2289
    %2414 = vmatprep.subr.bf16.mxu0 %v2288
    %2415 = vmatpush2.bf16.msra.mxu0 %v2287
    %2416 = vmatprep.subr.bf16.mxu0 %v2286
    %2417 = vmatpush2.bf16.msra.mxu0 %v2285
    %2418 = vmatprep.subr.bf16.mxu0 %v2284
    %2419 = vmatpush2.bf16.msra.mxu0 %v2283
    %2420 = vmatprep.subr.bf16.mxu0 %v2282
    %2421 = vmatpush2.bf16.msra.mxu0 %v2281
    %2422 = vmatprep.subr.bf16.mxu0 %v2280
    %2423 = vmatpush2.bf16.msra.mxu0 %v2279
    %2424 = vmatprep.subr.bf16.mxu0 %v2278
    %2425 = vmatpush2.bf16.msra.mxu0 %v2277
    %2426 = vmatprep.subr.bf16.mxu0 %v2276
    %2427 = vmatpush2.bf16.msra.mxu0 %v2275
    %2428 = vmatprep.mubr.bf16.mxu0 %v1958
    %2429 = vmatmul.mubr.bf16.gmra.mxu0 %v1957
    %v2430 = vpop.f32.mrf.mxu0
    %v2431 = vadd.f32 %v2390, %v2430
    %v2432 = vpop.f32.mrf.mxu0
    %v2433 = vadd.f32 %v2392, %v2432
    %v2434 = vpop.f32.mrf.mxu0
    %v2435 = vpop.f32.mrf.mxu0
    %2436 = vdwg.mxu0
    %v2437 = vmax.f32 %v2431, 0.0
    %v2438 = vmax.f32 %v2433, 0.0
    %v2439 = vpack.c.bf16 %v2437, %v2437
    %v2440 = vpack.c.bf16 %v2438, %v2438
    %v2441 = vld [vmem:[%s5] sm:$0xf]
    %v2442 = vld [vmem:[%s5 + $0x4] sm:$0xf]
    %v2443 = vld [vmem:[%s5 + $0x8] sm:$0xf]
    %v2444 = vld [vmem:[%s5 + $0xc] sm:$0xf]
    %v2445 = vld [vmem:[%s5 + $0x10] sm:$0xf]
    %v2446 = vld [vmem:[%s5 + $0x14] sm:$0xf]
    %v2447 = vld [vmem:[%s5 + $0x18] sm:$0xf]
    %v2448 = vld [vmem:[%s5 + $0x1c] sm:$0xf]
    %v2449 = vld [vmem:[%s5 + $0x20] sm:$0xf]
    %v2450 = vld [vmem:[%s5 + $0x24] sm:$0xf]
    %v2451 = vld [vmem:[%s5 + $0x28] sm:$0xf]
    %v2452 = vld [vmem:[%s5 + $0x2c] sm:$0xf]
    %v2453 = vld [vmem:[%s5 + $0x30] sm:$0xf]
    %v2454 = vld [vmem:[%s5 + $0x34] sm:$0xf]
    %v2455 = vld [vmem:[%s5 + $0x38] sm:$0xf]
    %v2456 = vld [vmem:[%s5 + $0x3c] sm:$0xf]
    %v2457 = vld [vmem:[%s5 + $0x40] sm:$0xf]
    %v2458 = vld [vmem:[%s5 + $0x44] sm:$0xf]
    %v2459 = vld [vmem:[%s5 + $0x48] sm:$0xf]
    %v2460 = vld [vmem:[%s5 + $0x4c] sm:$0xf]
    %v2461 = vld [vmem:[%s5 + $0x50] sm:$0xf]
    %v2462 = vld [vmem:[%s5 + $0x54] sm:$0xf]
    %v2463 = vld [vmem:[%s5 + $0x58] sm:$0xf]
    %v2464 = vld [vmem:[%s5 + $0x5c] sm:$0xf]
    %v2465 = vld [vmem:[%s5 + $0x60] sm:$0xf]
    %v2466 = vld [vmem:[%s5 + $0x64] sm:$0xf]
    %v2467 = vld [vmem:[%s5 + $0x68] sm:$0xf]
    %v2468 = vld [vmem:[%s5 + $0x6c] sm:$0xf]
    %v2469 = vld [vmem:[%s5 + $0x70] sm:$0xf]
    %v2470 = vld [vmem:[%s5 + $0x74] sm:$0xf]
    %v2471 = vld [vmem:[%s5 + $0x78] sm:$0xf]
    %v2472 = vld [vmem:[%s5 + $0x7c] sm:$0xf]
    %v2473 = vld [vmem:[%s6] sm:$0x1]
    %v2475 = vlaneseq
    %v2476 = vshrl.u32 %v2475, 7
    %v2477 = vsub.s32 0, %v2476
    %v2478 = vrot.slane %v2473, %v2477
    %v2512 = vunpack.c.l.b16 %v2441
    %v2513 = vunpack.c.l.b16 %v2442
    %v2514 = vunpack.c.l.b16 %v2443
    %v2515 = vunpack.c.l.b16 %v2444
    %v2516 = vunpack.c.l.b16 %v2445
    %v2517 = vunpack.c.l.b16 %v2446
    %v2518 = vunpack.c.l.b16 %v2447
    %v2519 = vunpack.c.l.b16 %v2448
    %v2520 = vunpack.c.l.b16 %v2449
    %v2521 = vunpack.c.l.b16 %v2450
    %v2522 = vunpack.c.l.b16 %v2451
    %v2523 = vunpack.c.l.b16 %v2452
    %v2524 = vunpack.c.l.b16 %v2453
    %v2525 = vunpack.c.l.b16 %v2454
    %v2526 = vunpack.c.l.b16 %v2455
    %v2527 = vunpack.c.l.b16 %v2456
    %v2528 = vunpack.c.l.b16 %v2457
    %v2529 = vunpack.c.l.b16 %v2458
    %v2530 = vunpack.c.l.b16 %v2459
    %v2531 = vunpack.c.l.b16 %v2460
    %v2532 = vunpack.c.l.b16 %v2461
    %v2533 = vunpack.c.l.b16 %v2462
    %v2534 = vunpack.c.l.b16 %v2463
    %v2535 = vunpack.c.l.b16 %v2464
    %v2536 = vunpack.c.l.b16 %v2465
    %v2537 = vunpack.c.l.b16 %v2466
    %v2538 = vunpack.c.l.b16 %v2467
    %v2539 = vunpack.c.l.b16 %v2468
    %v2540 = vunpack.c.l.b16 %v2469
    %v2541 = vunpack.c.l.b16 %v2470
    %v2542 = vunpack.c.l.b16 %v2471
    %v2543 = vunpack.c.l.b16 %v2472
    %v2544 = vpack.c.b16 %v2513, %v2512
    %v2545 = vpack.c.b16 %v2515, %v2514
    %v2546 = vpack.c.b16 %v2517, %v2516
    %v2547 = vpack.c.b16 %v2519, %v2518
    %v2548 = vpack.c.b16 %v2521, %v2520
    %v2549 = vpack.c.b16 %v2523, %v2522
    %v2550 = vpack.c.b16 %v2525, %v2524
    %v2551 = vpack.c.b16 %v2527, %v2526
    %v2552 = vpack.c.b16 %v2529, %v2528
    %v2553 = vpack.c.b16 %v2531, %v2530
    %v2554 = vpack.c.b16 %v2533, %v2532
    %v2555 = vpack.c.b16 %v2535, %v2534
    %v2556 = vpack.c.b16 %v2537, %v2536
    %v2557 = vpack.c.b16 %v2539, %v2538
    %v2558 = vpack.c.b16 %v2541, %v2540
    %v2559 = vpack.c.b16 %v2543, %v2542
    %2576 = vmatprep.subr.bf16.mxu0 0
    %2577 = vmatpush1.bf16.msra.mxu0 %v2551
    %2578 = vmatprep.subr.bf16.mxu0 0
    %2579 = vmatpush1.bf16.msra.mxu0 %v2550
    %2580 = vmatprep.subr.bf16.mxu0 0
    %2581 = vmatpush1.bf16.msra.mxu0 %v2549
    %2582 = vmatprep.subr.bf16.mxu0 0
    %2583 = vmatpush1.bf16.msra.mxu0 %v2548
    %2584 = vmatprep.subr.bf16.mxu0 0
    %2585 = vmatpush1.bf16.msra.mxu0 %v2547
    %2586 = vmatprep.subr.bf16.mxu0 0
    %2587 = vmatpush1.bf16.msra.mxu0 %v2546
    %2588 = vmatprep.subr.bf16.mxu0 0
    %2589 = vmatpush1.bf16.msra.mxu0 %v2545
    %2590 = vmatprep.subr.bf16.mxu0 0
    %2591 = vmatpush1.bf16.msra.mxu0 %v2544
    %2592 = vmatprep.subr.bf16.mxu0 0
    %2593 = vmatpush2.bf16.msra.mxu0 %v2559
    %2594 = vmatprep.subr.bf16.mxu0 0
    %2595 = vmatpush2.bf16.msra.mxu0 %v2558
    %2596 = vmatprep.subr.bf16.mxu0 0
    %2597 = vmatpush2.bf16.msra.mxu0 %v2557
    %2598 = vmatprep.subr.bf16.mxu0 0
    %2599 = vmatpush2.bf16.msra.mxu0 %v2556
    %2600 = vmatprep.subr.bf16.mxu0 0
    %2601 = vmatpush2.bf16.msra.mxu0 %v2555
    %2602 = vmatprep.subr.bf16.mxu0 0
    %2603 = vmatpush2.bf16.msra.mxu0 %v2554
    %2604 = vmatprep.subr.bf16.mxu0 0
    %2605 = vmatpush2.bf16.msra.mxu0 %v2553
    %2606 = vmatprep.subr.bf16.mxu0 0
    %2607 = vmatpush2.bf16.msra.mxu0 %v2552
    %2608 = vmatprep.mubr.bf16.mxu0 %v2440
    %2609 = vmatmul.mubr.bf16.gmra.mxu0 %v2439
    %v2610 = vpop.f32.mrf.mxu0
    %v2611 = vadd.f32 %v2478, %v2610
    %v2612 = vpop.f32.mrf.mxu0
    %v2613 = vpop.f32.mrf.mxu0
    %v2614 = vpop.f32.mrf.mxu0
    %2615 = vdwg.mxu0
    %v2616 = vmax.f32 %v2611, 0.0
    %vm2617 = vcmask 257024
    %2618 = vst.msk [vmem:[%s7] sm:$0xf] %vm2617, %v2616
    // Predicated region
    $region34: #{forward.2} parent=1 // pred_check
      _
    $region35: #{forward.2} parent=1 // pred_check_branch
      %2620 = sbr.rel (0) target = $region37
    $region36: #{forward.2} parent=1 // pred_region
      _
    $region37: #{forward.2} parent=1 // pred_fallthru
      _
    // Predicated region
    $region38: #{forward.2} parent=1 // pred_check
      _
    $region39: #{forward.2} parent=1 // pred_check_branch
      %2622 = sbr.rel (0) target = $region41
    $region40: #{forward.2} parent=1 // pred_region
      _
    $region41: #{forward.2} parent=1 // pred_fallthru
      _
    %2623 = vsyncpa [#allocation3], 1

</llo_original>
